<compile_context>
chip_gen: v6e
topology: v6e:2x2x1
jax: 0.10.0
libtpu: 0.0.40
codegen_flags: <defaults>
</compile_context>

<pallas_src>
import functools

import jax
import jax.numpy as jnp
from jax.experimental import pallas as pl
from jax.experimental.pallas import tpu as pltpu


def _pick_tile_rows(H, W, max_rows):
    """Largest divisor `th` of H with th * W <= max(W, max_rows)."""
    th = 1
    for d in range(1, H + 1):
        if H % d == 0 and d * W <= max(W, max_rows):
            th = d
    return th


def _default_max_rows():
    """MXU M-tile target: 128 on v5e (128-wide MXU), 256 on v6e/v7x."""
    try:
        kind = jax.devices()[0].device_kind.lower()
    except Exception:
        return 256
    if "v5 lite" in kind or "v5e" in kind or "v5litepod" in kind:
        return 128
    return 256


def _vmem_limit_bytes(H, W, Cin, Cout, out_itemsize):
    """Explicit per-step VMEM budget (double-buffered blocks + scratch)."""
    est = ((H + 2) * (W + 2) * Cin * 2          # padded-input scratch (bf16)
           + 2 * H * W * Cin * 2                # input block, double-buffered
           + 2 * H * W * Cout * out_itemsize    # output block, double-buffered
           + 2 * (9 * Cin * Cout * 2            # conv3x3 weights (bf16)
                  + Cout * Cout * 4             # conv1x1 weights (f32)
                  + 4 * Cout * 4)               # folded BN scale/shift
           + Cout * 4)                          # channel-sum scratch
    try:
        kind = jax.devices()[0].device_kind.lower()
    except Exception:
        kind = ""
    phys = (64 if "v7" in kind else 128) * 2 ** 20
    return int(min(phys - 4 * 2 ** 20, max(32 * 2 ** 20, 2 * est)))


def _arm_kernel(x_ref, w3_ref, s1_ref, b1_ref, w1_ref, s2_ref, b2_ref,
                out_ref, xpad_s, sum_s, *, H, W, Cin, Cout, TH, UNROLL):
    """Fused ARM forward for one batch element.

    x_ref  : (H, W, Cin)      bf16  un-padded NHWC input block
    w3_ref : (9, Cin, Cout)   bf16  3x3 weights, tap-major, densely packed
    s1/b1  : (1, Cout)        f32   folded BN1 scale / shift
    w1_ref : (Cout, Cout)     f32   1x1 conv weights (in, out)
    s2/b2  : (1, Cout)        f32   folded BN2 scale / shift
    out_ref: (H, W, Cout)     bf16 (or caller dtype)
    xpad_s : (H+2, W+2, Cin)  bf16  VMEM scratch, zero-padded input
    sum_s  : (1, Cout)        f32   VMEM scratch, running channel sum
    """
    n_tiles = H // TH
    inv_hw = 1.0 / float(H * W)

    def foreach_tile(body):
        # Short trip-counts: static unroll (LLO scheduler visibility).
        if n_tiles <= UNROLL:
            for t in range(n_tiles):
                body(t)
        else:
            pl.loop(0, n_tiles)(body)

    def row0(t):
        return t * TH if isinstance(t, int) else pl.multiple_of(t * TH, TH)

    # ---- in-kernel padding=1: zero the 1-pixel border every step (so
    #      correctness never depends on grid ordering / megacore splitting),
    #      then copy the interior tile-by-tile (bounded live values). --------
    xpad_s[0:1, :, :] = jnp.zeros((1, W + 2, Cin), jnp.bfloat16)
    xpad_s[H + 1:H + 2, :, :] = jnp.zeros((1, W + 2, Cin), jnp.bfloat16)
    xpad_s[:, 0:1, :] = jnp.zeros((H + 2, 1, Cin), jnp.bfloat16)
    xpad_s[:, W + 1:W + 2, :] = jnp.zeros((H + 2, 1, Cin), jnp.bfloat16)

    def copy_interior(t):
        r0 = row0(t)
        xpad_s[pl.ds(r0 + 1, TH), 1:W + 1, :] = x_ref[pl.ds(r0, TH), :, :]

    foreach_tile(copy_interior)

    sum_s[...] = jnp.zeros_like(sum_s)

    # Hoisted out of the tile loops (loaded once).
    s1 = s1_ref[...]
    b1 = b1_ref[...]

    # ---- pass 1: 3x3 conv as 9 tap-accumulated MXU matmuls straight from
    #      the padded scratch (no im2col staging), folded BN1 + ReLU; write
    #      bf16 feat tiles and accumulate the per-channel f32 sum. -----------
    def pass1(t):
        r0 = row0(t)
        acc = jnp.zeros((TH * W, Cout), jnp.float32)
        for dy in range(3):
            for dx in range(3):
                patch = xpad_s[pl.ds(r0 + dy, TH), pl.ds(dx, W), :]   # (TH,W,Cin)
                acc = acc + jnp.dot(patch.reshape(TH * W, Cin),
                                    w3_ref[dy * 3 + dx],
                                    preferred_element_type=jnp.float32)
        feat = jnp.maximum(acc * s1 + b1, 0.0)                        # (TH*W,Cout)
        sum_s[...] += jnp.sum(feat, axis=0, keepdims=True)
        out_ref[pl.ds(r0, TH), :, :] = feat.reshape(TH, W, Cout).astype(out_ref.dtype)

    foreach_tile(pass1)

    # ---- attention path: GAP -> 1x1 conv -> BN2 -> sigmoid (tiny, f32) -----
    mean = sum_s[...] * inv_hw                                        # (1, Cout)
    att = jnp.dot(mean, w1_ref[...], preferred_element_type=jnp.float32)
    att = jax.nn.sigmoid(att * s2_ref[...] + b2_ref[...])             # (1, Cout)
    att = att.reshape(1, 1, Cout)

    # ---- pass 2: rescale the stored feat tiles in place ---------------------
    def pass2(t):
        r0 = row0(t)
        tile = out_ref[pl.ds(r0, TH), :, :]
        out_ref[pl.ds(r0, TH), :, :] = (tile.astype(jnp.float32) * att).astype(out_ref.dtype)

    foreach_tile(pass2)


def attention_refinement_pallas_nhwc(x_nhwc, params, *, tile_rows=None,
                                     out_dtype=jnp.bfloat16):
    """x_nhwc: (N, H, W, Cin), any float dtype (cast to bf16 inside).
    Returns (N, H, W, Cout) in `out_dtype` (default bf16 to halve HBM writeback)."""
    N, H, W, Cin = x_nhwc.shape
    taps, cin_w, Cout = params["w3"].shape
    assert taps == 9 and cin_w == Cin

    if tile_rows is None:
        tile_rows = _pick_tile_rows(H, W, _default_max_rows())
    TH = tile_rows
    assert H % TH == 0

    x_nhwc = x_nhwc.astype(jnp.bfloat16)
    out_itemsize = jnp.dtype(out_dtype).itemsize

    kernel = functools.partial(_arm_kernel, H=H, W=W, Cin=Cin, Cout=Cout,
                               TH=TH, UNROLL=8)

    return pl.pallas_call(
        kernel,
        out_shape=jax.ShapeDtypeStruct((N, H, W, Cout), out_dtype),
        grid_spec=pltpu.PrefetchScalarGridSpec(
            num_scalar_prefetch=0,
            grid=(N,),
            in_specs=[
                pl.BlockSpec((None, H, W, Cin), lambda b: (b, 0, 0, 0)),
                pl.BlockSpec((9, Cin, Cout), lambda b: (0, 0, 0)),
                pl.BlockSpec((1, Cout), lambda b: (0, 0)),
                pl.BlockSpec((1, Cout), lambda b: (0, 0)),
                pl.BlockSpec((Cout, Cout), lambda b: (0, 0)),
                pl.BlockSpec((1, Cout), lambda b: (0, 0)),
                pl.BlockSpec((1, Cout), lambda b: (0, 0)),
            ],
            out_specs=pl.BlockSpec((None, H, W, Cout), lambda b: (b, 0, 0, 0)),
            scratch_shapes=[
                pltpu.VMEM((H + 2, W + 2, Cin), jnp.bfloat16),   # padded input
                pltpu.VMEM((1, Cout), jnp.float32),              # channel sum
            ],
        ),
        # Batch axis is fully independent -> eligible for megacore / 2-TC
        # splitting on v7x.  VMEM limit set explicitly (v7x has only 64 MiB
        # physical; v5e/v6e scoped defaults are 16/32 MiB).
        compiler_params=pltpu.CompilerParams(
            dimension_semantics=("parallel",),
            vmem_limit_bytes=_vmem_limit_bytes(H, W, Cin, Cout, out_itemsize)),
    )(x_nhwc, params["w3"], params["s1"], params["b1"],
      params["w1"], params["s2"], params["b2"])


def attention_refinement_pallas(x_nchw, params, *, tile_rows=None):
    """NCHW/f32 compatibility wrapper (matches the PyTorch module interface).

    TODO(synk): callers that already hold NHWC / bf16 activations should call
    attention_refinement_pallas_nhwc directly and skip this transpose + cast
    (a full extra HBM read+write of the input on a memory-bound module)."""
    N, Cin, H, W = x_nchw.shape
    x_nhwc = jnp.transpose(x_nchw, (0, 2, 3, 1)).astype(jnp.bfloat16)
    out_nhwc = attention_refinement_pallas_nhwc(x_nhwc, params,
                                                tile_rows=tile_rows,
                                                out_dtype=jnp.bfloat16)
    return jnp.transpose(out_nhwc, (0, 3, 1, 2)).astype(x_nchw.dtype)


def make_params(key, in_chan, out_chan, eps=1e-5):
    """Deterministic synthetic parameters (kaiming(a=1) convs, BN folded)."""
    ks = jax.random.split(key, 10)

    # conv 3x3 weight, torch layout (Cout, Cin, 3, 3)
    fan_in3 = in_chan * 9
    w3_t = jax.random.normal(ks[0], (out_chan, in_chan, 3, 3),
                             jnp.float32) * jnp.sqrt(1.0 / fan_in3)
    # -> tap-major (dy, dx), densely packed (9, Cin, Cout), bf16 MXU operand.
    w3 = jnp.transpose(w3_t, (2, 3, 1, 0)).reshape(9, in_chan, out_chan)
    w3 = w3.astype(jnp.bfloat16)

    # conv 1x1 weight, torch layout (Cout, Cout, 1, 1) -> (Cin=Cout, Cout), f32
    w1_t = jax.random.normal(ks[1], (out_chan, out_chan, 1, 1),
                             jnp.float32) * jnp.sqrt(1.0 / out_chan)
    w1 = jnp.transpose(w1_t[:, :, 0, 0], (1, 0))

    def folded_bn(kg, kb, km, kv):
        gamma = 1.0 + 0.1 * jax.random.normal(kg, (out_chan,), jnp.float32)
        beta = 0.1 * jax.random.normal(kb, (out_chan,), jnp.float32)
        rmean = 0.1 * jax.random.normal(km, (out_chan,), jnp.float32)
        rvar = 1.0 + 0.1 * jax.random.uniform(kv, (out_chan,), jnp.float32)
        scale = gamma / jnp.sqrt(rvar + eps)
        shift = beta - rmean * scale
        return scale.reshape(1, out_chan), shift.reshape(1, out_chan)

    s1, b1 = folded_bn(ks[2], ks[3], ks[4], ks[5])
    s2, b2 = folded_bn(ks[6], ks[7], ks[8], ks[9])
    return {"w3": w3, "w1": w1, "s1": s1, "b1": b1, "s2": s2, "b2": b2,
            "_w3_t": w3_t, "_w1_t": w1_t}


def reference_jax(x_nchw, params, *, mimic_kernel_rounding=False):
    """Pure-JAX reference (lax conv, f32) for the correctness check.

    With mimic_kernel_rounding=True the reference also applies the kernel's
    deliberate bf16 roundings (feat stored as bf16, output emitted as bf16);
    the attention vector is still computed from the un-rounded f32 feat, just
    like the kernel's f32 channel-sum path."""
    feat = jax.lax.conv_general_dilated(
        x_nchw, params["_w3_t"], window_strides=(1, 1), padding="SAME",
        dimension_numbers=("NCHW", "OIHW", "NCHW"),
        precision=jax.lax.Precision.HIGHEST)
    feat = feat * params["s1"].reshape(1, -1, 1, 1) + params["b1"].reshape(1, -1, 1, 1)
    feat = jnp.maximum(feat, 0.0)
    att = jnp.mean(feat, axis=(2, 3), keepdims=True)
    att = jax.lax.conv_general_dilated(
        att, params["_w1_t"], window_strides=(1, 1), padding="VALID",
        dimension_numbers=("NCHW", "OIHW", "NCHW"),
        precision=jax.lax.Precision.HIGHEST)
    att = att * params["s2"].reshape(1, -1, 1, 1) + params["b2"].reshape(1, -1, 1, 1)
    att = jax.nn.sigmoid(att)
    if mimic_kernel_rounding:
        feat_q = feat.astype(jnp.bfloat16).astype(jnp.float32)
        return (feat_q * att).astype(jnp.bfloat16).astype(jnp.float32)
    return feat * att


if __name__ == "__main__":
    key = jax.random.PRNGKey(0)
    kx, kp = jax.random.split(key)

    N, Cin, Cout, H, W = 2, 4, 8, 16, 16
    x = jax.random.normal(kx, (N, Cin, H, W), jnp.float32)
    params = make_params(kp, Cin, Cout)

    out = jax.block_until_ready(attention_refinement_pallas(x, params))
    assert out.shape == (N, Cout, H, W)

    # Tight check against a reference that consumes the same bf16-rounded
    # operands and applies the same bf16 feat/output roundings the kernel uses
    # (those roundings are the only deliberate precision differences).
    x_q = x.astype(jnp.bfloat16).astype(jnp.float32)
    params_q = dict(params)
    params_q["_w3_t"] = params["_w3_t"].astype(jnp.bfloat16).astype(jnp.float32)
    ref_q = jax.block_until_ready(
        reference_jax(x_q, params_q, mimic_kernel_rounding=True))
    err_q = float(jnp.max(jnp.abs(out - ref_q)))
    assert err_q < 1e-2, f"max abs error vs bf16-rounded reference: {err_q}"

    # Loose sanity check against the un-quantized f32 reference.
    ref_f32 = jax.block_until_ready(reference_jax(x, params))
    err_f32 = float(jnp.max(jnp.abs(out - ref_f32)))
    assert err_f32 < 1.5e-1, f"max abs error vs f32 reference: {err_f32}"

    print("KERNEL_OK")
</pallas_src>

<mosaic_0001>
module attributes {stable_mosaic.version = 11 : i64} {
  func.func @_arm_kernel(%arg0: i32, %arg1: memref<1x16x16x4xbf16, #tpu.memory_space<vmem>>, %arg2: memref<9x4x8xbf16, #tpu.memory_space<vmem>>, %arg3: memref<1x8xf32, #tpu.memory_space<vmem>>, %arg4: memref<1x8xf32, #tpu.memory_space<vmem>>, %arg5: memref<8x8xf32, #tpu.memory_space<vmem>>, %arg6: memref<1x8xf32, #tpu.memory_space<vmem>>, %arg7: memref<1x8xf32, #tpu.memory_space<vmem>>, %arg8: memref<1x16x16x8xbf16, #tpu.memory_space<vmem>>, %arg9: memref<18x18x4xbf16, #tpu.memory_space<vmem>>, %arg10: memref<1x8xf32, #tpu.memory_space<vmem>>) attributes {dimension_semantics = [#tpu.dimension_semantics<parallel>], iteration_bounds = array<i64: 2>, scalar_prefetch = 0 : i64, scratch_operands = 2 : i64, tpu.core_type = #tpu.core_type<tc>, window_params = [{transform_indices = @transform_0, window_bounds = array<i64: 1, 16, 16, 4>}, {pipeline_mode = #tpu.pipeline_mode<synchronous>, transform_indices = @transform_1, window_bounds = array<i64: 9, 4, 8>}, {pipeline_mode = #tpu.pipeline_mode<synchronous>, transform_indices = @transform_2, window_bounds = array<i64: 1, 8>}, {pipeline_mode = #tpu.pipeline_mode<synchronous>, transform_indices = @transform_3, window_bounds = array<i64: 1, 8>}, {pipeline_mode = #tpu.pipeline_mode<synchronous>, transform_indices = @transform_4, window_bounds = array<i64: 8, 8>}, {pipeline_mode = #tpu.pipeline_mode<synchronous>, transform_indices = @transform_5, window_bounds = array<i64: 1, 8>}, {pipeline_mode = #tpu.pipeline_mode<synchronous>, transform_indices = @transform_6, window_bounds = array<i64: 1, 8>}, {transform_indices = @transform_7, window_bounds = array<i64: 1, 16, 16, 8>}]} {
    %cst = arith.constant 0.000000e+00 : bf16
    %0 = vector.broadcast %cst : bf16 to vector<1x18x4xbf16>
    %c0 = arith.constant 0 : index
    %c0_0 = arith.constant 0 : index
    %c0_1 = arith.constant 0 : index
    %1 = vector.load %arg9[%c0, %c0_0, %c0_1] : memref<18x18x4xbf16, #tpu.memory_space<vmem>>, vector<1x18x4xbf16>
    tpu.vector_store %arg9[%c0, %c0_0, %c0_1], %0 {strides = array<i32>} : memref<18x18x4xbf16, #tpu.memory_space<vmem>>, vector<1x18x4xbf16>,
    %cst_2 = arith.constant 0.000000e+00 : bf16
    %2 = vector.broadcast %cst_2 : bf16 to vector<1x18x4xbf16>
    %c17 = arith.constant 17 : index
    %c0_3 = arith.constant 0 : index
    %c0_4 = arith.constant 0 : index
    %3 = vector.load %arg9[%c17, %c0_3, %c0_4] : memref<18x18x4xbf16, #tpu.memory_space<vmem>>, vector<1x18x4xbf16>
    tpu.vector_store %arg9[%c17, %c0_3, %c0_4], %2 {strides = array<i32>} : memref<18x18x4xbf16, #tpu.memory_space<vmem>>, vector<1x18x4xbf16>,
    %cst_5 = arith.constant 0.000000e+00 : bf16
    %4 = vector.broadcast %cst_5 : bf16 to vector<18x1x4xbf16>
    %c0_6 = arith.constant 0 : index
    %c0_7 = arith.constant 0 : index
    %c0_8 = arith.constant 0 : index
    %5 = vector.load %arg9[%c0_6, %c0_7, %c0_8] : memref<18x18x4xbf16, #tpu.memory_space<vmem>>, vector<18x1x4xbf16>
    tpu.vector_store %arg9[%c0_6, %c0_7, %c0_8], %4 {strides = array<i32>} : memref<18x18x4xbf16, #tpu.memory_space<vmem>>, vector<18x1x4xbf16>,
    %cst_9 = arith.constant 0.000000e+00 : bf16
    %6 = vector.broadcast %cst_9 : bf16 to vector<18x1x4xbf16>
    %c0_10 = arith.constant 0 : index
    %c17_11 = arith.constant 17 : index
    %c0_12 = arith.constant 0 : index
    %7 = vector.load %arg9[%c0_10, %c17_11, %c0_12] : memref<18x18x4xbf16, #tpu.memory_space<vmem>>, vector<18x1x4xbf16>
    tpu.vector_store %arg9[%c0_10, %c17_11, %c0_12], %6 {strides = array<i32>} : memref<18x18x4xbf16, #tpu.memory_space<vmem>>, vector<18x1x4xbf16>,
    %c0_13 = arith.constant 0 : index
    %c0_14 = arith.constant 0 : index
    %c0_15 = arith.constant 0 : index
    %c0_16 = arith.constant 0 : index
    %8 = vector.load %arg1[%c0_13, %c0_14, %c0_15, %c0_16] : memref<1x16x16x4xbf16, #tpu.memory_space<vmem>>, vector<1x16x16x4xbf16>
    %9 = vector.shape_cast %8 : vector<1x16x16x4xbf16> to vector<16x16x4xbf16>
    %c1 = arith.constant 1 : index
    %c1_17 = arith.constant 1 : index
    %c0_18 = arith.constant 0 : index
    %10 = vector.load %arg9[%c1, %c1_17, %c0_18] : memref<18x18x4xbf16, #tpu.memory_space<vmem>>, vector<16x16x4xbf16>
    tpu.vector_store %arg9[%c1, %c1_17, %c0_18], %9 {strides = array<i32>} : memref<18x18x4xbf16, #tpu.memory_space<vmem>>, vector<16x16x4xbf16>,
    %cst_19 = arith.constant 0.000000e+00 : f32
    %11 = vector.broadcast %cst_19 : f32 to vector<1x8xf32>
    %c0_20 = arith.constant 0 : index
    %c0_21 = arith.constant 0 : index
    %12 = vector.load %arg10[%c0_20, %c0_21] : memref<1x8xf32, #tpu.memory_space<vmem>>, vector<1x8xf32>
    tpu.vector_store %arg10[%c0_20, %c0_21], %11 {strides = array<i32>} : memref<1x8xf32, #tpu.memory_space<vmem>>, vector<1x8xf32>,
    %c0_22 = arith.constant 0 : index
    %c0_23 = arith.constant 0 : index
    %13 = vector.load %arg3[%c0_22, %c0_23] : memref<1x8xf32, #tpu.memory_space<vmem>>, vector<1x8xf32>
    %c0_24 = arith.constant 0 : index
    %c0_25 = arith.constant 0 : index
    %14 = vector.load %arg4[%c0_24, %c0_25] : memref<1x8xf32, #tpu.memory_space<vmem>>, vector<1x8xf32>
    %cst_26 = arith.constant 0.000000e+00 : f32
    %15 = vector.broadcast %cst_26 : f32 to vector<256x8xf32>
    %c0_27 = arith.constant 0 : index
    %c0_28 = arith.constant 0 : index
    %c0_29 = arith.constant 0 : index
    %16 = vector.load %arg9[%c0_27, %c0_28, %c0_29] : memref<18x18x4xbf16, #tpu.memory_space<vmem>>, vector<16x16x4xbf16>
    %17 = vector.shape_cast %16 : vector<16x16x4xbf16> to vector<256x4xbf16>
    %c0_30 = arith.constant 0 : index
    %c0_31 = arith.constant 0 : index
    %c0_32 = arith.constant 0 : index
    %18 = vector.load %arg2[%c0_30, %c0_31, %c0_32] : memref<9x4x8xbf16, #tpu.memory_space<vmem>>, vector<1x4x8xbf16>
    %19 = vector.shape_cast %18 : vector<1x4x8xbf16> to vector<4x8xbf16>
    %cst_33 = arith.constant dense<0.000000e+00> : vector<256x8xf32>
    %20 = tpu.matmul %17, %19, %cst_33 {dimension_numbers = #tpu.dot_dimension_numbers<[1], [0], [0], [1], [0, 0, 1, 1], [], []>} : vector<256x4xbf16>, vector<4x8xbf16>, vector<256x8xf32> -> vector<256x8xf32>
    %21 = arith.addf %15, %20 : vector<256x8xf32>
    %c0_34 = arith.constant 0 : index
    %c1_35 = arith.constant 1 : index
    %c0_36 = arith.constant 0 : index
    %22 = vector.load %arg9[%c0_34, %c1_35, %c0_36] : memref<18x18x4xbf16, #tpu.memory_space<vmem>>, vector<16x16x4xbf16>
    %23 = vector.shape_cast %22 : vector<16x16x4xbf16> to vector<256x4xbf16>
    %c1_37 = arith.constant 1 : index
    %c0_38 = arith.constant 0 : index
    %c0_39 = arith.constant 0 : index
    %24 = vector.load %arg2[%c1_37, %c0_38, %c0_39] : memref<9x4x8xbf16, #tpu.memory_space<vmem>>, vector<1x4x8xbf16>
    %25 = vector.shape_cast %24 : vector<1x4x8xbf16> to vector<4x8xbf16>
    %cst_40 = arith.constant dense<0.000000e+00> : vector<256x8xf32>
    %26 = tpu.matmul %23, %25, %cst_40 {dimension_numbers = #tpu.dot_dimension_numbers<[1], [0], [0], [1], [0, 0, 1, 1], [], []>} : vector<256x4xbf16>, vector<4x8xbf16>, vector<256x8xf32> -> vector<256x8xf32>
    %27 = arith.addf %21, %26 : vector<256x8xf32>
    %c0_41 = arith.constant 0 : index
    %c2 = arith.constant 2 : index
    %c0_42 = arith.constant 0 : index
    %28 = vector.load %arg9[%c0_41, %c2, %c0_42] : memref<18x18x4xbf16, #tpu.memory_space<vmem>>, vector<16x16x4xbf16>
    %29 = vector.shape_cast %28 : vector<16x16x4xbf16> to vector<256x4xbf16>
    %c2_43 = arith.constant 2 : index
    %c0_44 = arith.constant 0 : index
    %c0_45 = arith.constant 0 : index
    %30 = vector.load %arg2[%c2_43, %c0_44, %c0_45] : memref<9x4x8xbf16, #tpu.memory_space<vmem>>, vector<1x4x8xbf16>
    %31 = vector.shape_cast %30 : vector<1x4x8xbf16> to vector<4x8xbf16>
    %cst_46 = arith.constant dense<0.000000e+00> : vector<256x8xf32>
    %32 = tpu.matmul %29, %31, %cst_46 {dimension_numbers = #tpu.dot_dimension_numbers<[1], [0], [0], [1], [0, 0, 1, 1], [], []>} : vector<256x4xbf16>, vector<4x8xbf16>, vector<256x8xf32> -> vector<256x8xf32>
    %33 = arith.addf %27, %32 : vector<256x8xf32>
    %c1_47 = arith.constant 1 : index
    %c0_48 = arith.constant 0 : index
    %c0_49 = arith.constant 0 : index
    %34 = vector.load %arg9[%c1_47, %c0_48, %c0_49] : memref<18x18x4xbf16, #tpu.memory_space<vmem>>, vector<16x16x4xbf16>
    %35 = vector.shape_cast %34 : vector<16x16x4xbf16> to vector<256x4xbf16>
    %c3 = arith.constant 3 : index
    %c0_50 = arith.constant 0 : index
    %c0_51 = arith.constant 0 : index
    %36 = vector.load %arg2[%c3, %c0_50, %c0_51] : memref<9x4x8xbf16, #tpu.memory_space<vmem>>, vector<1x4x8xbf16>
    %37 = vector.shape_cast %36 : vector<1x4x8xbf16> to vector<4x8xbf16>
    %cst_52 = arith.constant dense<0.000000e+00> : vector<256x8xf32>
    %38 = tpu.matmul %35, %37, %cst_52 {dimension_numbers = #tpu.dot_dimension_numbers<[1], [0], [0], [1], [0, 0, 1, 1], [], []>} : vector<256x4xbf16>, vector<4x8xbf16>, vector<256x8xf32> -> vector<256x8xf32>
    %39 = arith.addf %33, %38 : vector<256x8xf32>
    %c1_53 = arith.constant 1 : index
    %c1_54 = arith.constant 1 : index
    %c0_55 = arith.constant 0 : index
    %40 = vector.load %arg9[%c1_53, %c1_54, %c0_55] : memref<18x18x4xbf16, #tpu.memory_space<vmem>>, vector<16x16x4xbf16>
    %41 = vector.shape_cast %40 : vector<16x16x4xbf16> to vector<256x4xbf16>
    %c4 = arith.constant 4 : index
    %c0_56 = arith.constant 0 : index
    %c0_57 = arith.constant 0 : index
    %42 = vector.load %arg2[%c4, %c0_56, %c0_57] : memref<9x4x8xbf16, #tpu.memory_space<vmem>>, vector<1x4x8xbf16>
    %43 = vector.shape_cast %42 : vector<1x4x8xbf16> to vector<4x8xbf16>
    %cst_58 = arith.constant dense<0.000000e+00> : vector<256x8xf32>
    %44 = tpu.matmul %41, %43, %cst_58 {dimension_numbers = #tpu.dot_dimension_numbers<[1], [0], [0], [1], [0, 0, 1, 1], [], []>} : vector<256x4xbf16>, vector<4x8xbf16>, vector<256x8xf32> -> vector<256x8xf32>
    %45 = arith.addf %39, %44 : vector<256x8xf32>
    %c1_59 = arith.constant 1 : index
    %c2_60 = arith.constant 2 : index
    %c0_61 = arith.constant 0 : index
    %46 = vector.load %arg9[%c1_59, %c2_60, %c0_61] : memref<18x18x4xbf16, #tpu.memory_space<vmem>>, vector<16x16x4xbf16>
    %47 = vector.shape_cast %46 : vector<16x16x4xbf16> to vector<256x4xbf16>
    %c5 = arith.constant 5 : index
    %c0_62 = arith.constant 0 : index
    %c0_63 = arith.constant 0 : index
    %48 = vector.load %arg2[%c5, %c0_62, %c0_63] : memref<9x4x8xbf16, #tpu.memory_space<vmem>>, vector<1x4x8xbf16>
    %49 = vector.shape_cast %48 : vector<1x4x8xbf16> to vector<4x8xbf16>
    %cst_64 = arith.constant dense<0.000000e+00> : vector<256x8xf32>
    %50 = tpu.matmul %47, %49, %cst_64 {dimension_numbers = #tpu.dot_dimension_numbers<[1], [0], [0], [1], [0, 0, 1, 1], [], []>} : vector<256x4xbf16>, vector<4x8xbf16>, vector<256x8xf32> -> vector<256x8xf32>
    %51 = arith.addf %45, %50 : vector<256x8xf32>
    %c2_65 = arith.constant 2 : index
    %c0_66 = arith.constant 0 : index
    %c0_67 = arith.constant 0 : index
    %52 = vector.load %arg9[%c2_65, %c0_66, %c0_67] : memref<18x18x4xbf16, #tpu.memory_space<vmem>>, vector<16x16x4xbf16>
    %53 = vector.shape_cast %52 : vector<16x16x4xbf16> to vector<256x4xbf16>
    %c6 = arith.constant 6 : index
    %c0_68 = arith.constant 0 : index
    %c0_69 = arith.constant 0 : index
    %54 = vector.load %arg2[%c6, %c0_68, %c0_69] : memref<9x4x8xbf16, #tpu.memory_space<vmem>>, vector<1x4x8xbf16>
    %55 = vector.shape_cast %54 : vector<1x4x8xbf16> to vector<4x8xbf16>
    %cst_70 = arith.constant dense<0.000000e+00> : vector<256x8xf32>
    %56 = tpu.matmul %53, %55, %cst_70 {dimension_numbers = #tpu.dot_dimension_numbers<[1], [0], [0], [1], [0, 0, 1, 1], [], []>} : vector<256x4xbf16>, vector<4x8xbf16>, vector<256x8xf32> -> vector<256x8xf32>
    %57 = arith.addf %51, %56 : vector<256x8xf32>
    %c2_71 = arith.constant 2 : index
    %c1_72 = arith.constant 1 : index
    %c0_73 = arith.constant 0 : index
    %58 = vector.load %arg9[%c2_71, %c1_72, %c0_73] : memref<18x18x4xbf16, #tpu.memory_space<vmem>>, vector<16x16x4xbf16>
    %59 = vector.shape_cast %58 : vector<16x16x4xbf16> to vector<256x4xbf16>
    %c7 = arith.constant 7 : index
    %c0_74 = arith.constant 0 : index
    %c0_75 = arith.constant 0 : index
    %60 = vector.load %arg2[%c7, %c0_74, %c0_75] : memref<9x4x8xbf16, #tpu.memory_space<vmem>>, vector<1x4x8xbf16>
    %61 = vector.shape_cast %60 : vector<1x4x8xbf16> to vector<4x8xbf16>
    %cst_76 = arith.constant dense<0.000000e+00> : vector<256x8xf32>
    %62 = tpu.matmul %59, %61, %cst_76 {dimension_numbers = #tpu.dot_dimension_numbers<[1], [0], [0], [1], [0, 0, 1, 1], [], []>} : vector<256x4xbf16>, vector<4x8xbf16>, vector<256x8xf32> -> vector<256x8xf32>
    %63 = arith.addf %57, %62 : vector<256x8xf32>
    %c2_77 = arith.constant 2 : index
    %c2_78 = arith.constant 2 : index
    %c0_79 = arith.constant 0 : index
    %64 = vector.load %arg9[%c2_77, %c2_78, %c0_79] : memref<18x18x4xbf16, #tpu.memory_space<vmem>>, vector<16x16x4xbf16>
    %65 = vector.shape_cast %64 : vector<16x16x4xbf16> to vector<256x4xbf16>
    %c8 = arith.constant 8 : index
    %c0_80 = arith.constant 0 : index
    %c0_81 = arith.constant 0 : index
    %66 = vector.load %arg2[%c8, %c0_80, %c0_81] : memref<9x4x8xbf16, #tpu.memory_space<vmem>>, vector<1x4x8xbf16>
    %67 = vector.shape_cast %66 : vector<1x4x8xbf16> to vector<4x8xbf16>
    %cst_82 = arith.constant dense<0.000000e+00> : vector<256x8xf32>
    %68 = tpu.matmul %65, %67, %cst_82 {dimension_numbers = #tpu.dot_dimension_numbers<[1], [0], [0], [1], [0, 0, 1, 1], [], []>} : vector<256x4xbf16>, vector<4x8xbf16>, vector<256x8xf32> -> vector<256x8xf32>
    %69 = arith.addf %63, %68 : vector<256x8xf32>
    %70 = vector.broadcast %13 : vector<1x8xf32> to vector<256x8xf32>
    %71 = arith.mulf %69, %70 : vector<256x8xf32>
    %72 = vector.broadcast %14 : vector<1x8xf32> to vector<256x8xf32>
    %73 = arith.addf %71, %72 : vector<256x8xf32>
    %cst_83 = arith.constant 0.000000e+00 : f32
    %74 = vector.broadcast %cst_83 : f32 to vector<256x8xf32>
    %75 = arith.maximumf %73, %74 : vector<256x8xf32>
    %c0_84 = arith.constant 0 : index
    %c0_85 = arith.constant 0 : index
    %76 = vector.load %arg10[%c0_84, %c0_85] : memref<1x8xf32, #tpu.memory_space<vmem>>, vector<1x8xf32>
    %cst_86 = arith.constant dense<0.000000e+00> : vector<8xf32>
    %77 = vector.multi_reduction <add>, %75, %cst_86 [0] : vector<256x8xf32> to vector<8xf32>
    %78 = vector.shape_cast %77 : vector<8xf32> to vector<1x8xf32>
    %79 = arith.addf %76, %78 : vector<1x8xf32>
    %c0_87 = arith.constant 0 : index
    %c0_88 = arith.constant 0 : index
    %80 = vector.load %arg10[%c0_87, %c0_88] : memref<1x8xf32, #tpu.memory_space<vmem>>, vector<1x8xf32>
    tpu.vector_store %arg10[%c0_87, %c0_88], %79 {strides = array<i32>} : memref<1x8xf32, #tpu.memory_space<vmem>>, vector<1x8xf32>,
    %81 = vector.shape_cast %75 : vector<256x8xf32> to vector<16x16x8xf32>
    %82 = arith.truncf %81 : vector<16x16x8xf32> to vector<16x16x8xbf16>
    %c0_89 = arith.constant 0 : index
    %c0_90 = arith.constant 0 : index
    %c0_91 = arith.constant 0 : index
    %c0_92 = arith.constant 0 : index
    %83 = vector.load %arg8[%c0_89, %c0_90, %c0_91, %c0_92] : memref<1x16x16x8xbf16, #tpu.memory_space<vmem>>, vector<1x16x16x8xbf16>
    %84 = vector.shape_cast %83 : vector<1x16x16x8xbf16> to vector<16x16x8xbf16>
    %85 = vector.shape_cast %82 : vector<16x16x8xbf16> to vector<1x16x16x8xbf16>
    tpu.vector_store %arg8[%c0_89, %c0_90, %c0_91, %c0_92], %85 {strides = array<i32>} : memref<1x16x16x8xbf16, #tpu.memory_space<vmem>>, vector<1x16x16x8xbf16>,
    %c0_93 = arith.constant 0 : index
    %c0_94 = arith.constant 0 : index
    %86 = vector.load %arg10[%c0_93, %c0_94] : memref<1x8xf32, #tpu.memory_space<vmem>>, vector<1x8xf32>
    %cst_95 = arith.constant 3.906250e-03 : f32
    %87 = vector.broadcast %cst_95 : f32 to vector<1x8xf32>
    %88 = arith.mulf %86, %87 : vector<1x8xf32>
    %c0_96 = arith.constant 0 : index
    %c0_97 = arith.constant 0 : index
    %89 = vector.load %arg5[%c0_96, %c0_97] : memref<8x8xf32, #tpu.memory_space<vmem>>, vector<8x8xf32>
    %cst_98 = arith.constant dense<0.000000e+00> : vector<1x8xf32>
    %90 = tpu.matmul %88, %89, %cst_98 {dimension_numbers = #tpu.dot_dimension_numbers<[1], [0], [0], [1], [0, 0, 1, 1], [], []>} : vector<1x8xf32>, vector<8x8xf32>, vector<1x8xf32> -> vector<1x8xf32>
    %c0_99 = arith.constant 0 : index
    %c0_100 = arith.constant 0 : index
    %91 = vector.load %arg6[%c0_99, %c0_100] : memref<1x8xf32, #tpu.memory_space<vmem>>, vector<1x8xf32>
    %92 = arith.mulf %90, %91 : vector<1x8xf32>
    %c0_101 = arith.constant 0 : index
    %c0_102 = arith.constant 0 : index
    %93 = vector.load %arg7[%c0_101, %c0_102] : memref<1x8xf32, #tpu.memory_space<vmem>>, vector<1x8xf32>
    %94 = arith.addf %92, %93 : vector<1x8xf32>
    %95 = arith.negf %94 : vector<1x8xf32>
    %96 = math.exp %95 : vector<1x8xf32>
    %cst_103 = arith.constant 1.000000e+00 : f32
    %97 = vector.broadcast %cst_103 : f32 to vector<1x8xf32>
    %98 = arith.addf %97, %96 : vector<1x8xf32>
    %99 = arith.divf %97, %98 : vector<1x8xf32>
    %100 = vector.shape_cast %99 : vector<1x8xf32> to vector<1x1x8xf32>
    %c0_104 = arith.constant 0 : index
    %c0_105 = arith.constant 0 : index
    %c0_106 = arith.constant 0 : index
    %c0_107 = arith.constant 0 : index
    %101 = vector.load %arg8[%c0_104, %c0_105, %c0_106, %c0_107] : memref<1x16x16x8xbf16, #tpu.memory_space<vmem>>, vector<1x16x16x8xbf16>
    %102 = vector.shape_cast %101 : vector<1x16x16x8xbf16> to vector<16x16x8xbf16>
    %103 = arith.extf %102 : vector<16x16x8xbf16> to vector<16x16x8xf32>
    %104 = vector.broadcast %100 : vector<1x1x8xf32> to vector<16x16x8xf32>
    %105 = arith.mulf %103, %104 : vector<16x16x8xf32>
    %106 = arith.truncf %105 : vector<16x16x8xf32> to vector<16x16x8xbf16>
    %c0_108 = arith.constant 0 : index
    %c0_109 = arith.constant 0 : index
    %c0_110 = arith.constant 0 : index
    %c0_111 = arith.constant 0 : index
    %107 = vector.load %arg8[%c0_108, %c0_109, %c0_110, %c0_111] : memref<1x16x16x8xbf16, #tpu.memory_space<vmem>>, vector<1x16x16x8xbf16>
    %108 = vector.shape_cast %107 : vector<1x16x16x8xbf16> to vector<16x16x8xbf16>
    %109 = vector.shape_cast %106 : vector<16x16x8xbf16> to vector<1x16x16x8xbf16>
    tpu.vector_store %arg8[%c0_108, %c0_109, %c0_110, %c0_111], %109 {strides = array<i32>} : memref<1x16x16x8xbf16, #tpu.memory_space<vmem>>, vector<1x16x16x8xbf16>,
    return
  }
  func.func @transform_0(%arg0: i32) -> (i32, i32, i32, i32) {
    %c0_i32 = arith.constant 0 : i32
    %c0_i32_0 = arith.constant 0 : i32
    %c0_i32_1 = arith.constant 0 : i32
    %c0_i32_2 = arith.constant 0 : i32
    return %arg0, %c0_i32, %c0_i32_0, %c0_i32_1 : i32, i32, i32, i32
  }
  func.func @transform_1(%arg0: i32) -> (i32, i32, i32) {
    %c0_i32 = arith.constant 0 : i32
    %c0_i32_0 = arith.constant 0 : i32
    %c0_i32_1 = arith.constant 0 : i32
    %c0_i32_2 = arith.constant 0 : i32
    return %c0_i32, %c0_i32_0, %c0_i32_1 : i32, i32, i32
  }
  func.func @transform_2(%arg0: i32) -> (i32, i32) {
    %c0_i32 = arith.constant 0 : i32
    %c0_i32_0 = arith.constant 0 : i32
    %c0_i32_1 = arith.constant 0 : i32
    return %c0_i32, %c0_i32_0 : i32, i32
  }
  func.func @transform_3(%arg0: i32) -> (i32, i32) {
    %c0_i32 = arith.constant 0 : i32
    %c0_i32_0 = arith.constant 0 : i32
    %c0_i32_1 = arith.constant 0 : i32
    return %c0_i32, %c0_i32_0 : i32, i32
  }
  func.func @transform_4(%arg0: i32) -> (i32, i32) {
    %c0_i32 = arith.constant 0 : i32
    %c0_i32_0 = arith.constant 0 : i32
    %c0_i32_1 = arith.constant 0 : i32
    return %c0_i32, %c0_i32_0 : i32, i32
  }
  func.func @transform_5(%arg0: i32) -> (i32, i32) {
    %c0_i32 = arith.constant 0 : i32
    %c0_i32_0 = arith.constant 0 : i32
    %c0_i32_1 = arith.constant 0 : i32
    return %c0_i32, %c0_i32_0 : i32, i32
  }
  func.func @transform_6(%arg0: i32) -> (i32, i32) {
    %c0_i32 = arith.constant 0 : i32
    %c0_i32_0 = arith.constant 0 : i32
    %c0_i32_1 = arith.constant 0 : i32
    return %c0_i32, %c0_i32_0 : i32, i32
  }
  func.func @transform_7(%arg0: i32) -> (i32, i32, i32, i32) {
    %c0_i32 = arith.constant 0 : i32
    %c0_i32_0 = arith.constant 0 : i32
    %c0_i32_1 = arith.constant 0 : i32
    %c0_i32_2 = arith.constant 0 : i32
    return %arg0, %c0_i32, %c0_i32_0, %c0_i32_1 : i32, i32, i32, i32
  }
}

</mosaic_0001>

<llo_original>
// kernel: tpu_custom_call.1
$region0: #{tpu_custom_call.1}
  #allocation0 [shape = 'u32[]', space=smem, size = 0x4, offset = 0x4, fixed_abs, tag = 'smem constant byte address 0x4 - core index']
  #allocation1 [shape = 'u32[144,128]{1,0:T(1,128)}', space=vmem, size = 0x12000, scoped, tag = 'internal scratch']
  #allocation2 [shape = 'bf16[18,18,4]{2,1,0:T(8,128)(2,1)}', space=vmem, size = 0x1b000, scoped, tag = 'scratch operand']
  #allocation3 [shape = 'f32[1,8]{1,0:T(1,128)}', space=vmem, size = 0x200, scoped, tag = 'scratch operand']
  %s0 = inlined_call_operand.vmem [shape: bf16[2,16,16,4], index: 0, kind: input, shape index: {}]
  %s1 = inlined_call_operand.vmem [shape: bf16[9,4,8], index: 1, kind: input, shape index: {}]
  %s2 = inlined_call_operand.vmem [shape: f32[1,8], index: 2, kind: input, shape index: {}]
  %s3 = inlined_call_operand.vmem [shape: f32[1,8], index: 3, kind: input, shape index: {}]
  %s4 = inlined_call_operand.vmem [shape: f32[8,8], index: 4, kind: input, shape index: {}]
  %s5 = inlined_call_operand.vmem [shape: f32[1,8], index: 5, kind: input, shape index: {}]
  %s6 = inlined_call_operand.vmem [shape: f32[1,8], index: 6, kind: input, shape index: {}]
  %s7 = inlined_call_operand.vmem [shape: bf16[2,16,16,8], index: 7, kind: output, shape index: {}]
  %s8 = sld [smem:[#allocation0]]
  $region61: #{tpu_custom_call.1} parent=0
    _
  %s10 = ssub.s32 1, %s8
  %s11 = scalar_select 0, %s10, %s8
  loop: start=0, step=1, limit=4
  $region2: #{tpu_custom_call.1} parent=0 // loop_pre_header
    _
  $region3: #{tpu_custom_call.1} parent=0 // loop_header
    %s13 = sphi 0, %s17
    %p14 = scmp.ge.s32.totalorder %s13, 4
    %s23 = sphi 0, %s25
    %s26 = sphi 0, %s23
    %s27 = sphi 0, %s26
    %s43 = sphi 0, %s27
    %s47 = sphi 0, %s47
    %s49 = sphi 0, %s47
    %s50 = sphi 0, %s49
    %s64 = sphi 0, %s50
    %s68 = sphi 0, %s68
    %s70 = sphi 0, %s68
    %s71 = sphi 0, %s70
    %s85 = sphi 0, %s71
    %s89 = sphi 0, %s89
    %s91 = sphi 0, %s89
    %s92 = sphi 0, %s91
    %s106 = sphi 0, %s92
    %s110 = sphi 0, %s110
    %s112 = sphi 0, %s110
    %s113 = sphi 0, %s112
    %s127 = sphi 0, %s113
    %s131 = sphi 0, %s131
    %s133 = sphi 0, %s131
    %s134 = sphi 0, %s133
    %s148 = sphi 0, %s134
    %s152 = sphi 0, %s152
    %s154 = sphi 0, %s152
    %s155 = sphi 0, %s154
    %s169 = sphi 0, %s155
    %s175 = sphi 0, %s177
    %s178 = sphi 0, %s175
    %s179 = sphi 0, %s178
    %s195 = sphi 0, %s179
  $region4: #{tpu_custom_call.1} parent=0 // loop_header_branch
    %16 = sbr.rel (%p14) target = $region8
  $region5: #{tpu_custom_call.1} parent=0 // loop_body
    %s18 = ssub.s32 %s13, 1
    %s19 = ssub.s32 %s13, 2
    %s20 = sadd.s32 %s13, 1
    %s21 = ssub.s32 %s13, %s20
    %p22 = scmp.eq.s32.totalorder %s21, 0
    %s24 = sadd.s32 %s23, 1
    %s25 = scalar_select %p22, %s23, %s24
    %p28 = pneg %p22
    %p29 = scmp.eq.s32.totalorder %s13, 1
    %p30 = por %p28, %p29
    %p31 = scmp.ne.s32.totalorder %s23, %s26
    %p32 = scmp.eq.s32.totalorder %s13, 0
    %p33 = por %p31, %p32
    %p34 = scmp.ne.s32.totalorder %s23, %s26
    %p35 = scmp.eq.s32.totalorder %s18, 1
    %p36 = por %p34, %p35
    %p37 = scmp.ne.s32.totalorder %s26, %s27
    %p38 = scmp.eq.s32.totalorder %s18, 0
    %p39 = por %p37, %p38
    %p40 = scmp.ne.s32.totalorder %s26, %s27
    %p41 = scmp.eq.s32.totalorder %s19, 1
    %p42 = por %p40, %p41
    %p44 = scmp.ne.s32.totalorder %s27, %s43
    %p45 = scmp.eq.s32.totalorder %s19, 0
    %p46 = por %p44, %p45
    %s48 = sadd.s32 %s47, 1
    %p51 = scmp.eq.s32.totalorder %s13, 1
    %p52 = scmp.ne.s32.totalorder %s47, %s49
    %p53 = scmp.eq.s32.totalorder %s13, 0
    %p54 = por %p52, %p53
    %p55 = scmp.ne.s32.totalorder %s47, %s49
    %p56 = scmp.eq.s32.totalorder %s18, 1
    %p57 = por %p55, %p56
    %p58 = scmp.ne.s32.totalorder %s49, %s50
    %p59 = scmp.eq.s32.totalorder %s18, 0
    %p60 = por %p58, %p59
    %p61 = scmp.ne.s32.totalorder %s49, %s50
    %p62 = scmp.eq.s32.totalorder %s19, 1
    %p63 = por %p61, %p62
    %p65 = scmp.ne.s32.totalorder %s50, %s64
    %p66 = scmp.eq.s32.totalorder %s19, 0
    %p67 = por %p65, %p66
    %s69 = sadd.s32 %s68, 1
    %p72 = scmp.eq.s32.totalorder %s13, 1
    %p73 = scmp.ne.s32.totalorder %s68, %s70
    %p74 = scmp.eq.s32.totalorder %s13, 0
    %p75 = por %p73, %p74
    %p76 = scmp.ne.s32.totalorder %s68, %s70
    %p77 = scmp.eq.s32.totalorder %s18, 1
    %p78 = por %p76, %p77
    %p79 = scmp.ne.s32.totalorder %s70, %s71
    %p80 = scmp.eq.s32.totalorder %s18, 0
    %p81 = por %p79, %p80
    %p82 = scmp.ne.s32.totalorder %s70, %s71
    %p83 = scmp.eq.s32.totalorder %s19, 1
    %p84 = por %p82, %p83
    %p86 = scmp.ne.s32.totalorder %s71, %s85
    %p87 = scmp.eq.s32.totalorder %s19, 0
    %p88 = por %p86, %p87
    %s90 = sadd.s32 %s89, 1
    %p93 = scmp.eq.s32.totalorder %s13, 1
    %p94 = scmp.ne.s32.totalorder %s89, %s91
    %p95 = scmp.eq.s32.totalorder %s13, 0
    %p96 = por %p94, %p95
    %p97 = scmp.ne.s32.totalorder %s89, %s91
    %p98 = scmp.eq.s32.totalorder %s18, 1
    %p99 = por %p97, %p98
    %p100 = scmp.ne.s32.totalorder %s91, %s92
    %p101 = scmp.eq.s32.totalorder %s18, 0
    %p102 = por %p100, %p101
    %p103 = scmp.ne.s32.totalorder %s91, %s92
    %p104 = scmp.eq.s32.totalorder %s19, 1
    %p105 = por %p103, %p104
    %p107 = scmp.ne.s32.totalorder %s92, %s106
    %p108 = scmp.eq.s32.totalorder %s19, 0
    %p109 = por %p107, %p108
    %s111 = sadd.s32 %s110, 1
    %p114 = scmp.eq.s32.totalorder %s13, 1
    %p115 = scmp.ne.s32.totalorder %s110, %s112
    %p116 = scmp.eq.s32.totalorder %s13, 0
    %p117 = por %p115, %p116
    %p118 = scmp.ne.s32.totalorder %s110, %s112
    %p119 = scmp.eq.s32.totalorder %s18, 1
    %p120 = por %p118, %p119
    %p121 = scmp.ne.s32.totalorder %s112, %s113
    %p122 = scmp.eq.s32.totalorder %s18, 0
    %p123 = por %p121, %p122
    %p124 = scmp.ne.s32.totalorder %s112, %s113
    %p125 = scmp.eq.s32.totalorder %s19, 1
    %p126 = por %p124, %p125
    %p128 = scmp.ne.s32.totalorder %s113, %s127
    %p129 = scmp.eq.s32.totalorder %s19, 0
    %p130 = por %p128, %p129
    %s132 = sadd.s32 %s131, 1
    %p135 = scmp.eq.s32.totalorder %s13, 1
    %p136 = scmp.ne.s32.totalorder %s131, %s133
    %p137 = scmp.eq.s32.totalorder %s13, 0
    %p138 = por %p136, %p137
    %p139 = scmp.ne.s32.totalorder %s131, %s133
    %p140 = scmp.eq.s32.totalorder %s18, 1
    %p141 = por %p139, %p140
    %p142 = scmp.ne.s32.totalorder %s133, %s134
    %p143 = scmp.eq.s32.totalorder %s18, 0
    %p144 = por %p142, %p143
    %p145 = scmp.ne.s32.totalorder %s133, %s134
    %p146 = scmp.eq.s32.totalorder %s19, 1
    %p147 = por %p145, %p146
    %p149 = scmp.ne.s32.totalorder %s134, %s148
    %p150 = scmp.eq.s32.totalorder %s19, 0
    %p151 = por %p149, %p150
    %s153 = sadd.s32 %s152, 1
    %p156 = scmp.eq.s32.totalorder %s13, 1
    %p157 = scmp.ne.s32.totalorder %s152, %s154
    %p158 = scmp.eq.s32.totalorder %s13, 0
    %p159 = por %p157, %p158
    %p160 = scmp.ne.s32.totalorder %s152, %s154
    %p161 = scmp.eq.s32.totalorder %s18, 1
    %p162 = por %p160, %p161
    %p163 = scmp.ne.s32.totalorder %s154, %s155
    %p164 = scmp.eq.s32.totalorder %s18, 0
    %p165 = por %p163, %p164
    %p166 = scmp.ne.s32.totalorder %s154, %s155
    %p167 = scmp.eq.s32.totalorder %s19, 1
    %p168 = por %p166, %p167
    %p170 = scmp.ne.s32.totalorder %s155, %s169
    %p171 = scmp.eq.s32.totalorder %s19, 0
    %p172 = por %p170, %p171
    %s173 = ssub.s32 %s13, %s20
    %p174 = scmp.eq.s32.totalorder %s173, 0
    %s176 = sadd.s32 %s175, 1
    %s177 = scalar_select %p174, %s175, %s176
    %p180 = pneg %p174
    %p181 = scmp.eq.s32.totalorder %s13, 1
    %p182 = por %p180, %p181
    %p183 = scmp.ne.s32.totalorder %s175, %s178
    %p184 = scmp.eq.s32.totalorder %s13, 0
    %p185 = por %p183, %p184
    %p186 = scmp.ne.s32.totalorder %s175, %s178
    %p187 = scmp.eq.s32.totalorder %s18, 1
    %p188 = por %p186, %p187
    %p189 = scmp.ne.s32.totalorder %s178, %s179
    %p190 = scmp.eq.s32.totalorder %s18, 0
    %p191 = por %p189, %p190
    %p192 = scmp.ne.s32.totalorder %s178, %s179
    %p193 = scmp.eq.s32.totalorder %s19, 1
    %p194 = por %p192, %p193
    %p196 = scmp.ne.s32.totalorder %s179, %s195
    %p197 = scmp.eq.s32.totalorder %s19, 0
    %p198 = por %p196, %p197
    %p199 = scmp.le.s32.totalorder 1, %s13
    %p200 = scmp.lt.s32.totalorder %s13, 3
    %p201 = pnand %p199, %p200
    %p202 = pneg %p201
    // Predicated region
    $region9: #{tpu_custom_call.1} parent=5 // pred_check
      _
    $region10: #{tpu_custom_call.1} parent=5 // pred_check_branch
      %204 = sbr.rel (%p201) target = $region12
    $region11: #{tpu_custom_call.1} parent=5 // pred_region
      %s205 = ssub.s32 %s13, 1
      // Predicated region
      $region13: #{tpu_custom_call.1} parent=11 // pred_check
        %p206 = pneg %p60
      $region14: #{tpu_custom_call.1} parent=11 // pred_check_branch
        %208 = sbr.rel (%p206) target = $region16
      $region15: #{tpu_custom_call.1} parent=11 // pred_region
        _
      $region16: #{tpu_custom_call.1} parent=11 // pred_fallthru
        _
      // Predicated region
      $region17: #{tpu_custom_call.1} parent=11 // pred_check
        %p209 = pneg %p81
      $region18: #{tpu_custom_call.1} parent=11 // pred_check_branch
        %211 = sbr.rel (%p209) target = $region20
      $region19: #{tpu_custom_call.1} parent=11 // pred_region
        _
      $region20: #{tpu_custom_call.1} parent=11 // pred_fallthru
        _
      // Predicated region
      $region21: #{tpu_custom_call.1} parent=11 // pred_check
        %p212 = pneg %p102
      $region22: #{tpu_custom_call.1} parent=11 // pred_check_branch
        %214 = sbr.rel (%p212) target = $region24
      $region23: #{tpu_custom_call.1} parent=11 // pred_region
        _
      $region24: #{tpu_custom_call.1} parent=11 // pred_fallthru
        _
      // Predicated region
      $region25: #{tpu_custom_call.1} parent=11 // pred_check
        %p215 = pneg %p123
      $region26: #{tpu_custom_call.1} parent=11 // pred_check_branch
        %217 = sbr.rel (%p215) target = $region28
      $region27: #{tpu_custom_call.1} parent=11 // pred_region
        _
      $region28: #{tpu_custom_call.1} parent=11 // pred_fallthru
        _
      // Predicated region
      $region29: #{tpu_custom_call.1} parent=11 // pred_check
        %p218 = pneg %p144
      $region30: #{tpu_custom_call.1} parent=11 // pred_check_branch
        %220 = sbr.rel (%p218) target = $region32
      $region31: #{tpu_custom_call.1} parent=11 // pred_region
        _
      $region32: #{tpu_custom_call.1} parent=11 // pred_fallthru
        _
      // Predicated region
      $region33: #{tpu_custom_call.1} parent=11 // pred_check
        %p221 = pneg %p165
      $region34: #{tpu_custom_call.1} parent=11 // pred_check_branch
        %223 = sbr.rel (%p221) target = $region36
      $region35: #{tpu_custom_call.1} parent=11 // pred_region
        _
      $region36: #{tpu_custom_call.1} parent=11 // pred_fallthru
        _
    $region12: #{tpu_custom_call.1} parent=5 // pred_fallthru
      _
    %p224 = scmp.lt.s32.totalorder %s13, 2
    // Predicated region
    $region37: #{tpu_custom_call.1} parent=5 // pred_check
      %p225 = pneg %p224
    $region38: #{tpu_custom_call.1} parent=5 // pred_check_branch
      %227 = sbr.rel (%p225) target = $region40
    $region39: #{tpu_custom_call.1} parent=5 // pred_region
      // Predicated region
      $region41: #{tpu_custom_call.1} parent=39 // pred_check
        %p228 = pneg %p33
      $region42: #{tpu_custom_call.1} parent=39 // pred_check_branch
        %230 = sbr.rel (%p228) target = $region44
      $region43: #{tpu_custom_call.1} parent=39 // pred_region
        %p231 = scmp.lt.s32.totalorder %s13, 1
        %s232 = scalar_select %p231, %s13, 1
        %s233 = smul.addr %s232, 32
        %s234 = smul.addr %s233, 4
        %s235 = scalar_lea.vmem %s0, %s234
      $region44: #{tpu_custom_call.1} parent=39 // pred_fallthru
        _
    $region40: #{tpu_custom_call.1} parent=5 // pred_fallthru
      _
    %p236 = scmp.le.s32.totalorder 1, %s13
    %p237 = scmp.lt.s32.totalorder %s13, 3
    %p238 = pnand %p236, %p237
    %p239 = pneg %p238
    // Predicated region
    $region45: #{tpu_custom_call.1} parent=5 // pred_check
      _
    $region46: #{tpu_custom_call.1} parent=5 // pred_check_branch
      %241 = sbr.rel (%p238) target = $region48
    $region47: #{tpu_custom_call.1} parent=5 // pred_region
      %s242 = ssub.s32 %s13, 1
      %p243 = scmp.lt.s32.totalorder %s18, 1
      %s244 = scalar_select %p243, %s18, 1
      %s245 = smul.addr %s244, 32
      %s246 = smul.addr %s245, 4
      %s247 = scalar_lea.vmem %s0, %s246
      %p248 = pneg %p39
      %p249 = pneg %p36
      %p250 = pneg %p60
      %p251 = pneg %p57
      %p252 = pneg %p81
      %p253 = pneg %p78
      %p254 = pneg %p102
      %p255 = pneg %p99
      %p256 = pneg %p123
      %p257 = pneg %p120
      %p258 = pneg %p144
      %p259 = pneg %p141
      %p260 = pneg %p165
      %p261 = pneg %p162
      %p262 = pneg %p191
      %p263 = pneg %p188
      %p264 = scmp.lt.s32.totalorder %s18, 1
      %s265 = scalar_select %p264, %s18, 1
      %s266 = smul.addr %s265, 32
      %s267 = smul.addr %s266, 4
      %s268 = scalar_lea.vmem %s7, %s267
      %p269 = scmp.lt.s32.totalorder %s18, 1
      %s270 = scalar_select %p269, %s18, 1
      %s271 = smul.addr %s270, 32
      %s272 = smul.addr %s271, 4
      %s273 = scalar_lea.vmem %s0, %s272
      %p274 = scmp.lt.s32.totalorder %s18, 1
      %s275 = scalar_select %p274, %s18, 1
      %s276 = smul.addr %s275, 32
      %s277 = smul.addr %s276, 4
      %s278 = scalar_lea.vmem %s7, %s277
      %vm280 = vcmask 27648
      %281 = vst.msk [vmem:[#allocation2] sm:$0xf] %vm280, 0
      %282 = vst.msk [vmem:[#allocation2 + $0x4] sm:$0xf] %vm280, 0
      %vm283 = vcmask 24576
      %284 = vst.msk [vmem:[#allocation2 + $0x8] sm:$0x1] %vm283, 0
      %s285 = scalar_lea.vmem [#allocation2], 204
      %286 = vst.msk [vmem:[%s285] sm:$0xf] %vm280, 0
      %287 = vst.msk [vmem:[%s285 + $0x4] sm:$0xf] %vm280, 0
      %288 = vst.msk [vmem:[%s285 + $0x8] sm:$0x1] %vm283, 0
      %vm289 = vcmask 24576
      %vm290 = vsmask.f32 256
      %vm291 = vmand %vm289, %vm290
      %v292 = vld [vmem:[#allocation2] sm:$0x1]
      %v293 = vsel %vm291, 0, %v292
      %294 = vst [vmem:[#allocation2] sm:$0x1] %v293
      %v295 = vld [vmem:[#allocation2 + $0xc] sm:$0x1]
      %v296 = vsel %vm291, 0, %v295
      %297 = vst [vmem:[#allocation2 + $0xc] sm:$0x1] %v296
      %v298 = vld [vmem:[#allocation2 + $0x18] sm:$0x1]
      %v299 = vsel %vm291, 0, %v298
      %300 = vst [vmem:[#allocation2 + $0x18] sm:$0x1] %v299
      %v301 = vld [vmem:[#allocation2 + $0x24] sm:$0x1]
      %v302 = vsel %vm291, 0, %v301
      %303 = vst [vmem:[#allocation2 + $0x24] sm:$0x1] %v302
      %v304 = vld [vmem:[#allocation2 + $0x30] sm:$0x1]
      %v305 = vsel %vm291, 0, %v304
      %306 = vst [vmem:[#allocation2 + $0x30] sm:$0x1] %v305
      %v307 = vld [vmem:[#allocation2 + $0x3c] sm:$0x1]
      %v308 = vsel %vm291, 0, %v307
      %309 = vst [vmem:[#allocation2 + $0x3c] sm:$0x1] %v308
      %v310 = vld [vmem:[#allocation2 + $0x48] sm:$0x1]
      %v311 = vsel %vm291, 0, %v310
      %312 = vst [vmem:[#allocation2 + $0x48] sm:$0x1] %v311
      %v313 = vld [vmem:[#allocation2 + $0x54] sm:$0x1]
      %v314 = vsel %vm291, 0, %v313
      %315 = vst [vmem:[#allocation2 + $0x54] sm:$0x1] %v314
      %v316 = vld [vmem:[#allocation2 + $0x60] sm:$0x1]
      %v317 = vsel %vm291, 0, %v316
      %318 = vst [vmem:[#allocation2 + $0x60] sm:$0x1] %v317
      %v319 = vld [vmem:[#allocation2 + $0x6c] sm:$0x1]
      %v320 = vsel %vm291, 0, %v319
      %321 = vst [vmem:[#allocation2 + $0x6c] sm:$0x1] %v320
      %v322 = vld [vmem:[#allocation2 + $0x78] sm:$0x1]
      %v323 = vsel %vm291, 0, %v322
      %324 = vst [vmem:[#allocation2 + $0x78] sm:$0x1] %v323
      %v325 = vld [vmem:[#allocation2 + $0x84] sm:$0x1]
      %v326 = vsel %vm291, 0, %v325
      %327 = vst [vmem:[#allocation2 + $0x84] sm:$0x1] %v326
      %v328 = vld [vmem:[#allocation2 + $0x90] sm:$0x1]
      %v329 = vsel %vm291, 0, %v328
      %330 = vst [vmem:[#allocation2 + $0x90] sm:$0x1] %v329
      %v331 = vld [vmem:[#allocation2 + $0x9c] sm:$0x1]
      %v332 = vsel %vm291, 0, %v331
      %333 = vst [vmem:[#allocation2 + $0x9c] sm:$0x1] %v332
      %v334 = vld [vmem:[#allocation2 + $0xa8] sm:$0x1]
      %v335 = vsel %vm291, 0, %v334
      %336 = vst [vmem:[#allocation2 + $0xa8] sm:$0x1] %v335
      %v337 = vld [vmem:[#allocation2 + $0xb4] sm:$0x1]
      %v338 = vsel %vm291, 0, %v337
      %339 = vst [vmem:[#allocation2 + $0xb4] sm:$0x1] %v338
      %v340 = vld [vmem:[#allocation2 + $0xc0] sm:$0x1]
      %v341 = vsel %vm291, 0, %v340
      %342 = vst [vmem:[#allocation2 + $0xc0] sm:$0x1] %v341
      %v343 = vld [vmem:[#allocation2 + $0xcc] sm:$0x1]
      %v344 = vsel %vm291, 0, %v343
      %345 = vst [vmem:[#allocation2 + $0xcc] sm:$0x1] %v344
      %vm346 = vsmask.f32 7938
      %vm347 = vmand %vm289, %vm346
      %v348 = vld [vmem:[#allocation2 + $0x8] sm:$0x1]
      %v349 = vsel %vm347, 0, %v348
      %350 = vst [vmem:[#allocation2 + $0x8] sm:$0x1] %v349
      %v351 = vld [vmem:[#allocation2 + $0x14] sm:$0x1]
      %v352 = vsel %vm347, 0, %v351
      %353 = vst [vmem:[#allocation2 + $0x14] sm:$0x1] %v352
      %v354 = vld [vmem:[#allocation2 + $0x20] sm:$0x1]
      %v355 = vsel %vm347, 0, %v354
      %356 = vst [vmem:[#allocation2 + $0x20] sm:$0x1] %v355
      %v357 = vld [vmem:[#allocation2 + $0x2c] sm:$0x1]
      %v358 = vsel %vm347, 0, %v357
      %359 = vst [vmem:[#allocation2 + $0x2c] sm:$0x1] %v358
      %v360 = vld [vmem:[#allocation2 + $0x38] sm:$0x1]
      %v361 = vsel %vm347, 0, %v360
      %362 = vst [vmem:[#allocation2 + $0x38] sm:$0x1] %v361
      %v363 = vld [vmem:[#allocation2 + $0x44] sm:$0x1]
      %v364 = vsel %vm347, 0, %v363
      %365 = vst [vmem:[#allocation2 + $0x44] sm:$0x1] %v364
      %v366 = vld [vmem:[#allocation2 + $0x50] sm:$0x1]
      %v367 = vsel %vm347, 0, %v366
      %368 = vst [vmem:[#allocation2 + $0x50] sm:$0x1] %v367
      %v369 = vld [vmem:[#allocation2 + $0x5c] sm:$0x1]
      %v370 = vsel %vm347, 0, %v369
      %371 = vst [vmem:[#allocation2 + $0x5c] sm:$0x1] %v370
      %v372 = vld [vmem:[#allocation2 + $0x68] sm:$0x1]
      %v373 = vsel %vm347, 0, %v372
      %374 = vst [vmem:[#allocation2 + $0x68] sm:$0x1] %v373
      %v375 = vld [vmem:[#allocation2 + $0x74] sm:$0x1]
      %v376 = vsel %vm347, 0, %v375
      %377 = vst [vmem:[#allocation2 + $0x74] sm:$0x1] %v376
      %v378 = vld [vmem:[#allocation2 + $0x80] sm:$0x1]
      %v379 = vsel %vm347, 0, %v378
      %380 = vst [vmem:[#allocation2 + $0x80] sm:$0x1] %v379
      %v381 = vld [vmem:[#allocation2 + $0x8c] sm:$0x1]
      %v382 = vsel %vm347, 0, %v381
      %383 = vst [vmem:[#allocation2 + $0x8c] sm:$0x1] %v382
      %v384 = vld [vmem:[#allocation2 + $0x98] sm:$0x1]
      %v385 = vsel %vm347, 0, %v384
      %386 = vst [vmem:[#allocation2 + $0x98] sm:$0x1] %v385
      %v387 = vld [vmem:[#allocation2 + $0xa4] sm:$0x1]
      %v388 = vsel %vm347, 0, %v387
      %389 = vst [vmem:[#allocation2 + $0xa4] sm:$0x1] %v388
      %v390 = vld [vmem:[#allocation2 + $0xb0] sm:$0x1]
      %v391 = vsel %vm347, 0, %v390
      %392 = vst [vmem:[#allocation2 + $0xb0] sm:$0x1] %v391
      %v393 = vld [vmem:[#allocation2 + $0xbc] sm:$0x1]
      %v394 = vsel %vm347, 0, %v393
      %395 = vst [vmem:[#allocation2 + $0xbc] sm:$0x1] %v394
      %v396 = vld [vmem:[#allocation2 + $0xc8] sm:$0x1]
      %v397 = vsel %vm347, 0, %v396
      %398 = vst [vmem:[#allocation2 + $0xc8] sm:$0x1] %v397
      %v399 = vld [vmem:[#allocation2 + $0xd4] sm:$0x1]
      %v400 = vsel %vm347, 0, %v399
      %401 = vst [vmem:[#allocation2 + $0xd4] sm:$0x1] %v400
      %v402 = vld [vmem:[%s273] sm:$0xf]
      %v403 = vld [vmem:[%s273 + $0x4] sm:$0xf]
      %v404 = vld [vmem:[%s273 + $0x8] sm:$0xf]
      %v405 = vld [vmem:[%s273 + $0xc] sm:$0xf]
      %v406 = vld [vmem:[%s273 + $0x10] sm:$0xf]
      %v407 = vld [vmem:[%s273 + $0x14] sm:$0xf]
      %v408 = vld [vmem:[%s273 + $0x18] sm:$0xf]
      %v409 = vld [vmem:[%s273 + $0x1c] sm:$0xf]
      %v410 = vld [vmem:[%s273 + $0x20] sm:$0xf]
      %v411 = vld [vmem:[%s273 + $0x24] sm:$0xf]
      %v412 = vld [vmem:[%s273 + $0x28] sm:$0xf]
      %v413 = vld [vmem:[%s273 + $0x2c] sm:$0xf]
      %v414 = vld [vmem:[%s273 + $0x30] sm:$0xf]
      %v415 = vld [vmem:[%s273 + $0x34] sm:$0xf]
      %v416 = vld [vmem:[%s273 + $0x38] sm:$0xf]
      %v417 = vld [vmem:[%s273 + $0x3c] sm:$0xf]
      %v418 = vld [vmem:[%s273 + $0x40] sm:$0xf]
      %v419 = vld [vmem:[%s273 + $0x44] sm:$0xf]
      %v420 = vld [vmem:[%s273 + $0x48] sm:$0xf]
      %v421 = vld [vmem:[%s273 + $0x4c] sm:$0xf]
      %v422 = vld [vmem:[%s273 + $0x50] sm:$0xf]
      %v423 = vld [vmem:[%s273 + $0x54] sm:$0xf]
      %v424 = vld [vmem:[%s273 + $0x58] sm:$0xf]
      %v425 = vld [vmem:[%s273 + $0x5c] sm:$0xf]
      %v426 = vld [vmem:[%s273 + $0x60] sm:$0xf]
      %v427 = vld [vmem:[%s273 + $0x64] sm:$0xf]
      %v428 = vld [vmem:[%s273 + $0x68] sm:$0xf]
      %v429 = vld [vmem:[%s273 + $0x6c] sm:$0xf]
      %v430 = vld [vmem:[%s273 + $0x70] sm:$0xf]
      %v431 = vld [vmem:[%s273 + $0x74] sm:$0xf]
      %v432 = vld [vmem:[%s273 + $0x78] sm:$0xf]
      %v433 = vld [vmem:[%s273 + $0x7c] sm:$0xf]
      %vm434 = vsmask.f32 4368
      %vm435 = vmor %vm290, %vm434
      %v437 = vshrl.u32 %v402, 16
      %v439 = vrot.slane %v437, 7
      %v440 = vshll.u32 %v402, 16
      %v442 = vor.u32 %v439, %v440
      %v443 = vrot.slane %v439, 4
      %v445 = vshrl.u32 %v403, 16
      %v447 = vrot.slane %v445, 7
      %v448 = vshll.u32 %v403, 16
      %v450 = vor.u32 %v447, %v448
      %v451 = vsel %vm435, %v443, %v450
      %v452 = vrot.slane %v447, 4
      %v454 = vshrl.u32 %v404, 16
      %v456 = vrot.slane %v454, 7
      %v457 = vshll.u32 %v404, 16
      %v459 = vor.u32 %v456, %v457
      %v460 = vrot.slane %v456, 4
      %v462 = vshrl.u32 %v405, 16
      %v464 = vrot.slane %v462, 7
      %v465 = vshll.u32 %v405, 16
      %v467 = vor.u32 %v464, %v465
      %v468 = vsel %vm435, %v460, %v467
      %v469 = vrot.slane %v464, 4
      %v471 = vshrl.u32 %v406, 16
      %v473 = vrot.slane %v471, 7
      %v474 = vshll.u32 %v406, 16
      %v476 = vor.u32 %v473, %v474
      %v477 = vrot.slane %v473, 4
      %v479 = vshrl.u32 %v407, 16
      %v481 = vrot.slane %v479, 7
      %v482 = vshll.u32 %v407, 16
      %v484 = vor.u32 %v481, %v482
      %v485 = vsel %vm435, %v477, %v484
      %v486 = vrot.slane %v481, 4
      %v488 = vshrl.u32 %v408, 16
      %v490 = vrot.slane %v488, 7
      %v491 = vshll.u32 %v408, 16
      %v493 = vor.u32 %v490, %v491
      %v494 = vrot.slane %v490, 4
      %v496 = vshrl.u32 %v409, 16
      %v498 = vrot.slane %v496, 7
      %v499 = vshll.u32 %v409, 16
      %v501 = vor.u32 %v498, %v499
      %v502 = vsel %vm435, %v494, %v501
      %v503 = vrot.slane %v498, 4
      %v505 = vshrl.u32 %v410, 16
      %v507 = vrot.slane %v505, 7
      %v508 = vshll.u32 %v410, 16
      %v510 = vor.u32 %v507, %v508
      %v511 = vrot.slane %v507, 4
      %v513 = vshrl.u32 %v411, 16
      %v515 = vrot.slane %v513, 7
      %v516 = vshll.u32 %v411, 16
      %v518 = vor.u32 %v515, %v516
      %v519 = vsel %vm435, %v511, %v518
      %v520 = vrot.slane %v515, 4
      %v522 = vshrl.u32 %v412, 16
      %v524 = vrot.slane %v522, 7
      %v525 = vshll.u32 %v412, 16
      %v527 = vor.u32 %v524, %v525
      %v528 = vrot.slane %v524, 4
      %v530 = vshrl.u32 %v413, 16
      %v532 = vrot.slane %v530, 7
      %v533 = vshll.u32 %v413, 16
      %v535 = vor.u32 %v532, %v533
      %v536 = vsel %vm435, %v528, %v535
      %v537 = vrot.slane %v532, 4
      %v539 = vshrl.u32 %v414, 16
      %v541 = vrot.slane %v539, 7
      %v542 = vshll.u32 %v414, 16
      %v544 = vor.u32 %v541, %v542
      %v545 = vrot.slane %v541, 4
      %v547 = vshrl.u32 %v415, 16
      %v549 = vrot.slane %v547, 7
      %v550 = vshll.u32 %v415, 16
      %v552 = vor.u32 %v549, %v550
      %v553 = vsel %vm435, %v545, %v552
      %v554 = vrot.slane %v549, 4
      %v556 = vshrl.u32 %v416, 16
      %v558 = vrot.slane %v556, 7
      %v559 = vshll.u32 %v416, 16
      %v561 = vor.u32 %v558, %v559
      %v562 = vrot.slane %v558, 4
      %v564 = vshrl.u32 %v417, 16
      %v566 = vrot.slane %v564, 7
      %v567 = vshll.u32 %v417, 16
      %v569 = vor.u32 %v566, %v567
      %v570 = vsel %vm435, %v562, %v569
      %v571 = vrot.slane %v566, 4
      %v573 = vshrl.u32 %v418, 16
      %v575 = vrot.slane %v573, 7
      %v576 = vshll.u32 %v418, 16
      %v578 = vor.u32 %v575, %v576
      %v579 = vrot.slane %v575, 4
      %v581 = vshrl.u32 %v419, 16
      %v583 = vrot.slane %v581, 7
      %v584 = vshll.u32 %v419, 16
      %v586 = vor.u32 %v583, %v584
      %v587 = vsel %vm435, %v579, %v586
      %v588 = vrot.slane %v583, 4
      %v590 = vshrl.u32 %v420, 16
      %v592 = vrot.slane %v590, 7
      %v593 = vshll.u32 %v420, 16
      %v595 = vor.u32 %v592, %v593
      %v596 = vrot.slane %v592, 4
      %v598 = vshrl.u32 %v421, 16
      %v600 = vrot.slane %v598, 7
      %v601 = vshll.u32 %v421, 16
      %v603 = vor.u32 %v600, %v601
      %v604 = vsel %vm435, %v596, %v603
      %v605 = vrot.slane %v600, 4
      %v607 = vshrl.u32 %v422, 16
      %v609 = vrot.slane %v607, 7
      %v610 = vshll.u32 %v422, 16
      %v612 = vor.u32 %v609, %v610
      %v613 = vrot.slane %v609, 4
      %v615 = vshrl.u32 %v423, 16
      %v617 = vrot.slane %v615, 7
      %v618 = vshll.u32 %v423, 16
      %v620 = vor.u32 %v617, %v618
      %v621 = vsel %vm435, %v613, %v620
      %v622 = vrot.slane %v617, 4
      %v624 = vshrl.u32 %v424, 16
      %v626 = vrot.slane %v624, 7
      %v627 = vshll.u32 %v424, 16
      %v629 = vor.u32 %v626, %v627
      %v630 = vrot.slane %v626, 4
      %v632 = vshrl.u32 %v425, 16
      %v634 = vrot.slane %v632, 7
      %v635 = vshll.u32 %v425, 16
      %v637 = vor.u32 %v634, %v635
      %v638 = vsel %vm435, %v630, %v637
      %v639 = vrot.slane %v634, 4
      %v641 = vshrl.u32 %v426, 16
      %v643 = vrot.slane %v641, 7
      %v644 = vshll.u32 %v426, 16
      %v646 = vor.u32 %v643, %v644
      %v647 = vrot.slane %v643, 4
      %v649 = vshrl.u32 %v427, 16
      %v651 = vrot.slane %v649, 7
      %v652 = vshll.u32 %v427, 16
      %v654 = vor.u32 %v651, %v652
      %v655 = vsel %vm435, %v647, %v654
      %v656 = vrot.slane %v651, 4
      %v658 = vshrl.u32 %v428, 16
      %v660 = vrot.slane %v658, 7
      %v661 = vshll.u32 %v428, 16
      %v663 = vor.u32 %v660, %v661
      %v664 = vrot.slane %v660, 4
      %v666 = vshrl.u32 %v429, 16
      %v668 = vrot.slane %v666, 7
      %v669 = vshll.u32 %v429, 16
      %v671 = vor.u32 %v668, %v669
      %v672 = vsel %vm435, %v664, %v671
      %v673 = vrot.slane %v668, 4
      %v675 = vshrl.u32 %v430, 16
      %v677 = vrot.slane %v675, 7
      %v678 = vshll.u32 %v430, 16
      %v680 = vor.u32 %v677, %v678
      %v681 = vrot.slane %v677, 4
      %v683 = vshrl.u32 %v431, 16
      %v685 = vrot.slane %v683, 7
      %v686 = vshll.u32 %v431, 16
      %v688 = vor.u32 %v685, %v686
      %v689 = vsel %vm435, %v681, %v688
      %v690 = vrot.slane %v685, 4
      %v692 = vshrl.u32 %v432, 16
      %v694 = vrot.slane %v692, 7
      %v695 = vshll.u32 %v432, 16
      %v697 = vor.u32 %v694, %v695
      %v698 = vrot.slane %v694, 4
      %v700 = vshrl.u32 %v433, 16
      %v702 = vrot.slane %v700, 7
      %v703 = vshll.u32 %v433, 16
      %v705 = vor.u32 %v702, %v703
      %v706 = vsel %vm435, %v698, %v705
      %v707 = vrot.slane %v702, 4
      %s756 = scalar_lea.vmem [#allocation2], 12
      %vm757 = vcmask 27648
      %vm758 = vmand %vm757, %vm346
      %v759 = vld [vmem:[%s756] sm:$0xf]
      %v760 = vsel %vm758, %v442, %v759
      %761 = vst [vmem:[%s756] sm:$0xf] %v760
      %762 = vst.msk [vmem:[%s756 + $0x4] sm:$0xf] %vm280, %v451
      %v763 = vld [vmem:[%s756 + $0x8] sm:$0x1]
      %v764 = vsel %vm291, %v452, %v763
      %765 = vst [vmem:[%s756 + $0x8] sm:$0x1] %v764
      %v766 = vld [vmem:[%s756 + $0xc] sm:$0xf]
      %v767 = vsel %vm758, %v459, %v766
      %768 = vst [vmem:[%s756 + $0xc] sm:$0xf] %v767
      %769 = vst.msk [vmem:[%s756 + $0x10] sm:$0xf] %vm280, %v468
      %v770 = vld [vmem:[%s756 + $0x14] sm:$0x1]
      %v771 = vsel %vm291, %v469, %v770
      %772 = vst [vmem:[%s756 + $0x14] sm:$0x1] %v771
      %v773 = vld [vmem:[%s756 + $0x18] sm:$0xf]
      %v774 = vsel %vm758, %v476, %v773
      %775 = vst [vmem:[%s756 + $0x18] sm:$0xf] %v774
      %776 = vst.msk [vmem:[%s756 + $0x1c] sm:$0xf] %vm280, %v485
      %v777 = vld [vmem:[%s756 + $0x20] sm:$0x1]
      %v778 = vsel %vm291, %v486, %v777
      %779 = vst [vmem:[%s756 + $0x20] sm:$0x1] %v778
      %v780 = vld [vmem:[%s756 + $0x24] sm:$0xf]
      %v781 = vsel %vm758, %v493, %v780
      %782 = vst [vmem:[%s756 + $0x24] sm:$0xf] %v781
      %783 = vst.msk [vmem:[%s756 + $0x28] sm:$0xf] %vm280, %v502
      %v784 = vld [vmem:[%s756 + $0x2c] sm:$0x1]
      %v785 = vsel %vm291, %v503, %v784
      %786 = vst [vmem:[%s756 + $0x2c] sm:$0x1] %v785
      %v787 = vld [vmem:[%s756 + $0x30] sm:$0xf]
      %v788 = vsel %vm758, %v510, %v787
      %789 = vst [vmem:[%s756 + $0x30] sm:$0xf] %v788
      %790 = vst.msk [vmem:[%s756 + $0x34] sm:$0xf] %vm280, %v519
      %v791 = vld [vmem:[%s756 + $0x38] sm:$0x1]
      %v792 = vsel %vm291, %v520, %v791
      %793 = vst [vmem:[%s756 + $0x38] sm:$0x1] %v792
      %v794 = vld [vmem:[%s756 + $0x3c] sm:$0xf]
      %v795 = vsel %vm758, %v527, %v794
      %796 = vst [vmem:[%s756 + $0x3c] sm:$0xf] %v795
      %797 = vst.msk [vmem:[%s756 + $0x40] sm:$0xf] %vm280, %v536
      %v798 = vld [vmem:[%s756 + $0x44] sm:$0x1]
      %v799 = vsel %vm291, %v537, %v798
      %800 = vst [vmem:[%s756 + $0x44] sm:$0x1] %v799
      %v801 = vld [vmem:[%s756 + $0x48] sm:$0xf]
      %v802 = vsel %vm758, %v544, %v801
      %803 = vst [vmem:[%s756 + $0x48] sm:$0xf] %v802
      %804 = vst.msk [vmem:[%s756 + $0x4c] sm:$0xf] %vm280, %v553
      %v805 = vld [vmem:[%s756 + $0x50] sm:$0x1]
      %v806 = vsel %vm291, %v554, %v805
      %807 = vst [vmem:[%s756 + $0x50] sm:$0x1] %v806
      %v808 = vld [vmem:[%s756 + $0x54] sm:$0xf]
      %v809 = vsel %vm758, %v561, %v808
      %810 = vst [vmem:[%s756 + $0x54] sm:$0xf] %v809
      %811 = vst.msk [vmem:[%s756 + $0x58] sm:$0xf] %vm280, %v570
      %v812 = vld [vmem:[%s756 + $0x5c] sm:$0x1]
      %v813 = vsel %vm291, %v571, %v812
      %814 = vst [vmem:[%s756 + $0x5c] sm:$0x1] %v813
      %v815 = vld [vmem:[%s756 + $0x60] sm:$0xf]
      %v816 = vsel %vm758, %v578, %v815
      %817 = vst [vmem:[%s756 + $0x60] sm:$0xf] %v816
      %818 = vst.msk [vmem:[%s756 + $0x64] sm:$0xf] %vm280, %v587
      %v819 = vld [vmem:[%s756 + $0x68] sm:$0x1]
      %v820 = vsel %vm291, %v588, %v819
      %821 = vst [vmem:[%s756 + $0x68] sm:$0x1] %v820
      %v822 = vld [vmem:[%s756 + $0x6c] sm:$0xf]
      %v823 = vsel %vm758, %v595, %v822
      %824 = vst [vmem:[%s756 + $0x6c] sm:$0xf] %v823
      %825 = vst.msk [vmem:[%s756 + $0x70] sm:$0xf] %vm280, %v604
      %v826 = vld [vmem:[%s756 + $0x74] sm:$0x1]
      %v827 = vsel %vm291, %v605, %v826
      %828 = vst [vmem:[%s756 + $0x74] sm:$0x1] %v827
      %v829 = vld [vmem:[%s756 + $0x78] sm:$0xf]
      %v830 = vsel %vm758, %v612, %v829
      %831 = vst [vmem:[%s756 + $0x78] sm:$0xf] %v830
      %832 = vst.msk [vmem:[%s756 + $0x7c] sm:$0xf] %vm280, %v621
      %v833 = vld [vmem:[%s756 + $0x80] sm:$0x1]
      %v834 = vsel %vm291, %v622, %v833
      %835 = vst [vmem:[%s756 + $0x80] sm:$0x1] %v834
      %v836 = vld [vmem:[%s756 + $0x84] sm:$0xf]
      %v837 = vsel %vm758, %v629, %v836
      %838 = vst [vmem:[%s756 + $0x84] sm:$0xf] %v837
      %839 = vst.msk [vmem:[%s756 + $0x88] sm:$0xf] %vm280, %v638
      %v840 = vld [vmem:[%s756 + $0x8c] sm:$0x1]
      %v841 = vsel %vm291, %v639, %v840
      %842 = vst [vmem:[%s756 + $0x8c] sm:$0x1] %v841
      %v843 = vld [vmem:[%s756 + $0x90] sm:$0xf]
      %v844 = vsel %vm758, %v646, %v843
      %845 = vst [vmem:[%s756 + $0x90] sm:$0xf] %v844
      %846 = vst.msk [vmem:[%s756 + $0x94] sm:$0xf] %vm280, %v655
      %v847 = vld [vmem:[%s756 + $0x98] sm:$0x1]
      %v848 = vsel %vm291, %v656, %v847
      %849 = vst [vmem:[%s756 + $0x98] sm:$0x1] %v848
      %v850 = vld [vmem:[%s756 + $0x9c] sm:$0xf]
      %v851 = vsel %vm758, %v663, %v850
      %852 = vst [vmem:[%s756 + $0x9c] sm:$0xf] %v851
      %853 = vst.msk [vmem:[%s756 + $0xa0] sm:$0xf] %vm280, %v672
      %v854 = vld [vmem:[%s756 + $0xa4] sm:$0x1]
      %v855 = vsel %vm291, %v673, %v854
      %856 = vst [vmem:[%s756 + $0xa4] sm:$0x1] %v855
      %v857 = vld [vmem:[%s756 + $0xa8] sm:$0xf]
      %v858 = vsel %vm758, %v680, %v857
      %859 = vst [vmem:[%s756 + $0xa8] sm:$0xf] %v858
      %860 = vst.msk [vmem:[%s756 + $0xac] sm:$0xf] %vm280, %v689
      %v861 = vld [vmem:[%s756 + $0xb0] sm:$0x1]
      %v862 = vsel %vm291, %v690, %v861
      %863 = vst [vmem:[%s756 + $0xb0] sm:$0x1] %v862
      %v864 = vld [vmem:[%s756 + $0xb4] sm:$0xf]
      %v865 = vsel %vm758, %v697, %v864
      %866 = vst [vmem:[%s756 + $0xb4] sm:$0xf] %v865
      %867 = vst.msk [vmem:[%s756 + $0xb8] sm:$0xf] %vm280, %v706
      %v868 = vld [vmem:[%s756 + $0xbc] sm:$0x1]
      %v869 = vsel %vm291, %v707, %v868
      %870 = vst [vmem:[%s756 + $0xbc] sm:$0x1] %v869
      %vm871 = vcmask 57344
      %872 = vst.msk [vmem:[#allocation3] sm:$0x1] %vm871, 0.0
      %v873 = vld [vmem:[%s2] sm:$0x1]
      %v874 = vld [vmem:[%s3] sm:$0x1]
      %v875 = vld [vmem:[#allocation2] sm:$0xf]
      %v876 = vld [vmem:[#allocation2 + $0x4] sm:$0xf]
      %v877 = vld [vmem:[#allocation2 + $0xc] sm:$0xf]
      %v878 = vld [vmem:[#allocation2 + $0x10] sm:$0xf]
      %v879 = vld [vmem:[#allocation2 + $0x18] sm:$0xf]
      %v880 = vld [vmem:[#allocation2 + $0x1c] sm:$0xf]
      %v881 = vld [vmem:[#allocation2 + $0x24] sm:$0xf]
      %v882 = vld [vmem:[#allocation2 + $0x28] sm:$0xf]
      %v883 = vld [vmem:[#allocation2 + $0x30] sm:$0xf]
      %v884 = vld [vmem:[#allocation2 + $0x34] sm:$0xf]
      %v885 = vld [vmem:[#allocation2 + $0x3c] sm:$0xf]
      %v886 = vld [vmem:[#allocation2 + $0x40] sm:$0xf]
      %v887 = vld [vmem:[#allocation2 + $0x48] sm:$0xf]
      %v888 = vld [vmem:[#allocation2 + $0x4c] sm:$0xf]
      %v889 = vld [vmem:[#allocation2 + $0x54] sm:$0xf]
      %v890 = vld [vmem:[#allocation2 + $0x58] sm:$0xf]
      %v891 = vld [vmem:[#allocation2 + $0x60] sm:$0xf]
      %v892 = vld [vmem:[#allocation2 + $0x64] sm:$0xf]
      %v893 = vld [vmem:[#allocation2 + $0x6c] sm:$0xf]
      %v894 = vld [vmem:[#allocation2 + $0x70] sm:$0xf]
      %v895 = vld [vmem:[#allocation2 + $0x78] sm:$0xf]
      %v896 = vld [vmem:[#allocation2 + $0x7c] sm:$0xf]
      %v897 = vld [vmem:[#allocation2 + $0x84] sm:$0xf]
      %v898 = vld [vmem:[#allocation2 + $0x88] sm:$0xf]
      %v899 = vld [vmem:[#allocation2 + $0x90] sm:$0xf]
      %v900 = vld [vmem:[#allocation2 + $0x94] sm:$0xf]
      %v901 = vld [vmem:[#allocation2 + $0x9c] sm:$0xf]
      %v902 = vld [vmem:[#allocation2 + $0xa0] sm:$0xf]
      %v903 = vld [vmem:[#allocation2 + $0xa8] sm:$0xf]
      %v904 = vld [vmem:[#allocation2 + $0xac] sm:$0xf]
      %v905 = vld [vmem:[#allocation2 + $0xb4] sm:$0xf]
      %v906 = vld [vmem:[#allocation2 + $0xb8] sm:$0xf]
      %v907 = vld [vmem:[%s1] sm:$0x3]
      %v908 = vld [vmem:[#allocation2 + $0x8] sm:$0x1]
      %v909 = vld [vmem:[#allocation2 + $0x14] sm:$0x1]
      %v910 = vld [vmem:[#allocation2 + $0x20] sm:$0x1]
      %v911 = vld [vmem:[#allocation2 + $0x2c] sm:$0x1]
      %v912 = vld [vmem:[#allocation2 + $0x38] sm:$0x1]
      %v913 = vld [vmem:[#allocation2 + $0x44] sm:$0x1]
      %v914 = vld [vmem:[#allocation2 + $0x50] sm:$0x1]
      %v915 = vld [vmem:[#allocation2 + $0x5c] sm:$0x1]
      %v916 = vld [vmem:[#allocation2 + $0x68] sm:$0x1]
      %v917 = vld [vmem:[#allocation2 + $0x74] sm:$0x1]
      %v918 = vld [vmem:[#allocation2 + $0x80] sm:$0x1]
      %v919 = vld [vmem:[#allocation2 + $0x8c] sm:$0x1]
      %v920 = vld [vmem:[#allocation2 + $0x98] sm:$0x1]
      %v921 = vld [vmem:[#allocation2 + $0xa4] sm:$0x1]
      %v922 = vld [vmem:[#allocation2 + $0xb0] sm:$0x1]
      %v923 = vld [vmem:[#allocation2 + $0xbc] sm:$0x1]
      %vm924 = vsmask.f32 3328
      %vm925 = vsmask.f32 7440
      %vm926 = vmor %vm924, %vm925
      %v928 = vshrl.u32 %v875, 16
      %v930 = vrot.slane %v928, 4
      %v931 = vshll.u32 %v875, 16
      %v933 = vrot.slane %v931, 5
      %v934 = vor.u32 %v930, %v933
      %v935 = vrot.slane %v934, 4
      %v937 = vshll.u32 %v876, 16
      %v939 = vrot.slane %v937, 5
      %v940 = vsel %vm926, %v935, %v939
      %v941 = vshrl.u32 %v876, 16
      %v943 = vrot.slane %v941, 4
      %v944 = vor.u32 %v943, %v939
      %v945 = vrot.slane %v944, 4
      %v947 = vshll.u32 %v908, 16
      %v949 = vrot.slane %v947, 5
      %v950 = vsel %vm926, %v945, %v949
      %v952 = vshrl.u32 %v877, 16
      %v954 = vrot.slane %v952, 4
      %v955 = vshll.u32 %v877, 16
      %v957 = vrot.slane %v955, 5
      %v958 = vor.u32 %v954, %v957
      %v959 = vrot.slane %v958, 4
      %v961 = vshll.u32 %v878, 16
      %v963 = vrot.slane %v961, 5
      %v964 = vsel %vm926, %v959, %v963
      %v965 = vshrl.u32 %v878, 16
      %v967 = vrot.slane %v965, 4
      %v968 = vor.u32 %v967, %v963
      %v969 = vrot.slane %v968, 4
      %v971 = vshll.u32 %v909, 16
      %v973 = vrot.slane %v971, 5
      %v974 = vsel %vm926, %v969, %v973
      %v976 = vshrl.u32 %v879, 16
      %v978 = vrot.slane %v976, 4
      %v979 = vshll.u32 %v879, 16
      %v981 = vrot.slane %v979, 5
      %v982 = vor.u32 %v978, %v981
      %v983 = vrot.slane %v982, 4
      %v985 = vshll.u32 %v880, 16
      %v987 = vrot.slane %v985, 5
      %v988 = vsel %vm926, %v983, %v987
      %v989 = vshrl.u32 %v880, 16
      %v991 = vrot.slane %v989, 4
      %v992 = vor.u32 %v991, %v987
      %v993 = vrot.slane %v992, 4
      %v995 = vshll.u32 %v910, 16
      %v997 = vrot.slane %v995, 5
      %v998 = vsel %vm926, %v993, %v997
      %v1000 = vshrl.u32 %v881, 16
      %v1002 = vrot.slane %v1000, 4
      %v1003 = vshll.u32 %v881, 16
      %v1005 = vrot.slane %v1003, 5
      %v1006 = vor.u32 %v1002, %v1005
      %v1007 = vrot.slane %v1006, 4
      %v1009 = vshll.u32 %v882, 16
      %v1011 = vrot.slane %v1009, 5
      %v1012 = vsel %vm926, %v1007, %v1011
      %v1013 = vshrl.u32 %v882, 16
      %v1015 = vrot.slane %v1013, 4
      %v1016 = vor.u32 %v1015, %v1011
      %v1017 = vrot.slane %v1016, 4
      %v1019 = vshll.u32 %v911, 16
      %v1021 = vrot.slane %v1019, 5
      %v1022 = vsel %vm926, %v1017, %v1021
      %v1024 = vshrl.u32 %v883, 16
      %v1026 = vrot.slane %v1024, 4
      %v1027 = vshll.u32 %v883, 16
      %v1029 = vrot.slane %v1027, 5
      %v1030 = vor.u32 %v1026, %v1029
      %v1031 = vrot.slane %v1030, 4
      %v1033 = vshll.u32 %v884, 16
      %v1035 = vrot.slane %v1033, 5
      %v1036 = vsel %vm926, %v1031, %v1035
      %v1037 = vshrl.u32 %v884, 16
      %v1039 = vrot.slane %v1037, 4
      %v1040 = vor.u32 %v1039, %v1035
      %v1041 = vrot.slane %v1040, 4
      %v1043 = vshll.u32 %v912, 16
      %v1045 = vrot.slane %v1043, 5
      %v1046 = vsel %vm926, %v1041, %v1045
      %v1048 = vshrl.u32 %v885, 16
      %v1050 = vrot.slane %v1048, 4
      %v1051 = vshll.u32 %v885, 16
      %v1053 = vrot.slane %v1051, 5
      %v1054 = vor.u32 %v1050, %v1053
      %v1055 = vrot.slane %v1054, 4
      %v1057 = vshll.u32 %v886, 16
      %v1059 = vrot.slane %v1057, 5
      %v1060 = vsel %vm926, %v1055, %v1059
      %v1061 = vshrl.u32 %v886, 16
      %v1063 = vrot.slane %v1061, 4
      %v1064 = vor.u32 %v1063, %v1059
      %v1065 = vrot.slane %v1064, 4
      %v1067 = vshll.u32 %v913, 16
      %v1069 = vrot.slane %v1067, 5
      %v1070 = vsel %vm926, %v1065, %v1069
      %v1072 = vshrl.u32 %v887, 16
      %v1074 = vrot.slane %v1072, 4
      %v1075 = vshll.u32 %v887, 16
      %v1077 = vrot.slane %v1075, 5
      %v1078 = vor.u32 %v1074, %v1077
      %v1079 = vrot.slane %v1078, 4
      %v1081 = vshll.u32 %v888, 16
      %v1083 = vrot.slane %v1081, 5
      %v1084 = vsel %vm926, %v1079, %v1083
      %v1085 = vshrl.u32 %v888, 16
      %v1087 = vrot.slane %v1085, 4
      %v1088 = vor.u32 %v1087, %v1083
      %v1089 = vrot.slane %v1088, 4
      %v1091 = vshll.u32 %v914, 16
      %v1093 = vrot.slane %v1091, 5
      %v1094 = vsel %vm926, %v1089, %v1093
      %v1096 = vshrl.u32 %v889, 16
      %v1098 = vrot.slane %v1096, 4
      %v1099 = vshll.u32 %v889, 16
      %v1101 = vrot.slane %v1099, 5
      %v1102 = vor.u32 %v1098, %v1101
      %v1103 = vrot.slane %v1102, 4
      %v1105 = vshll.u32 %v890, 16
      %v1107 = vrot.slane %v1105, 5
      %v1108 = vsel %vm926, %v1103, %v1107
      %v1109 = vshrl.u32 %v890, 16
      %v1111 = vrot.slane %v1109, 4
      %v1112 = vor.u32 %v1111, %v1107
      %v1113 = vrot.slane %v1112, 4
      %v1115 = vshll.u32 %v915, 16
      %v1117 = vrot.slane %v1115, 5
      %v1118 = vsel %vm926, %v1113, %v1117
      %v1120 = vshrl.u32 %v891, 16
      %v1122 = vrot.slane %v1120, 4
      %v1123 = vshll.u32 %v891, 16
      %v1125 = vrot.slane %v1123, 5
      %v1126 = vor.u32 %v1122, %v1125
      %v1127 = vrot.slane %v1126, 4
      %v1129 = vshll.u32 %v892, 16
      %v1131 = vrot.slane %v1129, 5
      %v1132 = vsel %vm926, %v1127, %v1131
      %v1133 = vshrl.u32 %v892, 16
      %v1135 = vrot.slane %v1133, 4
      %v1136 = vor.u32 %v1135, %v1131
      %v1137 = vrot.slane %v1136, 4
      %v1139 = vshll.u32 %v916, 16
      %v1141 = vrot.slane %v1139, 5
      %v1142 = vsel %vm926, %v1137, %v1141
      %v1144 = vshrl.u32 %v893, 16
      %v1146 = vrot.slane %v1144, 4
      %v1147 = vshll.u32 %v893, 16
      %v1149 = vrot.slane %v1147, 5
      %v1150 = vor.u32 %v1146, %v1149
      %v1151 = vrot.slane %v1150, 4
      %v1153 = vshll.u32 %v894, 16
      %v1155 = vrot.slane %v1153, 5
      %v1156 = vsel %vm926, %v1151, %v1155
      %v1157 = vshrl.u32 %v894, 16
      %v1159 = vrot.slane %v1157, 4
      %v1160 = vor.u32 %v1159, %v1155
      %v1161 = vrot.slane %v1160, 4
      %v1163 = vshll.u32 %v917, 16
      %v1165 = vrot.slane %v1163, 5
      %v1166 = vsel %vm926, %v1161, %v1165
      %v1168 = vshrl.u32 %v895, 16
      %v1170 = vrot.slane %v1168, 4
      %v1171 = vshll.u32 %v895, 16
      %v1173 = vrot.slane %v1171, 5
      %v1174 = vor.u32 %v1170, %v1173
      %v1175 = vrot.slane %v1174, 4
      %v1177 = vshll.u32 %v896, 16
      %v1179 = vrot.slane %v1177, 5
      %v1180 = vsel %vm926, %v1175, %v1179
      %v1181 = vshrl.u32 %v896, 16
      %v1183 = vrot.slane %v1181, 4
      %v1184 = vor.u32 %v1183, %v1179
      %v1185 = vrot.slane %v1184, 4
      %v1187 = vshll.u32 %v918, 16
      %v1189 = vrot.slane %v1187, 5
      %v1190 = vsel %vm926, %v1185, %v1189
      %v1192 = vshrl.u32 %v897, 16
      %v1194 = vrot.slane %v1192, 4
      %v1195 = vshll.u32 %v897, 16
      %v1197 = vrot.slane %v1195, 5
      %v1198 = vor.u32 %v1194, %v1197
      %v1199 = vrot.slane %v1198, 4
      %v1201 = vshll.u32 %v898, 16
      %v1203 = vrot.slane %v1201, 5
      %v1204 = vsel %vm926, %v1199, %v1203
      %v1205 = vshrl.u32 %v898, 16
      %v1207 = vrot.slane %v1205, 4
      %v1208 = vor.u32 %v1207, %v1203
      %v1209 = vrot.slane %v1208, 4
      %v1211 = vshll.u32 %v919, 16
      %v1213 = vrot.slane %v1211, 5
      %v1214 = vsel %vm926, %v1209, %v1213
      %v1216 = vshrl.u32 %v899, 16
      %v1218 = vrot.slane %v1216, 4
      %v1219 = vshll.u32 %v899, 16
      %v1221 = vrot.slane %v1219, 5
      %v1222 = vor.u32 %v1218, %v1221
      %v1223 = vrot.slane %v1222, 4
      %v1225 = vshll.u32 %v900, 16
      %v1227 = vrot.slane %v1225, 5
      %v1228 = vsel %vm926, %v1223, %v1227
      %v1229 = vshrl.u32 %v900, 16
      %v1231 = vrot.slane %v1229, 4
      %v1232 = vor.u32 %v1231, %v1227
      %v1233 = vrot.slane %v1232, 4
      %v1235 = vshll.u32 %v920, 16
      %v1237 = vrot.slane %v1235, 5
      %v1238 = vsel %vm926, %v1233, %v1237
      %v1240 = vshrl.u32 %v901, 16
      %v1242 = vrot.slane %v1240, 4
      %v1243 = vshll.u32 %v901, 16
      %v1245 = vrot.slane %v1243, 5
      %v1246 = vor.u32 %v1242, %v1245
      %v1247 = vrot.slane %v1246, 4
      %v1249 = vshll.u32 %v902, 16
      %v1251 = vrot.slane %v1249, 5
      %v1252 = vsel %vm926, %v1247, %v1251
      %v1253 = vshrl.u32 %v902, 16
      %v1255 = vrot.slane %v1253, 4
      %v1256 = vor.u32 %v1255, %v1251
      %v1257 = vrot.slane %v1256, 4
      %v1259 = vshll.u32 %v921, 16
      %v1261 = vrot.slane %v1259, 5
      %v1262 = vsel %vm926, %v1257, %v1261
      %v1264 = vshrl.u32 %v903, 16
      %v1266 = vrot.slane %v1264, 4
      %v1267 = vshll.u32 %v903, 16
      %v1269 = vrot.slane %v1267, 5
      %v1270 = vor.u32 %v1266, %v1269
      %v1271 = vrot.slane %v1270, 4
      %v1273 = vshll.u32 %v904, 16
      %v1275 = vrot.slane %v1273, 5
      %v1276 = vsel %vm926, %v1271, %v1275
      %v1277 = vshrl.u32 %v904, 16
      %v1279 = vrot.slane %v1277, 4
      %v1280 = vor.u32 %v1279, %v1275
      %v1281 = vrot.slane %v1280, 4
      %v1283 = vshll.u32 %v922, 16
      %v1285 = vrot.slane %v1283, 5
      %v1286 = vsel %vm926, %v1281, %v1285
      %v1288 = vshrl.u32 %v905, 16
      %v1290 = vrot.slane %v1288, 4
      %v1291 = vshll.u32 %v905, 16
      %v1293 = vrot.slane %v1291, 5
      %v1294 = vor.u32 %v1290, %v1293
      %v1295 = vrot.slane %v1294, 4
      %v1297 = vshll.u32 %v906, 16
      %v1299 = vrot.slane %v1297, 5
      %v1300 = vsel %vm926, %v1295, %v1299
      %v1301 = vshrl.u32 %v906, 16
      %v1303 = vrot.slane %v1301, 4
      %v1304 = vor.u32 %v1303, %v1299
      %v1305 = vrot.slane %v1304, 4
      %v1307 = vshll.u32 %v923, 16
      %v1309 = vrot.slane %v1307, 5
      %v1310 = vsel %vm926, %v1305, %v1309
      %s1311 = scalar_lea.vmem %s1, 2
      %v1312 = vld [vmem:[%s1311] sm:$0x3]
      %v1313 = vunpack.c.l.b16 %v940
      %v1314 = vunpack.c.l.b16 %v950
      %v1315 = vunpack.c.l.b16 %v964
      %v1316 = vunpack.c.l.b16 %v974
      %v1317 = vunpack.c.l.b16 %v988
      %v1318 = vunpack.c.l.b16 %v998
      %v1319 = vunpack.c.l.b16 %v1012
      %v1320 = vunpack.c.l.b16 %v1022
      %v1321 = vunpack.c.l.b16 %v1036
      %v1322 = vunpack.c.l.b16 %v1046
      %v1323 = vunpack.c.l.b16 %v1060
      %v1324 = vunpack.c.l.b16 %v1070
      %v1325 = vunpack.c.l.b16 %v1084
      %v1326 = vunpack.c.l.b16 %v1094
      %v1327 = vunpack.c.l.b16 %v1108
      %v1328 = vunpack.c.l.b16 %v1118
      %v1329 = vunpack.c.l.b16 %v1132
      %v1330 = vunpack.c.l.b16 %v1142
      %v1331 = vunpack.c.l.b16 %v1156
      %v1332 = vunpack.c.l.b16 %v1166
      %v1333 = vunpack.c.l.b16 %v1180
      %v1334 = vunpack.c.l.b16 %v1190
      %v1335 = vunpack.c.l.b16 %v1204
      %v1336 = vunpack.c.l.b16 %v1214
      %v1337 = vunpack.c.l.b16 %v1228
      %v1338 = vunpack.c.l.b16 %v1238
      %v1339 = vunpack.c.l.b16 %v1252
      %v1340 = vunpack.c.l.b16 %v1262
      %v1341 = vunpack.c.l.b16 %v1276
      %v1342 = vunpack.c.l.b16 %v1286
      %v1343 = vunpack.c.l.b16 %v1300
      %v1344 = vunpack.c.l.b16 %v1310
      %v1345 = vpack.c.b16 %v1314, %v1313
      %v1346 = vpack.c.b16 %v1316, %v1315
      %v1347 = vpack.c.b16 %v1318, %v1317
      %v1348 = vpack.c.b16 %v1320, %v1319
      %v1349 = vpack.c.b16 %v1322, %v1321
      %v1350 = vpack.c.b16 %v1324, %v1323
      %v1351 = vpack.c.b16 %v1326, %v1325
      %v1352 = vpack.c.b16 %v1328, %v1327
      %v1353 = vpack.c.b16 %v1330, %v1329
      %v1354 = vpack.c.b16 %v1332, %v1331
      %v1355 = vpack.c.b16 %v1334, %v1333
      %v1356 = vpack.c.b16 %v1336, %v1335
      %v1357 = vpack.c.b16 %v1338, %v1337
      %v1358 = vpack.c.b16 %v1340, %v1339
      %v1359 = vpack.c.b16 %v1342, %v1341
      %v1360 = vpack.c.b16 %v1344, %v1343
      %vm1361 = vcmask 31744
      %v1363 = vsel %vm1361, %v1345, 0
      %v1366 = vsel %vm1361, %v1346, 0
      %v1369 = vsel %vm1361, %v1347, 0
      %v1372 = vsel %vm1361, %v1348, 0
      %v1375 = vsel %vm1361, %v1349, 0
      %v1378 = vsel %vm1361, %v1350, 0
      %v1381 = vsel %vm1361, %v1351, 0
      %v1384 = vsel %vm1361, %v1352, 0
      %v1387 = vsel %vm1361, %v1353, 0
      %v1390 = vsel %vm1361, %v1354, 0
      %v1393 = vsel %vm1361, %v1355, 0
      %v1396 = vsel %vm1361, %v1356, 0
      %v1399 = vsel %vm1361, %v1357, 0
      %v1402 = vsel %vm1361, %v1358, 0
      %v1405 = vsel %vm1361, %v1359, 0
      %v1408 = vsel %vm1361, %v1360, 0
      %vm1410 = vcmask 1041408
      %v1412 = vsel %vm1410, %v1312, 0
      %1414 = vmatprep.subr.bf16.mxu0 0
      %1415 = vmatpush1.bf16.msra.mxu0 0
      %1416 = vmatprep.subr.bf16.mxu0 0
      %1417 = vmatpush1.bf16.msra.mxu0 0
      %1418 = vmatprep.subr.bf16.mxu0 0
      %1419 = vmatpush1.bf16.msra.mxu0 0
      %1420 = vmatprep.subr.bf16.mxu0 0
      %1421 = vmatpush1.bf16.msra.mxu0 0
      %1422 = vmatprep.subr.bf16.mxu0 0
      %1423 = vmatpush1.bf16.msra.mxu0 0
      %1424 = vmatprep.subr.bf16.mxu0 0
      %1425 = vmatpush1.bf16.msra.mxu0 0
      %1426 = vmatprep.subr.bf16.mxu0 0
      %1427 = vmatpush1.bf16.msra.mxu0 0
      %1428 = vmatprep.subr.bf16.mxu0 0
      %1429 = vmatpush1.bf16.msra.mxu0 %v1412
      %1430 = vmatprep.subr.bf16.mxu0 0
      %1431 = vmatpush2.bf16.msra.mxu0 0
      %1432 = vmatprep.subr.bf16.mxu0 0
      %1433 = vmatpush2.bf16.msra.mxu0 0
      %1434 = vmatprep.subr.bf16.mxu0 0
      %1435 = vmatpush2.bf16.msra.mxu0 0
      %1436 = vmatprep.subr.bf16.mxu0 0
      %1437 = vmatpush2.bf16.msra.mxu0 0
      %1438 = vmatprep.subr.bf16.mxu0 0
      %1439 = vmatpush2.bf16.msra.mxu0 0
      %1440 = vmatprep.subr.bf16.mxu0 0
      %1441 = vmatpush2.bf16.msra.mxu0 0
      %1442 = vmatprep.subr.bf16.mxu0 0
      %1443 = vmatpush2.bf16.msra.mxu0 0
      %1444 = vmatprep.subr.bf16.mxu0 0
      %1445 = vmatpush2.bf16.msra.mxu0 0
      %1446 = vmatprep.mubr.bf16.mxu0 0
      %1447 = vmatmul.mubr.bf16.gmra.mxu0 %v1363
      %v1448 = vpop.f32.mrf.mxu0
      %v1449 = vadd.f32 0.0, %v1448
      %v1450 = vpop.f32.mrf.mxu0
      %v1451 = vpop.f32.mrf.mxu0
      %v1452 = vadd.f32 0.0, %v1451
      %v1453 = vpop.f32.mrf.mxu0
      %1454 = vmatprep.mubr.bf16.mxu0 0
      %1455 = vmatmul.mubr.bf16.gmra.mxu0 %v1366
      %v1456 = vpop.f32.mrf.mxu0
      %v1457 = vadd.f32 0.0, %v1456
      %v1458 = vpop.f32.mrf.mxu0
      %v1459 = vpop.f32.mrf.mxu0
      %v1460 = vadd.f32 0.0, %v1459
      %v1461 = vpop.f32.mrf.mxu0
      %1462 = vmatprep.mubr.bf16.mxu0 0
      %1463 = vmatmul.mubr.bf16.gmra.mxu0 %v1369
      %v1464 = vpop.f32.mrf.mxu0
      %v1465 = vadd.f32 0.0, %v1464
      %v1466 = vpop.f32.mrf.mxu0
      %v1467 = vpop.f32.mrf.mxu0
      %v1468 = vadd.f32 0.0, %v1467
      %v1469 = vpop.f32.mrf.mxu0
      %1470 = vmatprep.mubr.bf16.mxu0 0
      %1471 = vmatmul.mubr.bf16.gmra.mxu0 %v1372
      %v1472 = vpop.f32.mrf.mxu0
      %v1473 = vadd.f32 0.0, %v1472
      %v1474 = vpop.f32.mrf.mxu0
      %v1475 = vpop.f32.mrf.mxu0
      %v1476 = vadd.f32 0.0, %v1475
      %v1477 = vpop.f32.mrf.mxu0
      %1478 = vmatprep.mubr.bf16.mxu0 0
      %1479 = vmatmul.mubr.bf16.gmra.mxu0 %v1375
      %v1480 = vpop.f32.mrf.mxu0
      %v1481 = vadd.f32 0.0, %v1480
      %v1482 = vpop.f32.mrf.mxu0
      %v1483 = vpop.f32.mrf.mxu0
      %v1484 = vadd.f32 0.0, %v1483
      %v1485 = vpop.f32.mrf.mxu0
      %1486 = vmatprep.mubr.bf16.mxu0 0
      %1487 = vmatmul.mubr.bf16.gmra.mxu0 %v1378
      %v1488 = vpop.f32.mrf.mxu0
      %v1489 = vadd.f32 0.0, %v1488
      %v1490 = vpop.f32.mrf.mxu0
      %v1491 = vpop.f32.mrf.mxu0
      %v1492 = vadd.f32 0.0, %v1491
      %v1493 = vpop.f32.mrf.mxu0
      %1494 = vmatprep.mubr.bf16.mxu0 0
      %1495 = vmatmul.mubr.bf16.gmra.mxu0 %v1381
      %v1496 = vpop.f32.mrf.mxu0
      %v1497 = vadd.f32 0.0, %v1496
      %v1498 = vpop.f32.mrf.mxu0
      %v1499 = vpop.f32.mrf.mxu0
      %v1500 = vadd.f32 0.0, %v1499
      %v1501 = vpop.f32.mrf.mxu0
      %1502 = vmatprep.mubr.bf16.mxu0 0
      %1503 = vmatmul.mubr.bf16.gmra.mxu0 %v1384
      %v1504 = vpop.f32.mrf.mxu0
      %v1505 = vadd.f32 0.0, %v1504
      %v1506 = vpop.f32.mrf.mxu0
      %v1507 = vpop.f32.mrf.mxu0
      %v1508 = vadd.f32 0.0, %v1507
      %v1509 = vpop.f32.mrf.mxu0
      %1510 = vmatprep.mubr.bf16.mxu0 0
      %1511 = vmatmul.mubr.bf16.gmra.mxu0 %v1387
      %v1512 = vpop.f32.mrf.mxu0
      %v1513 = vadd.f32 0.0, %v1512
      %v1514 = vpop.f32.mrf.mxu0
      %v1515 = vpop.f32.mrf.mxu0
      %v1516 = vadd.f32 0.0, %v1515
      %v1517 = vpop.f32.mrf.mxu0
      %1518 = vmatprep.mubr.bf16.mxu0 0
      %1519 = vmatmul.mubr.bf16.gmra.mxu0 %v1390
      %v1520 = vpop.f32.mrf.mxu0
      %v1521 = vadd.f32 0.0, %v1520
      %v1522 = vpop.f32.mrf.mxu0
      %v1523 = vpop.f32.mrf.mxu0
      %v1524 = vadd.f32 0.0, %v1523
      %v1525 = vpop.f32.mrf.mxu0
      %1526 = vmatprep.mubr.bf16.mxu0 0
      %1527 = vmatmul.mubr.bf16.gmra.mxu0 %v1393
      %v1528 = vpop.f32.mrf.mxu0
      %v1529 = vadd.f32 0.0, %v1528
      %v1530 = vpop.f32.mrf.mxu0
      %v1531 = vpop.f32.mrf.mxu0
      %v1532 = vadd.f32 0.0, %v1531
      %v1533 = vpop.f32.mrf.mxu0
      %1534 = vmatprep.mubr.bf16.mxu0 0
      %1535 = vmatmul.mubr.bf16.gmra.mxu0 %v1396
      %v1536 = vpop.f32.mrf.mxu0
      %v1537 = vadd.f32 0.0, %v1536
      %v1538 = vpop.f32.mrf.mxu0
      %v1539 = vpop.f32.mrf.mxu0
      %v1540 = vadd.f32 0.0, %v1539
      %v1541 = vpop.f32.mrf.mxu0
      %1542 = vmatprep.mubr.bf16.mxu0 0
      %1543 = vmatmul.mubr.bf16.gmra.mxu0 %v1399
      %v1544 = vpop.f32.mrf.mxu0
      %v1545 = vadd.f32 0.0, %v1544
      %v1546 = vpop.f32.mrf.mxu0
      %v1547 = vpop.f32.mrf.mxu0
      %v1548 = vadd.f32 0.0, %v1547
      %v1549 = vpop.f32.mrf.mxu0
      %1550 = vmatprep.mubr.bf16.mxu0 0
      %1551 = vmatmul.mubr.bf16.gmra.mxu0 %v1402
      %v1552 = vpop.f32.mrf.mxu0
      %v1553 = vadd.f32 0.0, %v1552
      %v1554 = vpop.f32.mrf.mxu0
      %v1555 = vpop.f32.mrf.mxu0
      %v1556 = vadd.f32 0.0, %v1555
      %v1557 = vpop.f32.mrf.mxu0
      %1558 = vmatprep.mubr.bf16.mxu0 0
      %1559 = vmatmul.mubr.bf16.gmra.mxu0 %v1405
      %v1560 = vpop.f32.mrf.mxu0
      %v1561 = vadd.f32 0.0, %v1560
      %v1562 = vpop.f32.mrf.mxu0
      %v1563 = vpop.f32.mrf.mxu0
      %v1564 = vadd.f32 0.0, %v1563
      %v1565 = vpop.f32.mrf.mxu0
      %1566 = vmatprep.mubr.bf16.mxu0 0
      %1567 = vmatmul.mubr.bf16.gmra.mxu0 %v1408
      %v1568 = vpop.f32.mrf.mxu0
      %v1569 = vadd.f32 0.0, %v1568
      %v1570 = vpop.f32.mrf.mxu0
      %v1571 = vpop.f32.mrf.mxu0
      %v1572 = vadd.f32 0.0, %v1571
      %v1573 = vpop.f32.mrf.mxu0
      %1574 = vdwg.mxu0
      %v1607 = vunpack.c.l.b16 %v875
      %v1608 = vunpack.c.l.b16 %v876
      %v1609 = vunpack.c.l.b16 %v877
      %v1610 = vunpack.c.l.b16 %v878
      %v1611 = vunpack.c.l.b16 %v879
      %v1612 = vunpack.c.l.b16 %v880
      %v1613 = vunpack.c.l.b16 %v881
      %v1614 = vunpack.c.l.b16 %v882
      %v1615 = vunpack.c.l.b16 %v883
      %v1616 = vunpack.c.l.b16 %v884
      %v1617 = vunpack.c.l.b16 %v885
      %v1618 = vunpack.c.l.b16 %v886
      %v1619 = vunpack.c.l.b16 %v887
      %v1620 = vunpack.c.l.b16 %v888
      %v1621 = vunpack.c.l.b16 %v889
      %v1622 = vunpack.c.l.b16 %v890
      %v1623 = vunpack.c.l.b16 %v891
      %v1624 = vunpack.c.l.b16 %v892
      %v1625 = vunpack.c.l.b16 %v893
      %v1626 = vunpack.c.l.b16 %v894
      %v1627 = vunpack.c.l.b16 %v895
      %v1628 = vunpack.c.l.b16 %v896
      %v1629 = vunpack.c.l.b16 %v897
      %v1630 = vunpack.c.l.b16 %v898
      %v1631 = vunpack.c.l.b16 %v899
      %v1632 = vunpack.c.l.b16 %v900
      %v1633 = vunpack.c.l.b16 %v901
      %v1634 = vunpack.c.l.b16 %v902
      %v1635 = vunpack.c.l.b16 %v903
      %v1636 = vunpack.c.l.b16 %v904
      %v1637 = vunpack.c.l.b16 %v905
      %v1638 = vunpack.c.l.b16 %v906
      %v1639 = vpack.c.b16 %v1608, %v1607
      %v1640 = vpack.c.b16 %v1610, %v1609
      %v1641 = vpack.c.b16 %v1612, %v1611
      %v1642 = vpack.c.b16 %v1614, %v1613
      %v1643 = vpack.c.b16 %v1616, %v1615
      %v1644 = vpack.c.b16 %v1618, %v1617
      %v1645 = vpack.c.b16 %v1620, %v1619
      %v1646 = vpack.c.b16 %v1622, %v1621
      %v1647 = vpack.c.b16 %v1624, %v1623
      %v1648 = vpack.c.b16 %v1626, %v1625
      %v1649 = vpack.c.b16 %v1628, %v1627
      %v1650 = vpack.c.b16 %v1630, %v1629
      %v1651 = vpack.c.b16 %v1632, %v1631
      %v1652 = vpack.c.b16 %v1634, %v1633
      %v1653 = vpack.c.b16 %v1636, %v1635
      %v1654 = vpack.c.b16 %v1638, %v1637
      %v1656 = vsel %vm1361, %v1639, 0
      %v1659 = vsel %vm1361, %v1640, 0
      %v1662 = vsel %vm1361, %v1641, 0
      %v1665 = vsel %vm1361, %v1642, 0
      %v1668 = vsel %vm1361, %v1643, 0
      %v1671 = vsel %vm1361, %v1644, 0
      %v1674 = vsel %vm1361, %v1645, 0
      %v1677 = vsel %vm1361, %v1646, 0
      %v1680 = vsel %vm1361, %v1647, 0
      %v1683 = vsel %vm1361, %v1648, 0
      %v1686 = vsel %vm1361, %v1649, 0
      %v1689 = vsel %vm1361, %v1650, 0
      %v1692 = vsel %vm1361, %v1651, 0
      %v1695 = vsel %vm1361, %v1652, 0
      %v1698 = vsel %vm1361, %v1653, 0
      %v1701 = vsel %vm1361, %v1654, 0
      %v1704 = vsel %vm1410, %v907, 0
      %1706 = vmatprep.subr.bf16.mxu0 0
      %1707 = vmatpush1.bf16.msra.mxu0 0
      %1708 = vmatprep.subr.bf16.mxu0 0
      %1709 = vmatpush1.bf16.msra.mxu0 0
      %1710 = vmatprep.subr.bf16.mxu0 0
      %1711 = vmatpush1.bf16.msra.mxu0 0
      %1712 = vmatprep.subr.bf16.mxu0 0
      %1713 = vmatpush1.bf16.msra.mxu0 0
      %1714 = vmatprep.subr.bf16.mxu0 0
      %1715 = vmatpush1.bf16.msra.mxu0 0
      %1716 = vmatprep.subr.bf16.mxu0 0
      %1717 = vmatpush1.bf16.msra.mxu0 0
      %1718 = vmatprep.subr.bf16.mxu0 0
      %1719 = vmatpush1.bf16.msra.mxu0 0
      %1720 = vmatprep.subr.bf16.mxu0 0
      %1721 = vmatpush1.bf16.msra.mxu0 %v1704
      %1722 = vmatprep.subr.bf16.mxu0 0
      %1723 = vmatpush2.bf16.msra.mxu0 0
      %1724 = vmatprep.subr.bf16.mxu0 0
      %1725 = vmatpush2.bf16.msra.mxu0 0
      %1726 = vmatprep.subr.bf16.mxu0 0
      %1727 = vmatpush2.bf16.msra.mxu0 0
      %1728 = vmatprep.subr.bf16.mxu0 0
      %1729 = vmatpush2.bf16.msra.mxu0 0
      %1730 = vmatprep.subr.bf16.mxu0 0
      %1731 = vmatpush2.bf16.msra.mxu0 0
      %1732 = vmatprep.subr.bf16.mxu0 0
      %1733 = vmatpush2.bf16.msra.mxu0 0
      %1734 = vmatprep.subr.bf16.mxu0 0
      %1735 = vmatpush2.bf16.msra.mxu0 0
      %1736 = vmatprep.subr.bf16.mxu0 0
      %1737 = vmatpush2.bf16.msra.mxu0 0
      %1738 = vmatprep.mubr.bf16.mxu0 0
      %1739 = vmatmul.mubr.bf16.gmra.mxu0 %v1656
      %v1740 = vpop.f32.mrf.mxu0
      %v1741 = vadd.f32 %v1449, %v1740
      %v1742 = vpop.f32.mrf.mxu0
      %v1743 = vpop.f32.mrf.mxu0
      %v1744 = vadd.f32 %v1452, %v1743
      %v1745 = vpop.f32.mrf.mxu0
      %1746 = vmatprep.mubr.bf16.mxu0 0
      %1747 = vmatmul.mubr.bf16.gmra.mxu0 %v1659
      %v1748 = vpop.f32.mrf.mxu0
      %v1749 = vadd.f32 %v1457, %v1748
      %v1750 = vpop.f32.mrf.mxu0
      %v1751 = vpop.f32.mrf.mxu0
      %v1752 = vadd.f32 %v1460, %v1751
      %v1753 = vpop.f32.mrf.mxu0
      %1754 = vmatprep.mubr.bf16.mxu0 0
      %1755 = vmatmul.mubr.bf16.gmra.mxu0 %v1662
      %v1756 = vpop.f32.mrf.mxu0
      %v1757 = vadd.f32 %v1465, %v1756
      %v1758 = vpop.f32.mrf.mxu0
      %v1759 = vpop.f32.mrf.mxu0
      %v1760 = vadd.f32 %v1468, %v1759
      %v1761 = vpop.f32.mrf.mxu0
      %1762 = vmatprep.mubr.bf16.mxu0 0
      %1763 = vmatmul.mubr.bf16.gmra.mxu0 %v1665
      %v1764 = vpop.f32.mrf.mxu0
      %v1765 = vadd.f32 %v1473, %v1764
      %v1766 = vpop.f32.mrf.mxu0
      %v1767 = vpop.f32.mrf.mxu0
      %v1768 = vadd.f32 %v1476, %v1767
      %v1769 = vpop.f32.mrf.mxu0
      %1770 = vmatprep.mubr.bf16.mxu0 0
      %1771 = vmatmul.mubr.bf16.gmra.mxu0 %v1668
      %v1772 = vpop.f32.mrf.mxu0
      %v1773 = vadd.f32 %v1481, %v1772
      %v1774 = vpop.f32.mrf.mxu0
      %v1775 = vpop.f32.mrf.mxu0
      %v1776 = vadd.f32 %v1484, %v1775
      %v1777 = vpop.f32.mrf.mxu0
      %1778 = vmatprep.mubr.bf16.mxu0 0
      %1779 = vmatmul.mubr.bf16.gmra.mxu0 %v1671
      %v1780 = vpop.f32.mrf.mxu0
      %v1781 = vadd.f32 %v1489, %v1780
      %v1782 = vpop.f32.mrf.mxu0
      %v1783 = vpop.f32.mrf.mxu0
      %v1784 = vadd.f32 %v1492, %v1783
      %v1785 = vpop.f32.mrf.mxu0
      %1786 = vmatprep.mubr.bf16.mxu0 0
      %1787 = vmatmul.mubr.bf16.gmra.mxu0 %v1674
      %v1788 = vpop.f32.mrf.mxu0
      %v1789 = vadd.f32 %v1497, %v1788
      %v1790 = vpop.f32.mrf.mxu0
      %v1791 = vpop.f32.mrf.mxu0
      %v1792 = vadd.f32 %v1500, %v1791
      %v1793 = vpop.f32.mrf.mxu0
      %1794 = vmatprep.mubr.bf16.mxu0 0
      %1795 = vmatmul.mubr.bf16.gmra.mxu0 %v1677
      %v1796 = vpop.f32.mrf.mxu0
      %v1797 = vadd.f32 %v1505, %v1796
      %v1798 = vpop.f32.mrf.mxu0
      %v1799 = vpop.f32.mrf.mxu0
      %v1800 = vadd.f32 %v1508, %v1799
      %v1801 = vpop.f32.mrf.mxu0
      %1802 = vmatprep.mubr.bf16.mxu0 0
      %1803 = vmatmul.mubr.bf16.gmra.mxu0 %v1680
      %v1804 = vpop.f32.mrf.mxu0
      %v1805 = vadd.f32 %v1513, %v1804
      %v1806 = vpop.f32.mrf.mxu0
      %v1807 = vpop.f32.mrf.mxu0
      %v1808 = vadd.f32 %v1516, %v1807
      %v1809 = vpop.f32.mrf.mxu0
      %1810 = vmatprep.mubr.bf16.mxu0 0
      %1811 = vmatmul.mubr.bf16.gmra.mxu0 %v1683
      %v1812 = vpop.f32.mrf.mxu0
      %v1813 = vadd.f32 %v1521, %v1812
      %v1814 = vpop.f32.mrf.mxu0
      %v1815 = vpop.f32.mrf.mxu0
      %v1816 = vadd.f32 %v1524, %v1815
      %v1817 = vpop.f32.mrf.mxu0
      %1818 = vmatprep.mubr.bf16.mxu0 0
      %1819 = vmatmul.mubr.bf16.gmra.mxu0 %v1686
      %v1820 = vpop.f32.mrf.mxu0
      %v1821 = vadd.f32 %v1529, %v1820
      %v1822 = vpop.f32.mrf.mxu0
      %v1823 = vpop.f32.mrf.mxu0
      %v1824 = vadd.f32 %v1532, %v1823
      %v1825 = vpop.f32.mrf.mxu0
      %1826 = vmatprep.mubr.bf16.mxu0 0
      %1827 = vmatmul.mubr.bf16.gmra.mxu0 %v1689
      %v1828 = vpop.f32.mrf.mxu0
      %v1829 = vadd.f32 %v1537, %v1828
      %v1830 = vpop.f32.mrf.mxu0
      %v1831 = vpop.f32.mrf.mxu0
      %v1832 = vadd.f32 %v1540, %v1831
      %v1833 = vpop.f32.mrf.mxu0
      %1834 = vmatprep.mubr.bf16.mxu0 0
      %1835 = vmatmul.mubr.bf16.gmra.mxu0 %v1692
      %v1836 = vpop.f32.mrf.mxu0
      %v1837 = vadd.f32 %v1545, %v1836
      %v1838 = vpop.f32.mrf.mxu0
      %v1839 = vpop.f32.mrf.mxu0
      %v1840 = vadd.f32 %v1548, %v1839
      %v1841 = vpop.f32.mrf.mxu0
      %1842 = vmatprep.mubr.bf16.mxu0 0
      %1843 = vmatmul.mubr.bf16.gmra.mxu0 %v1695
      %v1844 = vpop.f32.mrf.mxu0
      %v1845 = vadd.f32 %v1553, %v1844
      %v1846 = vpop.f32.mrf.mxu0
      %v1847 = vpop.f32.mrf.mxu0
      %v1848 = vadd.f32 %v1556, %v1847
      %v1849 = vpop.f32.mrf.mxu0
      %1850 = vmatprep.mubr.bf16.mxu0 0
      %1851 = vmatmul.mubr.bf16.gmra.mxu0 %v1698
      %v1852 = vpop.f32.mrf.mxu0
      %v1853 = vadd.f32 %v1561, %v1852
      %v1854 = vpop.f32.mrf.mxu0
      %v1855 = vpop.f32.mrf.mxu0
      %v1856 = vadd.f32 %v1564, %v1855
      %v1857 = vpop.f32.mrf.mxu0
      %1858 = vmatprep.mubr.bf16.mxu0 0
      %1859 = vmatmul.mubr.bf16.gmra.mxu0 %v1701
      %v1860 = vpop.f32.mrf.mxu0
      %v1861 = vadd.f32 %v1569, %v1860
      %v1862 = vpop.f32.mrf.mxu0
      %v1863 = vpop.f32.mrf.mxu0
      %v1864 = vadd.f32 %v1572, %v1863
      %v1865 = vpop.f32.mrf.mxu0
      %1866 = vdwg.mxu0
      %v1867 = vld [vmem:[#allocation2] sm:$0xe]
      %v1868 = vld [vmem:[#allocation2 + $0xc] sm:$0xe]
      %v1869 = vld [vmem:[#allocation2 + $0x18] sm:$0xe]
      %v1870 = vld [vmem:[#allocation2 + $0x24] sm:$0xe]
      %v1871 = vld [vmem:[#allocation2 + $0x30] sm:$0xe]
      %v1872 = vld [vmem:[#allocation2 + $0x3c] sm:$0xe]
      %v1873 = vld [vmem:[#allocation2 + $0x48] sm:$0xe]
      %v1874 = vld [vmem:[#allocation2 + $0x54] sm:$0xe]
      %v1875 = vld [vmem:[#allocation2 + $0x60] sm:$0xe]
      %v1876 = vld [vmem:[#allocation2 + $0x6c] sm:$0xe]
      %v1877 = vld [vmem:[#allocation2 + $0x78] sm:$0xe]
      %v1878 = vld [vmem:[#allocation2 + $0x84] sm:$0xe]
      %v1879 = vld [vmem:[#allocation2 + $0x90] sm:$0xe]
      %v1880 = vld [vmem:[#allocation2 + $0x9c] sm:$0xe]
      %v1881 = vld [vmem:[#allocation2 + $0xa8] sm:$0xe]
      %v1882 = vld [vmem:[#allocation2 + $0xb4] sm:$0xe]
      %vm1915 = vcmask 1042432
      %vm1916 = vcmask 1046532
      %vm1917 = vmor %vm1915, %vm1916
      %v1918 = vrot.slane %v1867, 5
      %v1919 = vrot.slane %v1918, 4
      %v1920 = vrot.slane %v876, 5
      %v1921 = vsel %vm1917, %v1919, %v1920
      %v1922 = vrot.slane %v1920, 4
      %v1923 = vrot.slane %v908, 5
      %v1924 = vsel %vm1917, %v1922, %v1923
      %v1925 = vrot.slane %v1868, 5
      %v1926 = vrot.slane %v1925, 4
      %v1927 = vrot.slane %v878, 5
      %v1928 = vsel %vm1917, %v1926, %v1927
      %v1929 = vrot.slane %v1927, 4
      %v1930 = vrot.slane %v909, 5
      %v1931 = vsel %vm1917, %v1929, %v1930
      %v1932 = vrot.slane %v1869, 5
      %v1933 = vrot.slane %v1932, 4
      %v1934 = vrot.slane %v880, 5
      %v1935 = vsel %vm1917, %v1933, %v1934
      %v1936 = vrot.slane %v1934, 4
      %v1937 = vrot.slane %v910, 5
      %v1938 = vsel %vm1917, %v1936, %v1937
      %v1939 = vrot.slane %v1870, 5
      %v1940 = vrot.slane %v1939, 4
      %v1941 = vrot.slane %v882, 5
      %v1942 = vsel %vm1917, %v1940, %v1941
      %v1943 = vrot.slane %v1941, 4
      %v1944 = vrot.slane %v911, 5
      %v1945 = vsel %vm1917, %v1943, %v1944
      %v1946 = vrot.slane %v1871, 5
      %v1947 = vrot.slane %v1946, 4
      %v1948 = vrot.slane %v884, 5
      %v1949 = vsel %vm1917, %v1947, %v1948
      %v1950 = vrot.slane %v1948, 4
      %v1951 = vrot.slane %v912, 5
      %v1952 = vsel %vm1917, %v1950, %v1951
      %v1953 = vrot.slane %v1872, 5
      %v1954 = vrot.slane %v1953, 4
      %v1955 = vrot.slane %v886, 5
      %v1956 = vsel %vm1917, %v1954, %v1955
      %v1957 = vrot.slane %v1955, 4
      %v1958 = vrot.slane %v913, 5
      %v1959 = vsel %vm1917, %v1957, %v1958
      %v1960 = vrot.slane %v1873, 5
      %v1961 = vrot.slane %v1960, 4
      %v1962 = vrot.slane %v888, 5
      %v1963 = vsel %vm1917, %v1961, %v1962
      %v1964 = vrot.slane %v1962, 4
      %v1965 = vrot.slane %v914, 5
      %v1966 = vsel %vm1917, %v1964, %v1965
      %v1967 = vrot.slane %v1874, 5
      %v1968 = vrot.slane %v1967, 4
      %v1969 = vrot.slane %v890, 5
      %v1970 = vsel %vm1917, %v1968, %v1969
      %v1971 = vrot.slane %v1969, 4
      %v1972 = vrot.slane %v915, 5
      %v1973 = vsel %vm1917, %v1971, %v1972
      %v1974 = vrot.slane %v1875, 5
      %v1975 = vrot.slane %v1974, 4
      %v1976 = vrot.slane %v892, 5
      %v1977 = vsel %vm1917, %v1975, %v1976
      %v1978 = vrot.slane %v1976, 4
      %v1979 = vrot.slane %v916, 5
      %v1980 = vsel %vm1917, %v1978, %v1979
      %v1981 = vrot.slane %v1876, 5
      %v1982 = vrot.slane %v1981, 4
      %v1983 = vrot.slane %v894, 5
      %v1984 = vsel %vm1917, %v1982, %v1983
      %v1985 = vrot.slane %v1983, 4
      %v1986 = vrot.slane %v917, 5
      %v1987 = vsel %vm1917, %v1985, %v1986
      %v1988 = vrot.slane %v1877, 5
      %v1989 = vrot.slane %v1988, 4
      %v1990 = vrot.slane %v896, 5
      %v1991 = vsel %vm1917, %v1989, %v1990
      %v1992 = vrot.slane %v1990, 4
      %v1993 = vrot.slane %v918, 5
      %v1994 = vsel %vm1917, %v1992, %v1993
      %v1995 = vrot.slane %v1878, 5
      %v1996 = vrot.slane %v1995, 4
      %v1997 = vrot.slane %v898, 5
      %v1998 = vsel %vm1917, %v1996, %v1997
      %v1999 = vrot.slane %v1997, 4
      %v2000 = vrot.slane %v919, 5
      %v2001 = vsel %vm1917, %v1999, %v2000
      %v2002 = vrot.slane %v1879, 5
      %v2003 = vrot.slane %v2002, 4
      %v2004 = vrot.slane %v900, 5
      %v2005 = vsel %vm1917, %v2003, %v2004
      %v2006 = vrot.slane %v2004, 4
      %v2007 = vrot.slane %v920, 5
      %v2008 = vsel %vm1917, %v2006, %v2007
      %v2009 = vrot.slane %v1880, 5
      %v2010 = vrot.slane %v2009, 4
      %v2011 = vrot.slane %v902, 5
      %v2012 = vsel %vm1917, %v2010, %v2011
      %v2013 = vrot.slane %v2011, 4
      %v2014 = vrot.slane %v921, 5
      %v2015 = vsel %vm1917, %v2013, %v2014
      %v2016 = vrot.slane %v1881, 5
      %v2017 = vrot.slane %v2016, 4
      %v2018 = vrot.slane %v904, 5
      %v2019 = vsel %vm1917, %v2017, %v2018
      %v2020 = vrot.slane %v2018, 4
      %v2021 = vrot.slane %v922, 5
      %v2022 = vsel %vm1917, %v2020, %v2021
      %v2023 = vrot.slane %v1882, 5
      %v2024 = vrot.slane %v2023, 4
      %v2025 = vrot.slane %v906, 5
      %v2026 = vsel %vm1917, %v2024, %v2025
      %v2027 = vrot.slane %v2025, 4
      %v2028 = vrot.slane %v923, 5
      %v2029 = vsel %vm1917, %v2027, %v2028
      %s2030 = scalar_lea.vmem %s1, 4
      %v2031 = vld [vmem:[%s2030] sm:$0x3]
      %v2032 = vunpack.c.l.b16 %v1921
      %v2033 = vunpack.c.l.b16 %v1924
      %v2034 = vunpack.c.l.b16 %v1928
      %v2035 = vunpack.c.l.b16 %v1931
      %v2036 = vunpack.c.l.b16 %v1935
      %v2037 = vunpack.c.l.b16 %v1938
      %v2038 = vunpack.c.l.b16 %v1942
      %v2039 = vunpack.c.l.b16 %v1945
      %v2040 = vunpack.c.l.b16 %v1949
      %v2041 = vunpack.c.l.b16 %v1952
      %v2042 = vunpack.c.l.b16 %v1956
      %v2043 = vunpack.c.l.b16 %v1959
      %v2044 = vunpack.c.l.b16 %v1963
      %v2045 = vunpack.c.l.b16 %v1966
      %v2046 = vunpack.c.l.b16 %v1970
      %v2047 = vunpack.c.l.b16 %v1973
      %v2048 = vunpack.c.l.b16 %v1977
      %v2049 = vunpack.c.l.b16 %v1980
      %v2050 = vunpack.c.l.b16 %v1984
      %v2051 = vunpack.c.l.b16 %v1987
      %v2052 = vunpack.c.l.b16 %v1991
      %v2053 = vunpack.c.l.b16 %v1994
      %v2054 = vunpack.c.l.b16 %v1998
      %v2055 = vunpack.c.l.b16 %v2001
      %v2056 = vunpack.c.l.b16 %v2005
      %v2057 = vunpack.c.l.b16 %v2008
      %v2058 = vunpack.c.l.b16 %v2012
      %v2059 = vunpack.c.l.b16 %v2015
      %v2060 = vunpack.c.l.b16 %v2019
      %v2061 = vunpack.c.l.b16 %v2022
      %v2062 = vunpack.c.l.b16 %v2026
      %v2063 = vunpack.c.l.b16 %v2029
      %v2064 = vpack.c.b16 %v2033, %v2032
      %v2065 = vpack.c.b16 %v2035, %v2034
      %v2066 = vpack.c.b16 %v2037, %v2036
      %v2067 = vpack.c.b16 %v2039, %v2038
      %v2068 = vpack.c.b16 %v2041, %v2040
      %v2069 = vpack.c.b16 %v2043, %v2042
      %v2070 = vpack.c.b16 %v2045, %v2044
      %v2071 = vpack.c.b16 %v2047, %v2046
      %v2072 = vpack.c.b16 %v2049, %v2048
      %v2073 = vpack.c.b16 %v2051, %v2050
      %v2074 = vpack.c.b16 %v2053, %v2052
      %v2075 = vpack.c.b16 %v2055, %v2054
      %v2076 = vpack.c.b16 %v2057, %v2056
      %v2077 = vpack.c.b16 %v2059, %v2058
      %v2078 = vpack.c.b16 %v2061, %v2060
      %v2079 = vpack.c.b16 %v2063, %v2062
      %v2081 = vsel %vm1361, %v2064, 0
      %v2084 = vsel %vm1361, %v2065, 0
      %v2087 = vsel %vm1361, %v2066, 0
      %v2090 = vsel %vm1361, %v2067, 0
      %v2093 = vsel %vm1361, %v2068, 0
      %v2096 = vsel %vm1361, %v2069, 0
      %v2099 = vsel %vm1361, %v2070, 0
      %v2102 = vsel %vm1361, %v2071, 0
      %v2105 = vsel %vm1361, %v2072, 0
      %v2108 = vsel %vm1361, %v2073, 0
      %v2111 = vsel %vm1361, %v2074, 0
      %v2114 = vsel %vm1361, %v2075, 0
      %v2117 = vsel %vm1361, %v2076, 0
      %v2120 = vsel %vm1361, %v2077, 0
      %v2123 = vsel %vm1361, %v2078, 0
      %v2126 = vsel %vm1361, %v2079, 0
      %v2129 = vsel %vm1410, %v2031, 0
      %2131 = vmatprep.subr.bf16.mxu0 0
      %2132 = vmatpush1.bf16.msra.mxu0 0
      %2133 = vmatprep.subr.bf16.mxu0 0
      %2134 = vmatpush1.bf16.msra.mxu0 0
      %2135 = vmatprep.subr.bf16.mxu0 0
      %2136 = vmatpush1.bf16.msra.mxu0 0
      %2137 = vmatprep.subr.bf16.mxu0 0
      %2138 = vmatpush1.bf16.msra.mxu0 0
      %2139 = vmatprep.subr.bf16.mxu0 0
      %2140 = vmatpush1.bf16.msra.mxu0 0
      %2141 = vmatprep.subr.bf16.mxu0 0
      %2142 = vmatpush1.bf16.msra.mxu0 0
      %2143 = vmatprep.subr.bf16.mxu0 0
      %2144 = vmatpush1.bf16.msra.mxu0 0
      %2145 = vmatprep.subr.bf16.mxu0 0
      %2146 = vmatpush1.bf16.msra.mxu0 %v2129
      %2147 = vmatprep.subr.bf16.mxu0 0
      %2148 = vmatpush2.bf16.msra.mxu0 0
      %2149 = vmatprep.subr.bf16.mxu0 0
      %2150 = vmatpush2.bf16.msra.mxu0 0
      %2151 = vmatprep.subr.bf16.mxu0 0
      %2152 = vmatpush2.bf16.msra.mxu0 0
      %2153 = vmatprep.subr.bf16.mxu0 0
      %2154 = vmatpush2.bf16.msra.mxu0 0
      %2155 = vmatprep.subr.bf16.mxu0 0
      %2156 = vmatpush2.bf16.msra.mxu0 0
      %2157 = vmatprep.subr.bf16.mxu0 0
      %2158 = vmatpush2.bf16.msra.mxu0 0
      %2159 = vmatprep.subr.bf16.mxu0 0
      %2160 = vmatpush2.bf16.msra.mxu0 0
      %2161 = vmatprep.subr.bf16.mxu0 0
      %2162 = vmatpush2.bf16.msra.mxu0 0
      %2163 = vmatprep.mubr.bf16.mxu0 0
      %2164 = vmatmul.mubr.bf16.gmra.mxu0 %v2081
      %v2165 = vpop.f32.mrf.mxu0
      %v2166 = vadd.f32 0.0, %v2165
      %v2167 = vpop.f32.mrf.mxu0
      %v2168 = vpop.f32.mrf.mxu0
      %v2169 = vadd.f32 0.0, %v2168
      %v2170 = vpop.f32.mrf.mxu0
      %2171 = vmatprep.mubr.bf16.mxu0 0
      %2172 = vmatmul.mubr.bf16.gmra.mxu0 %v2084
      %v2173 = vpop.f32.mrf.mxu0
      %v2174 = vadd.f32 0.0, %v2173
      %v2175 = vpop.f32.mrf.mxu0
      %v2176 = vpop.f32.mrf.mxu0
      %v2177 = vadd.f32 0.0, %v2176
      %v2178 = vpop.f32.mrf.mxu0
      %2179 = vmatprep.mubr.bf16.mxu0 0
      %2180 = vmatmul.mubr.bf16.gmra.mxu0 %v2087
      %v2181 = vpop.f32.mrf.mxu0
      %v2182 = vadd.f32 0.0, %v2181
      %v2183 = vpop.f32.mrf.mxu0
      %v2184 = vpop.f32.mrf.mxu0
      %v2185 = vadd.f32 0.0, %v2184
      %v2186 = vpop.f32.mrf.mxu0
      %2187 = vmatprep.mubr.bf16.mxu0 0
      %2188 = vmatmul.mubr.bf16.gmra.mxu0 %v2090
      %v2189 = vpop.f32.mrf.mxu0
      %v2190 = vadd.f32 0.0, %v2189
      %v2191 = vpop.f32.mrf.mxu0
      %v2192 = vpop.f32.mrf.mxu0
      %v2193 = vadd.f32 0.0, %v2192
      %v2194 = vpop.f32.mrf.mxu0
      %2195 = vmatprep.mubr.bf16.mxu0 0
      %2196 = vmatmul.mubr.bf16.gmra.mxu0 %v2093
      %v2197 = vpop.f32.mrf.mxu0
      %v2198 = vadd.f32 0.0, %v2197
      %v2199 = vpop.f32.mrf.mxu0
      %v2200 = vpop.f32.mrf.mxu0
      %v2201 = vadd.f32 0.0, %v2200
      %v2202 = vpop.f32.mrf.mxu0
      %2203 = vmatprep.mubr.bf16.mxu0 0
      %2204 = vmatmul.mubr.bf16.gmra.mxu0 %v2096
      %v2205 = vpop.f32.mrf.mxu0
      %v2206 = vadd.f32 0.0, %v2205
      %v2207 = vpop.f32.mrf.mxu0
      %v2208 = vpop.f32.mrf.mxu0
      %v2209 = vadd.f32 0.0, %v2208
      %v2210 = vpop.f32.mrf.mxu0
      %2211 = vmatprep.mubr.bf16.mxu0 0
      %2212 = vmatmul.mubr.bf16.gmra.mxu0 %v2099
      %v2213 = vpop.f32.mrf.mxu0
      %v2214 = vadd.f32 0.0, %v2213
      %v2215 = vpop.f32.mrf.mxu0
      %v2216 = vpop.f32.mrf.mxu0
      %v2217 = vadd.f32 0.0, %v2216
      %v2218 = vpop.f32.mrf.mxu0
      %2219 = vmatprep.mubr.bf16.mxu0 0
      %2220 = vmatmul.mubr.bf16.gmra.mxu0 %v2102
      %v2221 = vpop.f32.mrf.mxu0
      %v2222 = vadd.f32 0.0, %v2221
      %v2223 = vpop.f32.mrf.mxu0
      %v2224 = vpop.f32.mrf.mxu0
      %v2225 = vadd.f32 0.0, %v2224
      %v2226 = vpop.f32.mrf.mxu0
      %2227 = vmatprep.mubr.bf16.mxu0 0
      %2228 = vmatmul.mubr.bf16.gmra.mxu0 %v2105
      %v2229 = vpop.f32.mrf.mxu0
      %v2230 = vadd.f32 0.0, %v2229
      %v2231 = vpop.f32.mrf.mxu0
      %v2232 = vpop.f32.mrf.mxu0
      %v2233 = vadd.f32 0.0, %v2232
      %v2234 = vpop.f32.mrf.mxu0
      %2235 = vmatprep.mubr.bf16.mxu0 0
      %2236 = vmatmul.mubr.bf16.gmra.mxu0 %v2108
      %v2237 = vpop.f32.mrf.mxu0
      %v2238 = vadd.f32 0.0, %v2237
      %v2239 = vpop.f32.mrf.mxu0
      %v2240 = vpop.f32.mrf.mxu0
      %v2241 = vadd.f32 0.0, %v2240
      %v2242 = vpop.f32.mrf.mxu0
      %2243 = vmatprep.mubr.bf16.mxu0 0
      %2244 = vmatmul.mubr.bf16.gmra.mxu0 %v2111
      %v2245 = vpop.f32.mrf.mxu0
      %v2246 = vadd.f32 0.0, %v2245
      %v2247 = vpop.f32.mrf.mxu0
      %v2248 = vpop.f32.mrf.mxu0
      %v2249 = vadd.f32 0.0, %v2248
      %v2250 = vpop.f32.mrf.mxu0
      %2251 = vmatprep.mubr.bf16.mxu0 0
      %2252 = vmatmul.mubr.bf16.gmra.mxu0 %v2114
      %v2253 = vpop.f32.mrf.mxu0
      %v2254 = vadd.f32 0.0, %v2253
      %v2255 = vpop.f32.mrf.mxu0
      %v2256 = vpop.f32.mrf.mxu0
      %v2257 = vadd.f32 0.0, %v2256
      %v2258 = vpop.f32.mrf.mxu0
      %2259 = vmatprep.mubr.bf16.mxu0 0
      %2260 = vmatmul.mubr.bf16.gmra.mxu0 %v2117
      %v2261 = vpop.f32.mrf.mxu0
      %v2262 = vadd.f32 0.0, %v2261
      %v2263 = vpop.f32.mrf.mxu0
      %v2264 = vpop.f32.mrf.mxu0
      %v2265 = vadd.f32 0.0, %v2264
      %v2266 = vpop.f32.mrf.mxu0
      %2267 = vmatprep.mubr.bf16.mxu0 0
      %2268 = vmatmul.mubr.bf16.gmra.mxu0 %v2120
      %v2269 = vpop.f32.mrf.mxu0
      %v2270 = vadd.f32 0.0, %v2269
      %v2271 = vpop.f32.mrf.mxu0
      %v2272 = vpop.f32.mrf.mxu0
      %v2273 = vadd.f32 0.0, %v2272
      %v2274 = vpop.f32.mrf.mxu0
      %2275 = vmatprep.mubr.bf16.mxu0 0
      %2276 = vmatmul.mubr.bf16.gmra.mxu0 %v2123
      %v2277 = vpop.f32.mrf.mxu0
      %v2278 = vadd.f32 0.0, %v2277
      %v2279 = vpop.f32.mrf.mxu0
      %v2280 = vpop.f32.mrf.mxu0
      %v2281 = vadd.f32 0.0, %v2280
      %v2282 = vpop.f32.mrf.mxu0
      %2283 = vmatprep.mubr.bf16.mxu0 0
      %2284 = vmatmul.mubr.bf16.gmra.mxu0 %v2126
      %v2285 = vpop.f32.mrf.mxu0
      %v2286 = vadd.f32 0.0, %v2285
      %v2287 = vpop.f32.mrf.mxu0
      %v2288 = vpop.f32.mrf.mxu0
      %v2289 = vadd.f32 0.0, %v2288
      %v2290 = vpop.f32.mrf.mxu0
      %2291 = vdwg.mxu0
      %v2292 = vadd.f32 %v1741, %v2166
      %v2293 = vadd.f32 %v1744, %v2169
      %v2294 = vadd.f32 %v1749, %v2174
      %v2295 = vadd.f32 %v1752, %v2177
      %v2296 = vadd.f32 %v1757, %v2182
      %v2297 = vadd.f32 %v1760, %v2185
      %v2298 = vadd.f32 %v1765, %v2190
      %v2299 = vadd.f32 %v1768, %v2193
      %v2300 = vadd.f32 %v1773, %v2198
      %v2301 = vadd.f32 %v1776, %v2201
      %v2302 = vadd.f32 %v1781, %v2206
      %v2303 = vadd.f32 %v1784, %v2209
      %v2304 = vadd.f32 %v1789, %v2214
      %v2305 = vadd.f32 %v1792, %v2217
      %v2306 = vadd.f32 %v1797, %v2222
      %v2307 = vadd.f32 %v1800, %v2225
      %v2308 = vadd.f32 %v1805, %v2230
      %v2309 = vadd.f32 %v1808, %v2233
      %v2310 = vadd.f32 %v1813, %v2238
      %v2311 = vadd.f32 %v1816, %v2241
      %v2312 = vadd.f32 %v1821, %v2246
      %v2313 = vadd.f32 %v1824, %v2249
      %v2314 = vadd.f32 %v1829, %v2254
      %v2315 = vadd.f32 %v1832, %v2257
      %v2316 = vadd.f32 %v1837, %v2262
      %v2317 = vadd.f32 %v1840, %v2265
      %v2318 = vadd.f32 %v1845, %v2270
      %v2319 = vadd.f32 %v1848, %v2273
      %v2320 = vadd.f32 %v1853, %v2278
      %v2321 = vadd.f32 %v1856, %v2281
      %v2322 = vadd.f32 %v1861, %v2286
      %v2323 = vadd.f32 %v1864, %v2289
      %v2324 = vld [vmem:[%s756] sm:$0xf]
      %v2325 = vld [vmem:[%s756 + $0x4] sm:$0xf]
      %v2326 = vld [vmem:[%s756 + $0xc] sm:$0xf]
      %v2327 = vld [vmem:[%s756 + $0x10] sm:$0xf]
      %v2328 = vld [vmem:[%s756 + $0x18] sm:$0xf]
      %v2329 = vld [vmem:[%s756 + $0x1c] sm:$0xf]
      %v2330 = vld [vmem:[%s756 + $0x24] sm:$0xf]
      %v2331 = vld [vmem:[%s756 + $0x28] sm:$0xf]
      %v2332 = vld [vmem:[%s756 + $0x30] sm:$0xf]
      %v2333 = vld [vmem:[%s756 + $0x34] sm:$0xf]
      %v2334 = vld [vmem:[%s756 + $0x3c] sm:$0xf]
      %v2335 = vld [vmem:[%s756 + $0x40] sm:$0xf]
      %v2336 = vld [vmem:[%s756 + $0x48] sm:$0xf]
      %v2337 = vld [vmem:[%s756 + $0x4c] sm:$0xf]
      %v2338 = vld [vmem:[%s756 + $0x54] sm:$0xf]
      %v2339 = vld [vmem:[%s756 + $0x58] sm:$0xf]
      %v2340 = vld [vmem:[%s756 + $0x60] sm:$0xf]
      %v2341 = vld [vmem:[%s756 + $0x64] sm:$0xf]
      %v2342 = vld [vmem:[%s756 + $0x6c] sm:$0xf]
      %v2343 = vld [vmem:[%s756 + $0x70] sm:$0xf]
      %v2344 = vld [vmem:[%s756 + $0x78] sm:$0xf]
      %v2345 = vld [vmem:[%s756 + $0x7c] sm:$0xf]
      %v2346 = vld [vmem:[%s756 + $0x84] sm:$0xf]
      %v2347 = vld [vmem:[%s756 + $0x88] sm:$0xf]
      %v2348 = vld [vmem:[%s756 + $0x90] sm:$0xf]
      %v2349 = vld [vmem:[%s756 + $0x94] sm:$0xf]
      %v2350 = vld [vmem:[%s756 + $0x9c] sm:$0xf]
      %v2351 = vld [vmem:[%s756 + $0xa0] sm:$0xf]
      %v2352 = vld [vmem:[%s756 + $0xa8] sm:$0xf]
      %v2353 = vld [vmem:[%s756 + $0xac] sm:$0xf]
      %v2354 = vld [vmem:[%s756 + $0xb4] sm:$0xf]
      %v2355 = vld [vmem:[%s756 + $0xb8] sm:$0xf]
      %s2356 = scalar_lea.vmem %s1, 6
      %v2357 = vld [vmem:[%s2356] sm:$0x3]
      %v2390 = vunpack.c.l.b16 %v2324
      %v2391 = vunpack.c.l.b16 %v2325
      %v2392 = vunpack.c.l.b16 %v2326
      %v2393 = vunpack.c.l.b16 %v2327
      %v2394 = vunpack.c.l.b16 %v2328
      %v2395 = vunpack.c.l.b16 %v2329
      %v2396 = vunpack.c.l.b16 %v2330
      %v2397 = vunpack.c.l.b16 %v2331
      %v2398 = vunpack.c.l.b16 %v2332
      %v2399 = vunpack.c.l.b16 %v2333
      %v2400 = vunpack.c.l.b16 %v2334
      %v2401 = vunpack.c.l.b16 %v2335
      %v2402 = vunpack.c.l.b16 %v2336
      %v2403 = vunpack.c.l.b16 %v2337
      %v2404 = vunpack.c.l.b16 %v2338
      %v2405 = vunpack.c.l.b16 %v2339
      %v2406 = vunpack.c.l.b16 %v2340
      %v2407 = vunpack.c.l.b16 %v2341
      %v2408 = vunpack.c.l.b16 %v2342
      %v2409 = vunpack.c.l.b16 %v2343
      %v2410 = vunpack.c.l.b16 %v2344
      %v2411 = vunpack.c.l.b16 %v2345
      %v2412 = vunpack.c.l.b16 %v2346
      %v2413 = vunpack.c.l.b16 %v2347
      %v2414 = vunpack.c.l.b16 %v2348
      %v2415 = vunpack.c.l.b16 %v2349
      %v2416 = vunpack.c.l.b16 %v2350
      %v2417 = vunpack.c.l.b16 %v2351
      %v2418 = vunpack.c.l.b16 %v2352
      %v2419 = vunpack.c.l.b16 %v2353
      %v2420 = vunpack.c.l.b16 %v2354
      %v2421 = vunpack.c.l.b16 %v2355
      %v2422 = vpack.c.b16 %v2391, %v2390
      %v2423 = vpack.c.b16 %v2393, %v2392
      %v2424 = vpack.c.b16 %v2395, %v2394
      %v2425 = vpack.c.b16 %v2397, %v2396
      %v2426 = vpack.c.b16 %v2399, %v2398
      %v2427 = vpack.c.b16 %v2401, %v2400
      %v2428 = vpack.c.b16 %v2403, %v2402
      %v2429 = vpack.c.b16 %v2405, %v2404
      %v2430 = vpack.c.b16 %v2407, %v2406
      %v2431 = vpack.c.b16 %v2409, %v2408
      %v2432 = vpack.c.b16 %v2411, %v2410
      %v2433 = vpack.c.b16 %v2413, %v2412
      %v2434 = vpack.c.b16 %v2415, %v2414
      %v2435 = vpack.c.b16 %v2417, %v2416
      %v2436 = vpack.c.b16 %v2419, %v2418
      %v2437 = vpack.c.b16 %v2421, %v2420
      %v2439 = vsel %vm1361, %v2422, 0
      %v2442 = vsel %vm1361, %v2423, 0
      %v2445 = vsel %vm1361, %v2424, 0
      %v2448 = vsel %vm1361, %v2425, 0
      %v2451 = vsel %vm1361, %v2426, 0
      %v2454 = vsel %vm1361, %v2427, 0
      %v2457 = vsel %vm1361, %v2428, 0
      %v2460 = vsel %vm1361, %v2429, 0
      %v2463 = vsel %vm1361, %v2430, 0
      %v2466 = vsel %vm1361, %v2431, 0
      %v2469 = vsel %vm1361, %v2432, 0
      %v2472 = vsel %vm1361, %v2433, 0
      %v2475 = vsel %vm1361, %v2434, 0
      %v2478 = vsel %vm1361, %v2435, 0
      %v2481 = vsel %vm1361, %v2436, 0
      %v2484 = vsel %vm1361, %v2437, 0
      %v2487 = vsel %vm1410, %v2357, 0
      %2489 = vmatprep.subr.bf16.mxu0 0
      %2490 = vmatpush1.bf16.msra.mxu0 0
      %2491 = vmatprep.subr.bf16.mxu0 0
      %2492 = vmatpush1.bf16.msra.mxu0 0
      %2493 = vmatprep.subr.bf16.mxu0 0
      %2494 = vmatpush1.bf16.msra.mxu0 0
      %2495 = vmatprep.subr.bf16.mxu0 0
      %2496 = vmatpush1.bf16.msra.mxu0 0
      %2497 = vmatprep.subr.bf16.mxu0 0
      %2498 = vmatpush1.bf16.msra.mxu0 0
      %2499 = vmatprep.subr.bf16.mxu0 0
      %2500 = vmatpush1.bf16.msra.mxu0 0
      %2501 = vmatprep.subr.bf16.mxu0 0
      %2502 = vmatpush1.bf16.msra.mxu0 0
      %2503 = vmatprep.subr.bf16.mxu0 0
      %2504 = vmatpush1.bf16.msra.mxu0 %v2487
      %2505 = vmatprep.subr.bf16.mxu0 0
      %2506 = vmatpush2.bf16.msra.mxu0 0
      %2507 = vmatprep.subr.bf16.mxu0 0
      %2508 = vmatpush2.bf16.msra.mxu0 0
      %2509 = vmatprep.subr.bf16.mxu0 0
      %2510 = vmatpush2.bf16.msra.mxu0 0
      %2511 = vmatprep.subr.bf16.mxu0 0
      %2512 = vmatpush2.bf16.msra.mxu0 0
      %2513 = vmatprep.subr.bf16.mxu0 0
      %2514 = vmatpush2.bf16.msra.mxu0 0
      %2515 = vmatprep.subr.bf16.mxu0 0
      %2516 = vmatpush2.bf16.msra.mxu0 0
      %2517 = vmatprep.subr.bf16.mxu0 0
      %2518 = vmatpush2.bf16.msra.mxu0 0
      %2519 = vmatprep.subr.bf16.mxu0 0
      %2520 = vmatpush2.bf16.msra.mxu0 0
      %2521 = vmatprep.mubr.bf16.mxu0 0
      %2522 = vmatmul.mubr.bf16.gmra.mxu0 %v2439
      %v2523 = vpop.f32.mrf.mxu0
      %v2524 = vadd.f32 0.0, %v2523
      %v2525 = vpop.f32.mrf.mxu0
      %v2526 = vpop.f32.mrf.mxu0
      %v2527 = vadd.f32 0.0, %v2526
      %v2528 = vpop.f32.mrf.mxu0
      %2529 = vmatprep.mubr.bf16.mxu0 0
      %2530 = vmatmul.mubr.bf16.gmra.mxu0 %v2442
      %v2531 = vpop.f32.mrf.mxu0
      %v2532 = vadd.f32 0.0, %v2531
      %v2533 = vpop.f32.mrf.mxu0
      %v2534 = vpop.f32.mrf.mxu0
      %v2535 = vadd.f32 0.0, %v2534
      %v2536 = vpop.f32.mrf.mxu0
      %2537 = vmatprep.mubr.bf16.mxu0 0
      %2538 = vmatmul.mubr.bf16.gmra.mxu0 %v2445
      %v2539 = vpop.f32.mrf.mxu0
      %v2540 = vadd.f32 0.0, %v2539
      %v2541 = vpop.f32.mrf.mxu0
      %v2542 = vpop.f32.mrf.mxu0
      %v2543 = vadd.f32 0.0, %v2542
      %v2544 = vpop.f32.mrf.mxu0
      %2545 = vmatprep.mubr.bf16.mxu0 0
      %2546 = vmatmul.mubr.bf16.gmra.mxu0 %v2448
      %v2547 = vpop.f32.mrf.mxu0
      %v2548 = vadd.f32 0.0, %v2547
      %v2549 = vpop.f32.mrf.mxu0
      %v2550 = vpop.f32.mrf.mxu0
      %v2551 = vadd.f32 0.0, %v2550
      %v2552 = vpop.f32.mrf.mxu0
      %2553 = vmatprep.mubr.bf16.mxu0 0
      %2554 = vmatmul.mubr.bf16.gmra.mxu0 %v2451
      %v2555 = vpop.f32.mrf.mxu0
      %v2556 = vadd.f32 0.0, %v2555
      %v2557 = vpop.f32.mrf.mxu0
      %v2558 = vpop.f32.mrf.mxu0
      %v2559 = vadd.f32 0.0, %v2558
      %v2560 = vpop.f32.mrf.mxu0
      %2561 = vmatprep.mubr.bf16.mxu0 0
      %2562 = vmatmul.mubr.bf16.gmra.mxu0 %v2454
      %v2563 = vpop.f32.mrf.mxu0
      %v2564 = vadd.f32 0.0, %v2563
      %v2565 = vpop.f32.mrf.mxu0
      %v2566 = vpop.f32.mrf.mxu0
      %v2567 = vadd.f32 0.0, %v2566
      %v2568 = vpop.f32.mrf.mxu0
      %2569 = vmatprep.mubr.bf16.mxu0 0
      %2570 = vmatmul.mubr.bf16.gmra.mxu0 %v2457
      %v2571 = vpop.f32.mrf.mxu0
      %v2572 = vadd.f32 0.0, %v2571
      %v2573 = vpop.f32.mrf.mxu0
      %v2574 = vpop.f32.mrf.mxu0
      %v2575 = vadd.f32 0.0, %v2574
      %v2576 = vpop.f32.mrf.mxu0
      %2577 = vmatprep.mubr.bf16.mxu0 0
      %2578 = vmatmul.mubr.bf16.gmra.mxu0 %v2460
      %v2579 = vpop.f32.mrf.mxu0
      %v2580 = vadd.f32 0.0, %v2579
      %v2581 = vpop.f32.mrf.mxu0
      %v2582 = vpop.f32.mrf.mxu0
      %v2583 = vadd.f32 0.0, %v2582
      %v2584 = vpop.f32.mrf.mxu0
      %2585 = vmatprep.mubr.bf16.mxu0 0
      %2586 = vmatmul.mubr.bf16.gmra.mxu0 %v2463
      %v2587 = vpop.f32.mrf.mxu0
      %v2588 = vadd.f32 0.0, %v2587
      %v2589 = vpop.f32.mrf.mxu0
      %v2590 = vpop.f32.mrf.mxu0
      %v2591 = vadd.f32 0.0, %v2590
      %v2592 = vpop.f32.mrf.mxu0
      %2593 = vmatprep.mubr.bf16.mxu0 0
      %2594 = vmatmul.mubr.bf16.gmra.mxu0 %v2466
      %v2595 = vpop.f32.mrf.mxu0
      %v2596 = vadd.f32 0.0, %v2595
      %v2597 = vpop.f32.mrf.mxu0
      %v2598 = vpop.f32.mrf.mxu0
      %v2599 = vadd.f32 0.0, %v2598
      %v2600 = vpop.f32.mrf.mxu0
      %2601 = vmatprep.mubr.bf16.mxu0 0
      %2602 = vmatmul.mubr.bf16.gmra.mxu0 %v2469
      %v2603 = vpop.f32.mrf.mxu0
      %v2604 = vadd.f32 0.0, %v2603
      %v2605 = vpop.f32.mrf.mxu0
      %v2606 = vpop.f32.mrf.mxu0
      %v2607 = vadd.f32 0.0, %v2606
      %v2608 = vpop.f32.mrf.mxu0
      %2609 = vmatprep.mubr.bf16.mxu0 0
      %2610 = vmatmul.mubr.bf16.gmra.mxu0 %v2472
      %v2611 = vpop.f32.mrf.mxu0
      %v2612 = vadd.f32 0.0, %v2611
      %v2613 = vpop.f32.mrf.mxu0
      %v2614 = vpop.f32.mrf.mxu0
      %v2615 = vadd.f32 0.0, %v2614
      %v2616 = vpop.f32.mrf.mxu0
      %2617 = vmatprep.mubr.bf16.mxu0 0
      %2618 = vmatmul.mubr.bf16.gmra.mxu0 %v2475
      %v2619 = vpop.f32.mrf.mxu0
      %v2620 = vadd.f32 0.0, %v2619
      %v2621 = vpop.f32.mrf.mxu0
      %v2622 = vpop.f32.mrf.mxu0
      %v2623 = vadd.f32 0.0, %v2622
      %v2624 = vpop.f32.mrf.mxu0
      %2625 = vmatprep.mubr.bf16.mxu0 0
      %2626 = vmatmul.mubr.bf16.gmra.mxu0 %v2478
      %v2627 = vpop.f32.mrf.mxu0
      %v2628 = vadd.f32 0.0, %v2627
      %v2629 = vpop.f32.mrf.mxu0
      %v2630 = vpop.f32.mrf.mxu0
      %v2631 = vadd.f32 0.0, %v2630
      %v2632 = vpop.f32.mrf.mxu0
      %2633 = vmatprep.mubr.bf16.mxu0 0
      %2634 = vmatmul.mubr.bf16.gmra.mxu0 %v2481
      %v2635 = vpop.f32.mrf.mxu0
      %v2636 = vadd.f32 0.0, %v2635
      %v2637 = vpop.f32.mrf.mxu0
      %v2638 = vpop.f32.mrf.mxu0
      %v2639 = vadd.f32 0.0, %v2638
      %v2640 = vpop.f32.mrf.mxu0
      %2641 = vmatprep.mubr.bf16.mxu0 0
      %2642 = vmatmul.mubr.bf16.gmra.mxu0 %v2484
      %v2643 = vpop.f32.mrf.mxu0
      %v2644 = vadd.f32 0.0, %v2643
      %v2645 = vpop.f32.mrf.mxu0
      %v2646 = vpop.f32.mrf.mxu0
      %v2647 = vadd.f32 0.0, %v2646
      %v2648 = vpop.f32.mrf.mxu0
      %2649 = vdwg.mxu0
      %v2650 = vadd.f32 %v2292, %v2524
      %v2651 = vadd.f32 %v2293, %v2527
      %v2652 = vadd.f32 %v2294, %v2532
      %v2653 = vadd.f32 %v2295, %v2535
      %v2654 = vadd.f32 %v2296, %v2540
      %v2655 = vadd.f32 %v2297, %v2543
      %v2656 = vadd.f32 %v2298, %v2548
      %v2657 = vadd.f32 %v2299, %v2551
      %v2658 = vadd.f32 %v2300, %v2556
      %v2659 = vadd.f32 %v2301, %v2559
      %v2660 = vadd.f32 %v2302, %v2564
      %v2661 = vadd.f32 %v2303, %v2567
      %v2662 = vadd.f32 %v2304, %v2572
      %v2663 = vadd.f32 %v2305, %v2575
      %v2664 = vadd.f32 %v2306, %v2580
      %v2665 = vadd.f32 %v2307, %v2583
      %v2666 = vadd.f32 %v2308, %v2588
      %v2667 = vadd.f32 %v2309, %v2591
      %v2668 = vadd.f32 %v2310, %v2596
      %v2669 = vadd.f32 %v2311, %v2599
      %v2670 = vadd.f32 %v2312, %v2604
      %v2671 = vadd.f32 %v2313, %v2607
      %v2672 = vadd.f32 %v2314, %v2612
      %v2673 = vadd.f32 %v2315, %v2615
      %v2674 = vadd.f32 %v2316, %v2620
      %v2675 = vadd.f32 %v2317, %v2623
      %v2676 = vadd.f32 %v2318, %v2628
      %v2677 = vadd.f32 %v2319, %v2631
      %v2678 = vadd.f32 %v2320, %v2636
      %v2679 = vadd.f32 %v2321, %v2639
      %v2680 = vadd.f32 %v2322, %v2644
      %v2681 = vadd.f32 %v2323, %v2647
      %v2682 = vld [vmem:[%s756] sm:$0xf]
      %v2683 = vld [vmem:[%s756 + $0x4] sm:$0xf]
      %v2684 = vld [vmem:[%s756 + $0x8] sm:$0x1]
      %v2685 = vld [vmem:[%s756 + $0xc] sm:$0xf]
      %v2686 = vld [vmem:[%s756 + $0x10] sm:$0xf]
      %v2687 = vld [vmem:[%s756 + $0x14] sm:$0x1]
      %v2688 = vld [vmem:[%s756 + $0x18] sm:$0xf]
      %v2689 = vld [vmem:[%s756 + $0x1c] sm:$0xf]
      %v2690 = vld [vmem:[%s756 + $0x20] sm:$0x1]
      %v2691 = vld [vmem:[%s756 + $0x24] sm:$0xf]
      %v2692 = vld [vmem:[%s756 + $0x28] sm:$0xf]
      %v2693 = vld [vmem:[%s756 + $0x2c] sm:$0x1]
      %v2694 = vld [vmem:[%s756 + $0x30] sm:$0xf]
      %v2695 = vld [vmem:[%s756 + $0x34] sm:$0xf]
      %v2696 = vld [vmem:[%s756 + $0x38] sm:$0x1]
      %v2697 = vld [vmem:[%s756 + $0x3c] sm:$0xf]
      %v2698 = vld [vmem:[%s756 + $0x40] sm:$0xf]
      %v2699 = vld [vmem:[%s756 + $0x44] sm:$0x1]
      %v2700 = vld [vmem:[%s756 + $0x48] sm:$0xf]
      %v2701 = vld [vmem:[%s756 + $0x4c] sm:$0xf]
      %v2702 = vld [vmem:[%s756 + $0x50] sm:$0x1]
      %v2703 = vld [vmem:[%s756 + $0x54] sm:$0xf]
      %v2704 = vld [vmem:[%s756 + $0x58] sm:$0xf]
      %v2705 = vld [vmem:[%s756 + $0x5c] sm:$0x1]
      %v2706 = vld [vmem:[%s756 + $0x60] sm:$0xf]
      %v2707 = vld [vmem:[%s756 + $0x64] sm:$0xf]
      %v2708 = vld [vmem:[%s756 + $0x68] sm:$0x1]
      %v2709 = vld [vmem:[%s756 + $0x6c] sm:$0xf]
      %v2710 = vld [vmem:[%s756 + $0x70] sm:$0xf]
      %v2711 = vld [vmem:[%s756 + $0x74] sm:$0x1]
      %v2712 = vld [vmem:[%s756 + $0x78] sm:$0xf]
      %v2713 = vld [vmem:[%s756 + $0x7c] sm:$0xf]
      %v2714 = vld [vmem:[%s756 + $0x80] sm:$0x1]
      %v2715 = vld [vmem:[%s756 + $0x84] sm:$0xf]
      %v2716 = vld [vmem:[%s756 + $0x88] sm:$0xf]
      %v2717 = vld [vmem:[%s756 + $0x8c] sm:$0x1]
      %v2718 = vld [vmem:[%s756 + $0x90] sm:$0xf]
      %v2719 = vld [vmem:[%s756 + $0x94] sm:$0xf]
      %v2720 = vld [vmem:[%s756 + $0x98] sm:$0x1]
      %v2721 = vld [vmem:[%s756 + $0x9c] sm:$0xf]
      %v2722 = vld [vmem:[%s756 + $0xa0] sm:$0xf]
      %v2723 = vld [vmem:[%s756 + $0xa4] sm:$0x1]
      %v2724 = vld [vmem:[%s756 + $0xa8] sm:$0xf]
      %v2725 = vld [vmem:[%s756 + $0xac] sm:$0xf]
      %v2726 = vld [vmem:[%s756 + $0xb0] sm:$0x1]
      %v2727 = vld [vmem:[%s756 + $0xb4] sm:$0xf]
      %v2728 = vld [vmem:[%s756 + $0xb8] sm:$0xf]
      %v2729 = vld [vmem:[%s756 + $0xbc] sm:$0x1]
      %v2731 = vshrl.u32 %v2682, 16
      %v2733 = vrot.slane %v2731, 4
      %v2734 = vshll.u32 %v2682, 16
      %v2736 = vrot.slane %v2734, 5
      %v2737 = vor.u32 %v2733, %v2736
      %v2738 = vrot.slane %v2737, 4
      %v2740 = vshll.u32 %v2683, 16
      %v2742 = vrot.slane %v2740, 5
      %v2743 = vsel %vm926, %v2738, %v2742
      %v2744 = vshrl.u32 %v2683, 16
      %v2746 = vrot.slane %v2744, 4
      %v2747 = vor.u32 %v2746, %v2742
      %v2748 = vrot.slane %v2747, 4
      %v2750 = vshll.u32 %v2684, 16
      %v2752 = vrot.slane %v2750, 5
      %v2753 = vsel %vm926, %v2748, %v2752
      %v2755 = vshrl.u32 %v2685, 16
      %v2757 = vrot.slane %v2755, 4
      %v2758 = vshll.u32 %v2685, 16
      %v2760 = vrot.slane %v2758, 5
      %v2761 = vor.u32 %v2757, %v2760
      %v2762 = vrot.slane %v2761, 4
      %v2764 = vshll.u32 %v2686, 16
      %v2766 = vrot.slane %v2764, 5
      %v2767 = vsel %vm926, %v2762, %v2766
      %v2768 = vshrl.u32 %v2686, 16
      %v2770 = vrot.slane %v2768, 4
      %v2771 = vor.u32 %v2770, %v2766
      %v2772 = vrot.slane %v2771, 4
      %v2774 = vshll.u32 %v2687, 16
      %v2776 = vrot.slane %v2774, 5
      %v2777 = vsel %vm926, %v2772, %v2776
      %v2779 = vshrl.u32 %v2688, 16
      %v2781 = vrot.slane %v2779, 4
      %v2782 = vshll.u32 %v2688, 16
      %v2784 = vrot.slane %v2782, 5
      %v2785 = vor.u32 %v2781, %v2784
      %v2786 = vrot.slane %v2785, 4
      %v2788 = vshll.u32 %v2689, 16
      %v2790 = vrot.slane %v2788, 5
      %v2791 = vsel %vm926, %v2786, %v2790
      %v2792 = vshrl.u32 %v2689, 16
      %v2794 = vrot.slane %v2792, 4
      %v2795 = vor.u32 %v2794, %v2790
      %v2796 = vrot.slane %v2795, 4
      %v2798 = vshll.u32 %v2690, 16
      %v2800 = vrot.slane %v2798, 5
      %v2801 = vsel %vm926, %v2796, %v2800
      %v2803 = vshrl.u32 %v2691, 16
      %v2805 = vrot.slane %v2803, 4
      %v2806 = vshll.u32 %v2691, 16
      %v2808 = vrot.slane %v2806, 5
      %v2809 = vor.u32 %v2805, %v2808
      %v2810 = vrot.slane %v2809, 4
      %v2812 = vshll.u32 %v2692, 16
      %v2814 = vrot.slane %v2812, 5
      %v2815 = vsel %vm926, %v2810, %v2814
      %v2816 = vshrl.u32 %v2692, 16
      %v2818 = vrot.slane %v2816, 4
      %v2819 = vor.u32 %v2818, %v2814
      %v2820 = vrot.slane %v2819, 4
      %v2822 = vshll.u32 %v2693, 16
      %v2824 = vrot.slane %v2822, 5
      %v2825 = vsel %vm926, %v2820, %v2824
      %v2827 = vshrl.u32 %v2694, 16
      %v2829 = vrot.slane %v2827, 4
      %v2830 = vshll.u32 %v2694, 16
      %v2832 = vrot.slane %v2830, 5
      %v2833 = vor.u32 %v2829, %v2832
      %v2834 = vrot.slane %v2833, 4
      %v2836 = vshll.u32 %v2695, 16
      %v2838 = vrot.slane %v2836, 5
      %v2839 = vsel %vm926, %v2834, %v2838
      %v2840 = vshrl.u32 %v2695, 16
      %v2842 = vrot.slane %v2840, 4
      %v2843 = vor.u32 %v2842, %v2838
      %v2844 = vrot.slane %v2843, 4
      %v2846 = vshll.u32 %v2696, 16
      %v2848 = vrot.slane %v2846, 5
      %v2849 = vsel %vm926, %v2844, %v2848
      %v2851 = vshrl.u32 %v2697, 16
      %v2853 = vrot.slane %v2851, 4
      %v2854 = vshll.u32 %v2697, 16
      %v2856 = vrot.slane %v2854, 5
      %v2857 = vor.u32 %v2853, %v2856
      %v2858 = vrot.slane %v2857, 4
      %v2860 = vshll.u32 %v2698, 16
      %v2862 = vrot.slane %v2860, 5
      %v2863 = vsel %vm926, %v2858, %v2862
      %v2864 = vshrl.u32 %v2698, 16
      %v2866 = vrot.slane %v2864, 4
      %v2867 = vor.u32 %v2866, %v2862
      %v2868 = vrot.slane %v2867, 4
      %v2870 = vshll.u32 %v2699, 16
      %v2872 = vrot.slane %v2870, 5
      %v2873 = vsel %vm926, %v2868, %v2872
      %v2875 = vshrl.u32 %v2700, 16
      %v2877 = vrot.slane %v2875, 4
      %v2878 = vshll.u32 %v2700, 16
      %v2880 = vrot.slane %v2878, 5
      %v2881 = vor.u32 %v2877, %v2880
      %v2882 = vrot.slane %v2881, 4
      %v2884 = vshll.u32 %v2701, 16
      %v2886 = vrot.slane %v2884, 5
      %v2887 = vsel %vm926, %v2882, %v2886
      %v2888 = vshrl.u32 %v2701, 16
      %v2890 = vrot.slane %v2888, 4
      %v2891 = vor.u32 %v2890, %v2886
      %v2892 = vrot.slane %v2891, 4
      %v2894 = vshll.u32 %v2702, 16
      %v2896 = vrot.slane %v2894, 5
      %v2897 = vsel %vm926, %v2892, %v2896
      %v2899 = vshrl.u32 %v2703, 16
      %v2901 = vrot.slane %v2899, 4
      %v2902 = vshll.u32 %v2703, 16
      %v2904 = vrot.slane %v2902, 5
      %v2905 = vor.u32 %v2901, %v2904
      %v2906 = vrot.slane %v2905, 4
      %v2908 = vshll.u32 %v2704, 16
      %v2910 = vrot.slane %v2908, 5
      %v2911 = vsel %vm926, %v2906, %v2910
      %v2912 = vshrl.u32 %v2704, 16
      %v2914 = vrot.slane %v2912, 4
      %v2915 = vor.u32 %v2914, %v2910
      %v2916 = vrot.slane %v2915, 4
      %v2918 = vshll.u32 %v2705, 16
      %v2920 = vrot.slane %v2918, 5
      %v2921 = vsel %vm926, %v2916, %v2920
      %v2923 = vshrl.u32 %v2706, 16
      %v2925 = vrot.slane %v2923, 4
      %v2926 = vshll.u32 %v2706, 16
      %v2928 = vrot.slane %v2926, 5
      %v2929 = vor.u32 %v2925, %v2928
      %v2930 = vrot.slane %v2929, 4
      %v2932 = vshll.u32 %v2707, 16
      %v2934 = vrot.slane %v2932, 5
      %v2935 = vsel %vm926, %v2930, %v2934
      %v2936 = vshrl.u32 %v2707, 16
      %v2938 = vrot.slane %v2936, 4
      %v2939 = vor.u32 %v2938, %v2934
      %v2940 = vrot.slane %v2939, 4
      %v2942 = vshll.u32 %v2708, 16
      %v2944 = vrot.slane %v2942, 5
      %v2945 = vsel %vm926, %v2940, %v2944
      %v2947 = vshrl.u32 %v2709, 16
      %v2949 = vrot.slane %v2947, 4
      %v2950 = vshll.u32 %v2709, 16
      %v2952 = vrot.slane %v2950, 5
      %v2953 = vor.u32 %v2949, %v2952
      %v2954 = vrot.slane %v2953, 4
      %v2956 = vshll.u32 %v2710, 16
      %v2958 = vrot.slane %v2956, 5
      %v2959 = vsel %vm926, %v2954, %v2958
      %v2960 = vshrl.u32 %v2710, 16
      %v2962 = vrot.slane %v2960, 4
      %v2963 = vor.u32 %v2962, %v2958
      %v2964 = vrot.slane %v2963, 4
      %v2966 = vshll.u32 %v2711, 16
      %v2968 = vrot.slane %v2966, 5
      %v2969 = vsel %vm926, %v2964, %v2968
      %v2971 = vshrl.u32 %v2712, 16
      %v2973 = vrot.slane %v2971, 4
      %v2974 = vshll.u32 %v2712, 16
      %v2976 = vrot.slane %v2974, 5
      %v2977 = vor.u32 %v2973, %v2976
      %v2978 = vrot.slane %v2977, 4
      %v2980 = vshll.u32 %v2713, 16
      %v2982 = vrot.slane %v2980, 5
      %v2983 = vsel %vm926, %v2978, %v2982
      %v2984 = vshrl.u32 %v2713, 16
      %v2986 = vrot.slane %v2984, 4
      %v2987 = vor.u32 %v2986, %v2982
      %v2988 = vrot.slane %v2987, 4
      %v2990 = vshll.u32 %v2714, 16
      %v2992 = vrot.slane %v2990, 5
      %v2993 = vsel %vm926, %v2988, %v2992
      %v2995 = vshrl.u32 %v2715, 16
      %v2997 = vrot.slane %v2995, 4
      %v2998 = vshll.u32 %v2715, 16
      %v3000 = vrot.slane %v2998, 5
      %v3001 = vor.u32 %v2997, %v3000
      %v3002 = vrot.slane %v3001, 4
      %v3004 = vshll.u32 %v2716, 16
      %v3006 = vrot.slane %v3004, 5
      %v3007 = vsel %vm926, %v3002, %v3006
      %v3008 = vshrl.u32 %v2716, 16
      %v3010 = vrot.slane %v3008, 4
      %v3011 = vor.u32 %v3010, %v3006
      %v3012 = vrot.slane %v3011, 4
      %v3014 = vshll.u32 %v2717, 16
      %v3016 = vrot.slane %v3014, 5
      %v3017 = vsel %vm926, %v3012, %v3016
      %v3019 = vshrl.u32 %v2718, 16
      %v3021 = vrot.slane %v3019, 4
      %v3022 = vshll.u32 %v2718, 16
      %v3024 = vrot.slane %v3022, 5
      %v3025 = vor.u32 %v3021, %v3024
      %v3026 = vrot.slane %v3025, 4
      %v3028 = vshll.u32 %v2719, 16
      %v3030 = vrot.slane %v3028, 5
      %v3031 = vsel %vm926, %v3026, %v3030
      %v3032 = vshrl.u32 %v2719, 16
      %v3034 = vrot.slane %v3032, 4
      %v3035 = vor.u32 %v3034, %v3030
      %v3036 = vrot.slane %v3035, 4
      %v3038 = vshll.u32 %v2720, 16
      %v3040 = vrot.slane %v3038, 5
      %v3041 = vsel %vm926, %v3036, %v3040
      %v3043 = vshrl.u32 %v2721, 16
      %v3045 = vrot.slane %v3043, 4
      %v3046 = vshll.u32 %v2721, 16
      %v3048 = vrot.slane %v3046, 5
      %v3049 = vor.u32 %v3045, %v3048
      %v3050 = vrot.slane %v3049, 4
      %v3052 = vshll.u32 %v2722, 16
      %v3054 = vrot.slane %v3052, 5
      %v3055 = vsel %vm926, %v3050, %v3054
      %v3056 = vshrl.u32 %v2722, 16
      %v3058 = vrot.slane %v3056, 4
      %v3059 = vor.u32 %v3058, %v3054
      %v3060 = vrot.slane %v3059, 4
      %v3062 = vshll.u32 %v2723, 16
      %v3064 = vrot.slane %v3062, 5
      %v3065 = vsel %vm926, %v3060, %v3064
      %v3067 = vshrl.u32 %v2724, 16
      %v3069 = vrot.slane %v3067, 4
      %v3070 = vshll.u32 %v2724, 16
      %v3072 = vrot.slane %v3070, 5
      %v3073 = vor.u32 %v3069, %v3072
      %v3074 = vrot.slane %v3073, 4
      %v3076 = vshll.u32 %v2725, 16
      %v3078 = vrot.slane %v3076, 5
      %v3079 = vsel %vm926, %v3074, %v3078
      %v3080 = vshrl.u32 %v2725, 16
      %v3082 = vrot.slane %v3080, 4
      %v3083 = vor.u32 %v3082, %v3078
      %v3084 = vrot.slane %v3083, 4
      %v3086 = vshll.u32 %v2726, 16
      %v3088 = vrot.slane %v3086, 5
      %v3089 = vsel %vm926, %v3084, %v3088
      %v3091 = vshrl.u32 %v2727, 16
      %v3093 = vrot.slane %v3091, 4
      %v3094 = vshll.u32 %v2727, 16
      %v3096 = vrot.slane %v3094, 5
      %v3097 = vor.u32 %v3093, %v3096
      %v3098 = vrot.slane %v3097, 4
      %v3100 = vshll.u32 %v2728, 16
      %v3102 = vrot.slane %v3100, 5
      %v3103 = vsel %vm926, %v3098, %v3102
      %v3104 = vshrl.u32 %v2728, 16
      %v3106 = vrot.slane %v3104, 4
      %v3107 = vor.u32 %v3106, %v3102
      %v3108 = vrot.slane %v3107, 4
      %v3110 = vshll.u32 %v2729, 16
      %v3112 = vrot.slane %v3110, 5
      %v3113 = vsel %vm926, %v3108, %v3112
      %s3114 = scalar_lea.vmem %s1, 8
      %v3115 = vld [vmem:[%s3114] sm:$0x3]
      %v3116 = vunpack.c.l.b16 %v2743
      %v3117 = vunpack.c.l.b16 %v2753
      %v3118 = vunpack.c.l.b16 %v2767
      %v3119 = vunpack.c.l.b16 %v2777
      %v3120 = vunpack.c.l.b16 %v2791
      %v3121 = vunpack.c.l.b16 %v2801
      %v3122 = vunpack.c.l.b16 %v2815
      %v3123 = vunpack.c.l.b16 %v2825
      %v3124 = vunpack.c.l.b16 %v2839
      %v3125 = vunpack.c.l.b16 %v2849
      %v3126 = vunpack.c.l.b16 %v2863
      %v3127 = vunpack.c.l.b16 %v2873
      %v3128 = vunpack.c.l.b16 %v2887
      %v3129 = vunpack.c.l.b16 %v2897
      %v3130 = vunpack.c.l.b16 %v2911
      %v3131 = vunpack.c.l.b16 %v2921
      %v3132 = vunpack.c.l.b16 %v2935
      %v3133 = vunpack.c.l.b16 %v2945
      %v3134 = vunpack.c.l.b16 %v2959
      %v3135 = vunpack.c.l.b16 %v2969
      %v3136 = vunpack.c.l.b16 %v2983
      %v3137 = vunpack.c.l.b16 %v2993
      %v3138 = vunpack.c.l.b16 %v3007
      %v3139 = vunpack.c.l.b16 %v3017
      %v3140 = vunpack.c.l.b16 %v3031
      %v3141 = vunpack.c.l.b16 %v3041
      %v3142 = vunpack.c.l.b16 %v3055
      %v3143 = vunpack.c.l.b16 %v3065
      %v3144 = vunpack.c.l.b16 %v3079
      %v3145 = vunpack.c.l.b16 %v3089
      %v3146 = vunpack.c.l.b16 %v3103
      %v3147 = vunpack.c.l.b16 %v3113
      %v3148 = vpack.c.b16 %v3117, %v3116
      %v3149 = vpack.c.b16 %v3119, %v3118
      %v3150 = vpack.c.b16 %v3121, %v3120
      %v3151 = vpack.c.b16 %v3123, %v3122
      %v3152 = vpack.c.b16 %v3125, %v3124
      %v3153 = vpack.c.b16 %v3127, %v3126
      %v3154 = vpack.c.b16 %v3129, %v3128
      %v3155 = vpack.c.b16 %v3131, %v3130
      %v3156 = vpack.c.b16 %v3133, %v3132
      %v3157 = vpack.c.b16 %v3135, %v3134
      %v3158 = vpack.c.b16 %v3137, %v3136
      %v3159 = vpack.c.b16 %v3139, %v3138
      %v3160 = vpack.c.b16 %v3141, %v3140
      %v3161 = vpack.c.b16 %v3143, %v3142
      %v3162 = vpack.c.b16 %v3145, %v3144
      %v3163 = vpack.c.b16 %v3147, %v3146
      %v3165 = vsel %vm1361, %v3148, 0
      %v3168 = vsel %vm1361, %v3149, 0
      %v3171 = vsel %vm1361, %v3150, 0
      %v3174 = vsel %vm1361, %v3151, 0
      %v3177 = vsel %vm1361, %v3152, 0
      %v3180 = vsel %vm1361, %v3153, 0
      %v3183 = vsel %vm1361, %v3154, 0
      %v3186 = vsel %vm1361, %v3155, 0
      %v3189 = vsel %vm1361, %v3156, 0
      %v3192 = vsel %vm1361, %v3157, 0
      %v3195 = vsel %vm1361, %v3158, 0
      %v3198 = vsel %vm1361, %v3159, 0
      %v3201 = vsel %vm1361, %v3160, 0
      %v3204 = vsel %vm1361, %v3161, 0
      %v3207 = vsel %vm1361, %v3162, 0
      %v3210 = vsel %vm1361, %v3163, 0
      %v3213 = vsel %vm1410, %v3115, 0
      %3215 = vmatprep.subr.bf16.mxu0 0
      %3216 = vmatpush1.bf16.msra.mxu0 0
      %3217 = vmatprep.subr.bf16.mxu0 0
      %3218 = vmatpush1.bf16.msra.mxu0 0
      %3219 = vmatprep.subr.bf16.mxu0 0
      %3220 = vmatpush1.bf16.msra.mxu0 0
      %3221 = vmatprep.subr.bf16.mxu0 0
      %3222 = vmatpush1.bf16.msra.mxu0 0
      %3223 = vmatprep.subr.bf16.mxu0 0
      %3224 = vmatpush1.bf16.msra.mxu0 0
      %3225 = vmatprep.subr.bf16.mxu0 0
      %3226 = vmatpush1.bf16.msra.mxu0 0
      %3227 = vmatprep.subr.bf16.mxu0 0
      %3228 = vmatpush1.bf16.msra.mxu0 0
      %3229 = vmatprep.subr.bf16.mxu0 0
      %3230 = vmatpush1.bf16.msra.mxu0 %v3213
      %3231 = vmatprep.subr.bf16.mxu0 0
      %3232 = vmatpush2.bf16.msra.mxu0 0
      %3233 = vmatprep.subr.bf16.mxu0 0
      %3234 = vmatpush2.bf16.msra.mxu0 0
      %3235 = vmatprep.subr.bf16.mxu0 0
      %3236 = vmatpush2.bf16.msra.mxu0 0
      %3237 = vmatprep.subr.bf16.mxu0 0
      %3238 = vmatpush2.bf16.msra.mxu0 0
      %3239 = vmatprep.subr.bf16.mxu0 0
      %3240 = vmatpush2.bf16.msra.mxu0 0
      %3241 = vmatprep.subr.bf16.mxu0 0
      %3242 = vmatpush2.bf16.msra.mxu0 0
      %3243 = vmatprep.subr.bf16.mxu0 0
      %3244 = vmatpush2.bf16.msra.mxu0 0
      %3245 = vmatprep.subr.bf16.mxu0 0
      %3246 = vmatpush2.bf16.msra.mxu0 0
      %3247 = vmatprep.mubr.bf16.mxu0 0
      %3248 = vmatmul.mubr.bf16.gmra.mxu0 %v3165
      %v3249 = vpop.f32.mrf.mxu0
      %v3250 = vadd.f32 0.0, %v3249
      %v3251 = vpop.f32.mrf.mxu0
      %v3252 = vpop.f32.mrf.mxu0
      %v3253 = vadd.f32 0.0, %v3252
      %v3254 = vpop.f32.mrf.mxu0
      %3255 = vmatprep.mubr.bf16.mxu0 0
      %3256 = vmatmul.mubr.bf16.gmra.mxu0 %v3168
      %v3257 = vpop.f32.mrf.mxu0
      %v3258 = vadd.f32 0.0, %v3257
      %v3259 = vpop.f32.mrf.mxu0
      %v3260 = vpop.f32.mrf.mxu0
      %v3261 = vadd.f32 0.0, %v3260
      %v3262 = vpop.f32.mrf.mxu0
      %3263 = vmatprep.mubr.bf16.mxu0 0
      %3264 = vmatmul.mubr.bf16.gmra.mxu0 %v3171
      %v3265 = vpop.f32.mrf.mxu0
      %v3266 = vadd.f32 0.0, %v3265
      %v3267 = vpop.f32.mrf.mxu0
      %v3268 = vpop.f32.mrf.mxu0
      %v3269 = vadd.f32 0.0, %v3268
      %v3270 = vpop.f32.mrf.mxu0
      %3271 = vmatprep.mubr.bf16.mxu0 0
      %3272 = vmatmul.mubr.bf16.gmra.mxu0 %v3174
      %v3273 = vpop.f32.mrf.mxu0
      %v3274 = vadd.f32 0.0, %v3273
      %v3275 = vpop.f32.mrf.mxu0
      %v3276 = vpop.f32.mrf.mxu0
      %v3277 = vadd.f32 0.0, %v3276
      %v3278 = vpop.f32.mrf.mxu0
      %3279 = vmatprep.mubr.bf16.mxu0 0
      %3280 = vmatmul.mubr.bf16.gmra.mxu0 %v3177
      %v3281 = vpop.f32.mrf.mxu0
      %v3282 = vadd.f32 0.0, %v3281
      %v3283 = vpop.f32.mrf.mxu0
      %v3284 = vpop.f32.mrf.mxu0
      %v3285 = vadd.f32 0.0, %v3284
      %v3286 = vpop.f32.mrf.mxu0
      %3287 = vmatprep.mubr.bf16.mxu0 0
      %3288 = vmatmul.mubr.bf16.gmra.mxu0 %v3180
      %v3289 = vpop.f32.mrf.mxu0
      %v3290 = vadd.f32 0.0, %v3289
      %v3291 = vpop.f32.mrf.mxu0
      %v3292 = vpop.f32.mrf.mxu0
      %v3293 = vadd.f32 0.0, %v3292
      %v3294 = vpop.f32.mrf.mxu0
      %3295 = vmatprep.mubr.bf16.mxu0 0
      %3296 = vmatmul.mubr.bf16.gmra.mxu0 %v3183
      %v3297 = vpop.f32.mrf.mxu0
      %v3298 = vadd.f32 0.0, %v3297
      %v3299 = vpop.f32.mrf.mxu0
      %v3300 = vpop.f32.mrf.mxu0
      %v3301 = vadd.f32 0.0, %v3300
      %v3302 = vpop.f32.mrf.mxu0
      %3303 = vmatprep.mubr.bf16.mxu0 0
      %3304 = vmatmul.mubr.bf16.gmra.mxu0 %v3186
      %v3305 = vpop.f32.mrf.mxu0
      %v3306 = vadd.f32 0.0, %v3305
      %v3307 = vpop.f32.mrf.mxu0
      %v3308 = vpop.f32.mrf.mxu0
      %v3309 = vadd.f32 0.0, %v3308
      %v3310 = vpop.f32.mrf.mxu0
      %3311 = vmatprep.mubr.bf16.mxu0 0
      %3312 = vmatmul.mubr.bf16.gmra.mxu0 %v3189
      %v3313 = vpop.f32.mrf.mxu0
      %v3314 = vadd.f32 0.0, %v3313
      %v3315 = vpop.f32.mrf.mxu0
      %v3316 = vpop.f32.mrf.mxu0
      %v3317 = vadd.f32 0.0, %v3316
      %v3318 = vpop.f32.mrf.mxu0
      %3319 = vmatprep.mubr.bf16.mxu0 0
      %3320 = vmatmul.mubr.bf16.gmra.mxu0 %v3192
      %v3321 = vpop.f32.mrf.mxu0
      %v3322 = vadd.f32 0.0, %v3321
      %v3323 = vpop.f32.mrf.mxu0
      %v3324 = vpop.f32.mrf.mxu0
      %v3325 = vadd.f32 0.0, %v3324
      %v3326 = vpop.f32.mrf.mxu0
      %3327 = vmatprep.mubr.bf16.mxu0 0
      %3328 = vmatmul.mubr.bf16.gmra.mxu0 %v3195
      %v3329 = vpop.f32.mrf.mxu0
      %v3330 = vadd.f32 0.0, %v3329
      %v3331 = vpop.f32.mrf.mxu0
      %v3332 = vpop.f32.mrf.mxu0
      %v3333 = vadd.f32 0.0, %v3332
      %v3334 = vpop.f32.mrf.mxu0
      %3335 = vmatprep.mubr.bf16.mxu0 0
      %3336 = vmatmul.mubr.bf16.gmra.mxu0 %v3198
      %v3337 = vpop.f32.mrf.mxu0
      %v3338 = vadd.f32 0.0, %v3337
      %v3339 = vpop.f32.mrf.mxu0
      %v3340 = vpop.f32.mrf.mxu0
      %v3341 = vadd.f32 0.0, %v3340
      %v3342 = vpop.f32.mrf.mxu0
      %3343 = vmatprep.mubr.bf16.mxu0 0
      %3344 = vmatmul.mubr.bf16.gmra.mxu0 %v3201
      %v3345 = vpop.f32.mrf.mxu0
      %v3346 = vadd.f32 0.0, %v3345
      %v3347 = vpop.f32.mrf.mxu0
      %v3348 = vpop.f32.mrf.mxu0
      %v3349 = vadd.f32 0.0, %v3348
      %v3350 = vpop.f32.mrf.mxu0
      %3351 = vmatprep.mubr.bf16.mxu0 0
      %3352 = vmatmul.mubr.bf16.gmra.mxu0 %v3204
      %v3353 = vpop.f32.mrf.mxu0
      %v3354 = vadd.f32 0.0, %v3353
      %v3355 = vpop.f32.mrf.mxu0
      %v3356 = vpop.f32.mrf.mxu0
      %v3357 = vadd.f32 0.0, %v3356
      %v3358 = vpop.f32.mrf.mxu0
      %3359 = vmatprep.mubr.bf16.mxu0 0
      %3360 = vmatmul.mubr.bf16.gmra.mxu0 %v3207
      %v3361 = vpop.f32.mrf.mxu0
      %v3362 = vadd.f32 0.0, %v3361
      %v3363 = vpop.f32.mrf.mxu0
      %v3364 = vpop.f32.mrf.mxu0
      %v3365 = vadd.f32 0.0, %v3364
      %v3366 = vpop.f32.mrf.mxu0
      %3367 = vmatprep.mubr.bf16.mxu0 0
      %3368 = vmatmul.mubr.bf16.gmra.mxu0 %v3210
      %v3369 = vpop.f32.mrf.mxu0
      %v3370 = vadd.f32 0.0, %v3369
      %v3371 = vpop.f32.mrf.mxu0
      %v3372 = vpop.f32.mrf.mxu0
      %v3373 = vadd.f32 0.0, %v3372
      %v3374 = vpop.f32.mrf.mxu0
      %3375 = vdwg.mxu0
      %v3376 = vadd.f32 %v2650, %v3250
      %v3377 = vadd.f32 %v2651, %v3253
      %v3378 = vadd.f32 %v2652, %v3258
      %v3379 = vadd.f32 %v2653, %v3261
      %v3380 = vadd.f32 %v2654, %v3266
      %v3381 = vadd.f32 %v2655, %v3269
      %v3382 = vadd.f32 %v2656, %v3274
      %v3383 = vadd.f32 %v2657, %v3277
      %v3384 = vadd.f32 %v2658, %v3282
      %v3385 = vadd.f32 %v2659, %v3285
      %v3386 = vadd.f32 %v2660, %v3290
      %v3387 = vadd.f32 %v2661, %v3293
      %v3388 = vadd.f32 %v2662, %v3298
      %v3389 = vadd.f32 %v2663, %v3301
      %v3390 = vadd.f32 %v2664, %v3306
      %v3391 = vadd.f32 %v2665, %v3309
      %v3392 = vadd.f32 %v2666, %v3314
      %v3393 = vadd.f32 %v2667, %v3317
      %v3394 = vadd.f32 %v2668, %v3322
      %v3395 = vadd.f32 %v2669, %v3325
      %v3396 = vadd.f32 %v2670, %v3330
      %v3397 = vadd.f32 %v2671, %v3333
      %v3398 = vadd.f32 %v2672, %v3338
      %v3399 = vadd.f32 %v2673, %v3341
      %v3400 = vadd.f32 %v2674, %v3346
      %v3401 = vadd.f32 %v2675, %v3349
      %v3402 = vadd.f32 %v2676, %v3354
      %v3403 = vadd.f32 %v2677, %v3357
      %v3404 = vadd.f32 %v2678, %v3362
      %v3405 = vadd.f32 %v2679, %v3365
      %v3406 = vadd.f32 %v2680, %v3370
      %v3407 = vadd.f32 %v2681, %v3373
      %v3408 = vld [vmem:[%s756] sm:$0xe]
      %v3409 = vld [vmem:[%s756 + $0xc] sm:$0xe]
      %v3410 = vld [vmem:[%s756 + $0x18] sm:$0xe]
      %v3411 = vld [vmem:[%s756 + $0x24] sm:$0xe]
      %v3412 = vld [vmem:[%s756 + $0x30] sm:$0xe]
      %v3413 = vld [vmem:[%s756 + $0x3c] sm:$0xe]
      %v3414 = vld [vmem:[%s756 + $0x48] sm:$0xe]
      %v3415 = vld [vmem:[%s756 + $0x54] sm:$0xe]
      %v3416 = vld [vmem:[%s756 + $0x60] sm:$0xe]
      %v3417 = vld [vmem:[%s756 + $0x6c] sm:$0xe]
      %v3418 = vld [vmem:[%s756 + $0x78] sm:$0xe]
      %v3419 = vld [vmem:[%s756 + $0x84] sm:$0xe]
      %v3420 = vld [vmem:[%s756 + $0x90] sm:$0xe]
      %v3421 = vld [vmem:[%s756 + $0x9c] sm:$0xe]
      %v3422 = vld [vmem:[%s756 + $0xa8] sm:$0xe]
      %v3423 = vld [vmem:[%s756 + $0xb4] sm:$0xe]
      %v3472 = vrot.slane %v3408, 5
      %v3473 = vrot.slane %v3472, 4
      %v3474 = vrot.slane %v2683, 5
      %v3475 = vsel %vm1917, %v3473, %v3474
      %v3476 = vrot.slane %v3474, 4
      %v3477 = vrot.slane %v2684, 5
      %v3478 = vsel %vm1917, %v3476, %v3477
      %v3479 = vrot.slane %v3409, 5
      %v3480 = vrot.slane %v3479, 4
      %v3481 = vrot.slane %v2686, 5
      %v3482 = vsel %vm1917, %v3480, %v3481
      %v3483 = vrot.slane %v3481, 4
      %v3484 = vrot.slane %v2687, 5
      %v3485 = vsel %vm1917, %v3483, %v3484
      %v3486 = vrot.slane %v3410, 5
      %v3487 = vrot.slane %v3486, 4
      %v3488 = vrot.slane %v2689, 5
      %v3489 = vsel %vm1917, %v3487, %v3488
      %v3490 = vrot.slane %v3488, 4
      %v3491 = vrot.slane %v2690, 5
      %v3492 = vsel %vm1917, %v3490, %v3491
      %v3493 = vrot.slane %v3411, 5
      %v3494 = vrot.slane %v3493, 4
      %v3495 = vrot.slane %v2692, 5
      %v3496 = vsel %vm1917, %v3494, %v3495
      %v3497 = vrot.slane %v3495, 4
      %v3498 = vrot.slane %v2693, 5
      %v3499 = vsel %vm1917, %v3497, %v3498
      %v3500 = vrot.slane %v3412, 5
      %v3501 = vrot.slane %v3500, 4
      %v3502 = vrot.slane %v2695, 5
      %v3503 = vsel %vm1917, %v3501, %v3502
      %v3504 = vrot.slane %v3502, 4
      %v3505 = vrot.slane %v2696, 5
      %v3506 = vsel %vm1917, %v3504, %v3505
      %v3507 = vrot.slane %v3413, 5
      %v3508 = vrot.slane %v3507, 4
      %v3509 = vrot.slane %v2698, 5
      %v3510 = vsel %vm1917, %v3508, %v3509
      %v3511 = vrot.slane %v3509, 4
      %v3512 = vrot.slane %v2699, 5
      %v3513 = vsel %vm1917, %v3511, %v3512
      %v3514 = vrot.slane %v3414, 5
      %v3515 = vrot.slane %v3514, 4
      %v3516 = vrot.slane %v2701, 5
      %v3517 = vsel %vm1917, %v3515, %v3516
      %v3518 = vrot.slane %v3516, 4
      %v3519 = vrot.slane %v2702, 5
      %v3520 = vsel %vm1917, %v3518, %v3519
      %v3521 = vrot.slane %v3415, 5
      %v3522 = vrot.slane %v3521, 4
      %v3523 = vrot.slane %v2704, 5
      %v3524 = vsel %vm1917, %v3522, %v3523
      %v3525 = vrot.slane %v3523, 4
      %v3526 = vrot.slane %v2705, 5
      %v3527 = vsel %vm1917, %v3525, %v3526
      %v3528 = vrot.slane %v3416, 5
      %v3529 = vrot.slane %v3528, 4
      %v3530 = vrot.slane %v2707, 5
      %v3531 = vsel %vm1917, %v3529, %v3530
      %v3532 = vrot.slane %v3530, 4
      %v3533 = vrot.slane %v2708, 5
      %v3534 = vsel %vm1917, %v3532, %v3533
      %v3535 = vrot.slane %v3417, 5
      %v3536 = vrot.slane %v3535, 4
      %v3537 = vrot.slane %v2710, 5
      %v3538 = vsel %vm1917, %v3536, %v3537
      %v3539 = vrot.slane %v3537, 4
      %v3540 = vrot.slane %v2711, 5
      %v3541 = vsel %vm1917, %v3539, %v3540
      %v3542 = vrot.slane %v3418, 5
      %v3543 = vrot.slane %v3542, 4
      %v3544 = vrot.slane %v2713, 5
      %v3545 = vsel %vm1917, %v3543, %v3544
      %v3546 = vrot.slane %v3544, 4
      %v3547 = vrot.slane %v2714, 5
      %v3548 = vsel %vm1917, %v3546, %v3547
      %v3549 = vrot.slane %v3419, 5
      %v3550 = vrot.slane %v3549, 4
      %v3551 = vrot.slane %v2716, 5
      %v3552 = vsel %vm1917, %v3550, %v3551
      %v3553 = vrot.slane %v3551, 4
      %v3554 = vrot.slane %v2717, 5
      %v3555 = vsel %vm1917, %v3553, %v3554
      %v3556 = vrot.slane %v3420, 5
      %v3557 = vrot.slane %v3556, 4
      %v3558 = vrot.slane %v2719, 5
      %v3559 = vsel %vm1917, %v3557, %v3558
      %v3560 = vrot.slane %v3558, 4
      %v3561 = vrot.slane %v2720, 5
      %v3562 = vsel %vm1917, %v3560, %v3561
      %v3563 = vrot.slane %v3421, 5
      %v3564 = vrot.slane %v3563, 4
      %v3565 = vrot.slane %v2722, 5
      %v3566 = vsel %vm1917, %v3564, %v3565
      %v3567 = vrot.slane %v3565, 4
      %v3568 = vrot.slane %v2723, 5
      %v3569 = vsel %vm1917, %v3567, %v3568
      %v3570 = vrot.slane %v3422, 5
      %v3571 = vrot.slane %v3570, 4
      %v3572 = vrot.slane %v2725, 5
      %v3573 = vsel %vm1917, %v3571, %v3572
      %v3574 = vrot.slane %v3572, 4
      %v3575 = vrot.slane %v2726, 5
      %v3576 = vsel %vm1917, %v3574, %v3575
      %v3577 = vrot.slane %v3423, 5
      %v3578 = vrot.slane %v3577, 4
      %v3579 = vrot.slane %v2728, 5
      %v3580 = vsel %vm1917, %v3578, %v3579
      %v3581 = vrot.slane %v3579, 4
      %v3582 = vrot.slane %v2729, 5
      %v3583 = vsel %vm1917, %v3581, %v3582
      %s3584 = scalar_lea.vmem %s1, 10
      %v3585 = vld [vmem:[%s3584] sm:$0x3]
      %v3586 = vunpack.c.l.b16 %v3475
      %v3587 = vunpack.c.l.b16 %v3478
      %v3588 = vunpack.c.l.b16 %v3482
      %v3589 = vunpack.c.l.b16 %v3485
      %v3590 = vunpack.c.l.b16 %v3489
      %v3591 = vunpack.c.l.b16 %v3492
      %v3592 = vunpack.c.l.b16 %v3496
      %v3593 = vunpack.c.l.b16 %v3499
      %v3594 = vunpack.c.l.b16 %v3503
      %v3595 = vunpack.c.l.b16 %v3506
      %v3596 = vunpack.c.l.b16 %v3510
      %v3597 = vunpack.c.l.b16 %v3513
      %v3598 = vunpack.c.l.b16 %v3517
      %v3599 = vunpack.c.l.b16 %v3520
      %v3600 = vunpack.c.l.b16 %v3524
      %v3601 = vunpack.c.l.b16 %v3527
      %v3602 = vunpack.c.l.b16 %v3531
      %v3603 = vunpack.c.l.b16 %v3534
      %v3604 = vunpack.c.l.b16 %v3538
      %v3605 = vunpack.c.l.b16 %v3541
      %v3606 = vunpack.c.l.b16 %v3545
      %v3607 = vunpack.c.l.b16 %v3548
      %v3608 = vunpack.c.l.b16 %v3552
      %v3609 = vunpack.c.l.b16 %v3555
      %v3610 = vunpack.c.l.b16 %v3559
      %v3611 = vunpack.c.l.b16 %v3562
      %v3612 = vunpack.c.l.b16 %v3566
      %v3613 = vunpack.c.l.b16 %v3569
      %v3614 = vunpack.c.l.b16 %v3573
      %v3615 = vunpack.c.l.b16 %v3576
      %v3616 = vunpack.c.l.b16 %v3580
      %v3617 = vunpack.c.l.b16 %v3583
      %v3618 = vpack.c.b16 %v3587, %v3586
      %v3619 = vpack.c.b16 %v3589, %v3588
      %v3620 = vpack.c.b16 %v3591, %v3590
      %v3621 = vpack.c.b16 %v3593, %v3592
      %v3622 = vpack.c.b16 %v3595, %v3594
      %v3623 = vpack.c.b16 %v3597, %v3596
      %v3624 = vpack.c.b16 %v3599, %v3598
      %v3625 = vpack.c.b16 %v3601, %v3600
      %v3626 = vpack.c.b16 %v3603, %v3602
      %v3627 = vpack.c.b16 %v3605, %v3604
      %v3628 = vpack.c.b16 %v3607, %v3606
      %v3629 = vpack.c.b16 %v3609, %v3608
      %v3630 = vpack.c.b16 %v3611, %v3610
      %v3631 = vpack.c.b16 %v3613, %v3612
      %v3632 = vpack.c.b16 %v3615, %v3614
      %v3633 = vpack.c.b16 %v3617, %v3616
      %v3635 = vsel %vm1361, %v3618, 0
      %v3638 = vsel %vm1361, %v3619, 0
      %v3641 = vsel %vm1361, %v3620, 0
      %v3644 = vsel %vm1361, %v3621, 0
      %v3647 = vsel %vm1361, %v3622, 0
      %v3650 = vsel %vm1361, %v3623, 0
      %v3653 = vsel %vm1361, %v3624, 0
      %v3656 = vsel %vm1361, %v3625, 0
      %v3659 = vsel %vm1361, %v3626, 0
      %v3662 = vsel %vm1361, %v3627, 0
      %v3665 = vsel %vm1361, %v3628, 0
      %v3668 = vsel %vm1361, %v3629, 0
      %v3671 = vsel %vm1361, %v3630, 0
      %v3674 = vsel %vm1361, %v3631, 0
      %v3677 = vsel %vm1361, %v3632, 0
      %v3680 = vsel %vm1361, %v3633, 0
      %v3683 = vsel %vm1410, %v3585, 0
      %3685 = vmatprep.subr.bf16.mxu0 0
      %3686 = vmatpush1.bf16.msra.mxu0 0
      %3687 = vmatprep.subr.bf16.mxu0 0
      %3688 = vmatpush1.bf16.msra.mxu0 0
      %3689 = vmatprep.subr.bf16.mxu0 0
      %3690 = vmatpush1.bf16.msra.mxu0 0
      %3691 = vmatprep.subr.bf16.mxu0 0
      %3692 = vmatpush1.bf16.msra.mxu0 0
      %3693 = vmatprep.subr.bf16.mxu0 0
      %3694 = vmatpush1.bf16.msra.mxu0 0
      %3695 = vmatprep.subr.bf16.mxu0 0
      %3696 = vmatpush1.bf16.msra.mxu0 0
      %3697 = vmatprep.subr.bf16.mxu0 0
      %3698 = vmatpush1.bf16.msra.mxu0 0
      %3699 = vmatprep.subr.bf16.mxu0 0
      %3700 = vmatpush1.bf16.msra.mxu0 %v3683
      %3701 = vmatprep.subr.bf16.mxu0 0
      %3702 = vmatpush2.bf16.msra.mxu0 0
      %3703 = vmatprep.subr.bf16.mxu0 0
      %3704 = vmatpush2.bf16.msra.mxu0 0
      %3705 = vmatprep.subr.bf16.mxu0 0
      %3706 = vmatpush2.bf16.msra.mxu0 0
      %3707 = vmatprep.subr.bf16.mxu0 0
      %3708 = vmatpush2.bf16.msra.mxu0 0
      %3709 = vmatprep.subr.bf16.mxu0 0
      %3710 = vmatpush2.bf16.msra.mxu0 0
      %3711 = vmatprep.subr.bf16.mxu0 0
      %3712 = vmatpush2.bf16.msra.mxu0 0
      %3713 = vmatprep.subr.bf16.mxu0 0
      %3714 = vmatpush2.bf16.msra.mxu0 0
      %3715 = vmatprep.subr.bf16.mxu0 0
      %3716 = vmatpush2.bf16.msra.mxu0 0
      %3717 = vmatprep.mubr.bf16.mxu0 0
      %3718 = vmatmul.mubr.bf16.gmra.mxu0 %v3635
      %v3719 = vpop.f32.mrf.mxu0
      %v3720 = vadd.f32 0.0, %v3719
      %v3721 = vpop.f32.mrf.mxu0
      %v3722 = vpop.f32.mrf.mxu0
      %v3723 = vadd.f32 0.0, %v3722
      %v3724 = vpop.f32.mrf.mxu0
      %3725 = vmatprep.mubr.bf16.mxu0 0
      %3726 = vmatmul.mubr.bf16.gmra.mxu0 %v3638
      %v3727 = vpop.f32.mrf.mxu0
      %v3728 = vadd.f32 0.0, %v3727
      %v3729 = vpop.f32.mrf.mxu0
      %v3730 = vpop.f32.mrf.mxu0
      %v3731 = vadd.f32 0.0, %v3730
      %v3732 = vpop.f32.mrf.mxu0
      %3733 = vmatprep.mubr.bf16.mxu0 0
      %3734 = vmatmul.mubr.bf16.gmra.mxu0 %v3641
      %v3735 = vpop.f32.mrf.mxu0
      %v3736 = vadd.f32 0.0, %v3735
      %v3737 = vpop.f32.mrf.mxu0
      %v3738 = vpop.f32.mrf.mxu0
      %v3739 = vadd.f32 0.0, %v3738
      %v3740 = vpop.f32.mrf.mxu0
      %3741 = vmatprep.mubr.bf16.mxu0 0
      %3742 = vmatmul.mubr.bf16.gmra.mxu0 %v3644
      %v3743 = vpop.f32.mrf.mxu0
      %v3744 = vadd.f32 0.0, %v3743
      %v3745 = vpop.f32.mrf.mxu0
      %v3746 = vpop.f32.mrf.mxu0
      %v3747 = vadd.f32 0.0, %v3746
      %v3748 = vpop.f32.mrf.mxu0
      %3749 = vmatprep.mubr.bf16.mxu0 0
      %3750 = vmatmul.mubr.bf16.gmra.mxu0 %v3647
      %v3751 = vpop.f32.mrf.mxu0
      %v3752 = vadd.f32 0.0, %v3751
      %v3753 = vpop.f32.mrf.mxu0
      %v3754 = vpop.f32.mrf.mxu0
      %v3755 = vadd.f32 0.0, %v3754
      %v3756 = vpop.f32.mrf.mxu0
      %3757 = vmatprep.mubr.bf16.mxu0 0
      %3758 = vmatmul.mubr.bf16.gmra.mxu0 %v3650
      %v3759 = vpop.f32.mrf.mxu0
      %v3760 = vadd.f32 0.0, %v3759
      %v3761 = vpop.f32.mrf.mxu0
      %v3762 = vpop.f32.mrf.mxu0
      %v3763 = vadd.f32 0.0, %v3762
      %v3764 = vpop.f32.mrf.mxu0
      %3765 = vmatprep.mubr.bf16.mxu0 0
      %3766 = vmatmul.mubr.bf16.gmra.mxu0 %v3653
      %v3767 = vpop.f32.mrf.mxu0
      %v3768 = vadd.f32 0.0, %v3767
      %v3769 = vpop.f32.mrf.mxu0
      %v3770 = vpop.f32.mrf.mxu0
      %v3771 = vadd.f32 0.0, %v3770
      %v3772 = vpop.f32.mrf.mxu0
      %3773 = vmatprep.mubr.bf16.mxu0 0
      %3774 = vmatmul.mubr.bf16.gmra.mxu0 %v3656
      %v3775 = vpop.f32.mrf.mxu0
      %v3776 = vadd.f32 0.0, %v3775
      %v3777 = vpop.f32.mrf.mxu0
      %v3778 = vpop.f32.mrf.mxu0
      %v3779 = vadd.f32 0.0, %v3778
      %v3780 = vpop.f32.mrf.mxu0
      %3781 = vmatprep.mubr.bf16.mxu0 0
      %3782 = vmatmul.mubr.bf16.gmra.mxu0 %v3659
      %v3783 = vpop.f32.mrf.mxu0
      %v3784 = vadd.f32 0.0, %v3783
      %v3785 = vpop.f32.mrf.mxu0
      %v3786 = vpop.f32.mrf.mxu0
      %v3787 = vadd.f32 0.0, %v3786
      %v3788 = vpop.f32.mrf.mxu0
      %3789 = vmatprep.mubr.bf16.mxu0 0
      %3790 = vmatmul.mubr.bf16.gmra.mxu0 %v3662
      %v3791 = vpop.f32.mrf.mxu0
      %v3792 = vadd.f32 0.0, %v3791
      %v3793 = vpop.f32.mrf.mxu0
      %v3794 = vpop.f32.mrf.mxu0
      %v3795 = vadd.f32 0.0, %v3794
      %v3796 = vpop.f32.mrf.mxu0
      %3797 = vmatprep.mubr.bf16.mxu0 0
      %3798 = vmatmul.mubr.bf16.gmra.mxu0 %v3665
      %v3799 = vpop.f32.mrf.mxu0
      %v3800 = vadd.f32 0.0, %v3799
      %v3801 = vpop.f32.mrf.mxu0
      %v3802 = vpop.f32.mrf.mxu0
      %v3803 = vadd.f32 0.0, %v3802
      %v3804 = vpop.f32.mrf.mxu0
      %3805 = vmatprep.mubr.bf16.mxu0 0
      %3806 = vmatmul.mubr.bf16.gmra.mxu0 %v3668
      %v3807 = vpop.f32.mrf.mxu0
      %v3808 = vadd.f32 0.0, %v3807
      %v3809 = vpop.f32.mrf.mxu0
      %v3810 = vpop.f32.mrf.mxu0
      %v3811 = vadd.f32 0.0, %v3810
      %v3812 = vpop.f32.mrf.mxu0
      %3813 = vmatprep.mubr.bf16.mxu0 0
      %3814 = vmatmul.mubr.bf16.gmra.mxu0 %v3671
      %v3815 = vpop.f32.mrf.mxu0
      %v3816 = vadd.f32 0.0, %v3815
      %v3817 = vpop.f32.mrf.mxu0
      %v3818 = vpop.f32.mrf.mxu0
      %v3819 = vadd.f32 0.0, %v3818
      %v3820 = vpop.f32.mrf.mxu0
      %3821 = vmatprep.mubr.bf16.mxu0 0
      %3822 = vmatmul.mubr.bf16.gmra.mxu0 %v3674
      %v3823 = vpop.f32.mrf.mxu0
      %v3824 = vadd.f32 0.0, %v3823
      %v3825 = vpop.f32.mrf.mxu0
      %v3826 = vpop.f32.mrf.mxu0
      %v3827 = vadd.f32 0.0, %v3826
      %v3828 = vpop.f32.mrf.mxu0
      %3829 = vmatprep.mubr.bf16.mxu0 0
      %3830 = vmatmul.mubr.bf16.gmra.mxu0 %v3677
      %v3831 = vpop.f32.mrf.mxu0
      %v3832 = vadd.f32 0.0, %v3831
      %v3833 = vpop.f32.mrf.mxu0
      %v3834 = vpop.f32.mrf.mxu0
      %v3835 = vadd.f32 0.0, %v3834
      %v3836 = vpop.f32.mrf.mxu0
      %3837 = vmatprep.mubr.bf16.mxu0 0
      %3838 = vmatmul.mubr.bf16.gmra.mxu0 %v3680
      %v3839 = vpop.f32.mrf.mxu0
      %v3840 = vadd.f32 0.0, %v3839
      %v3841 = vpop.f32.mrf.mxu0
      %v3842 = vpop.f32.mrf.mxu0
      %v3843 = vadd.f32 0.0, %v3842
      %v3844 = vpop.f32.mrf.mxu0
      %3845 = vdwg.mxu0
      %v3846 = vadd.f32 %v3376, %v3720
      %v3847 = vadd.f32 %v3377, %v3723
      %v3848 = vadd.f32 %v3378, %v3728
      %v3849 = vadd.f32 %v3379, %v3731
      %v3850 = vadd.f32 %v3380, %v3736
      %v3851 = vadd.f32 %v3381, %v3739
      %v3852 = vadd.f32 %v3382, %v3744
      %v3853 = vadd.f32 %v3383, %v3747
      %v3854 = vadd.f32 %v3384, %v3752
      %v3855 = vadd.f32 %v3385, %v3755
      %v3856 = vadd.f32 %v3386, %v3760
      %v3857 = vadd.f32 %v3387, %v3763
      %v3858 = vadd.f32 %v3388, %v3768
      %v3859 = vadd.f32 %v3389, %v3771
      %v3860 = vadd.f32 %v3390, %v3776
      %v3861 = vadd.f32 %v3391, %v3779
      %v3862 = vadd.f32 %v3392, %v3784
      %v3863 = vadd.f32 %v3393, %v3787
      %v3864 = vadd.f32 %v3394, %v3792
      %v3865 = vadd.f32 %v3395, %v3795
      %v3866 = vadd.f32 %v3396, %v3800
      %v3867 = vadd.f32 %v3397, %v3803
      %v3868 = vadd.f32 %v3398, %v3808
      %v3869 = vadd.f32 %v3399, %v3811
      %v3870 = vadd.f32 %v3400, %v3816
      %v3871 = vadd.f32 %v3401, %v3819
      %v3872 = vadd.f32 %v3402, %v3824
      %v3873 = vadd.f32 %v3403, %v3827
      %v3874 = vadd.f32 %v3404, %v3832
      %v3875 = vadd.f32 %v3405, %v3835
      %v3876 = vadd.f32 %v3406, %v3840
      %v3877 = vadd.f32 %v3407, %v3843
      %s3878 = scalar_lea.vmem [#allocation2], 24
      %v3879 = vld [vmem:[%s3878] sm:$0xf]
      %v3880 = vld [vmem:[%s3878 + $0x4] sm:$0xf]
      %v3881 = vld [vmem:[%s3878 + $0xc] sm:$0xf]
      %v3882 = vld [vmem:[%s3878 + $0x10] sm:$0xf]
      %v3883 = vld [vmem:[%s3878 + $0x18] sm:$0xf]
      %v3884 = vld [vmem:[%s3878 + $0x1c] sm:$0xf]
      %v3885 = vld [vmem:[%s3878 + $0x24] sm:$0xf]
      %v3886 = vld [vmem:[%s3878 + $0x28] sm:$0xf]
      %v3887 = vld [vmem:[%s3878 + $0x30] sm:$0xf]
      %v3888 = vld [vmem:[%s3878 + $0x34] sm:$0xf]
      %v3889 = vld [vmem:[%s3878 + $0x3c] sm:$0xf]
      %v3890 = vld [vmem:[%s3878 + $0x40] sm:$0xf]
      %v3891 = vld [vmem:[%s3878 + $0x48] sm:$0xf]
      %v3892 = vld [vmem:[%s3878 + $0x4c] sm:$0xf]
      %v3893 = vld [vmem:[%s3878 + $0x54] sm:$0xf]
      %v3894 = vld [vmem:[%s3878 + $0x58] sm:$0xf]
      %v3895 = vld [vmem:[%s3878 + $0x60] sm:$0xf]
      %v3896 = vld [vmem:[%s3878 + $0x64] sm:$0xf]
      %v3897 = vld [vmem:[%s3878 + $0x6c] sm:$0xf]
      %v3898 = vld [vmem:[%s3878 + $0x70] sm:$0xf]
      %v3899 = vld [vmem:[%s3878 + $0x78] sm:$0xf]
      %v3900 = vld [vmem:[%s3878 + $0x7c] sm:$0xf]
      %v3901 = vld [vmem:[%s3878 + $0x84] sm:$0xf]
      %v3902 = vld [vmem:[%s3878 + $0x88] sm:$0xf]
      %v3903 = vld [vmem:[%s3878 + $0x90] sm:$0xf]
      %v3904 = vld [vmem:[%s3878 + $0x94] sm:$0xf]
      %v3905 = vld [vmem:[%s3878 + $0x9c] sm:$0xf]
      %v3906 = vld [vmem:[%s3878 + $0xa0] sm:$0xf]
      %v3907 = vld [vmem:[%s3878 + $0xa8] sm:$0xf]
      %v3908 = vld [vmem:[%s3878 + $0xac] sm:$0xf]
      %v3909 = vld [vmem:[%s3878 + $0xb4] sm:$0xf]
      %v3910 = vld [vmem:[%s3878 + $0xb8] sm:$0xf]
      %s3911 = scalar_lea.vmem %s1, 12
      %v3912 = vld [vmem:[%s3911] sm:$0x3]
      %v3945 = vunpack.c.l.b16 %v3879
      %v3946 = vunpack.c.l.b16 %v3880
      %v3947 = vunpack.c.l.b16 %v3881
      %v3948 = vunpack.c.l.b16 %v3882
      %v3949 = vunpack.c.l.b16 %v3883
      %v3950 = vunpack.c.l.b16 %v3884
      %v3951 = vunpack.c.l.b16 %v3885
      %v3952 = vunpack.c.l.b16 %v3886
      %v3953 = vunpack.c.l.b16 %v3887
      %v3954 = vunpack.c.l.b16 %v3888
      %v3955 = vunpack.c.l.b16 %v3889
      %v3956 = vunpack.c.l.b16 %v3890
      %v3957 = vunpack.c.l.b16 %v3891
      %v3958 = vunpack.c.l.b16 %v3892
      %v3959 = vunpack.c.l.b16 %v3893
      %v3960 = vunpack.c.l.b16 %v3894
      %v3961 = vunpack.c.l.b16 %v3895
      %v3962 = vunpack.c.l.b16 %v3896
      %v3963 = vunpack.c.l.b16 %v3897
      %v3964 = vunpack.c.l.b16 %v3898
      %v3965 = vunpack.c.l.b16 %v3899
      %v3966 = vunpack.c.l.b16 %v3900
      %v3967 = vunpack.c.l.b16 %v3901
      %v3968 = vunpack.c.l.b16 %v3902
      %v3969 = vunpack.c.l.b16 %v3903
      %v3970 = vunpack.c.l.b16 %v3904
      %v3971 = vunpack.c.l.b16 %v3905
      %v3972 = vunpack.c.l.b16 %v3906
      %v3973 = vunpack.c.l.b16 %v3907
      %v3974 = vunpack.c.l.b16 %v3908
      %v3975 = vunpack.c.l.b16 %v3909
      %v3976 = vunpack.c.l.b16 %v3910
      %v3977 = vpack.c.b16 %v3946, %v3945
      %v3978 = vpack.c.b16 %v3948, %v3947
      %v3979 = vpack.c.b16 %v3950, %v3949
      %v3980 = vpack.c.b16 %v3952, %v3951
      %v3981 = vpack.c.b16 %v3954, %v3953
      %v3982 = vpack.c.b16 %v3956, %v3955
      %v3983 = vpack.c.b16 %v3958, %v3957
      %v3984 = vpack.c.b16 %v3960, %v3959
      %v3985 = vpack.c.b16 %v3962, %v3961
      %v3986 = vpack.c.b16 %v3964, %v3963
      %v3987 = vpack.c.b16 %v3966, %v3965
      %v3988 = vpack.c.b16 %v3968, %v3967
      %v3989 = vpack.c.b16 %v3970, %v3969
      %v3990 = vpack.c.b16 %v3972, %v3971
      %v3991 = vpack.c.b16 %v3974, %v3973
      %v3992 = vpack.c.b16 %v3976, %v3975
      %v3994 = vsel %vm1361, %v3977, 0
      %v3997 = vsel %vm1361, %v3978, 0
      %v4000 = vsel %vm1361, %v3979, 0
      %v4003 = vsel %vm1361, %v3980, 0
      %v4006 = vsel %vm1361, %v3981, 0
      %v4009 = vsel %vm1361, %v3982, 0
      %v4012 = vsel %vm1361, %v3983, 0
      %v4015 = vsel %vm1361, %v3984, 0
      %v4018 = vsel %vm1361, %v3985, 0
      %v4021 = vsel %vm1361, %v3986, 0
      %v4024 = vsel %vm1361, %v3987, 0
      %v4027 = vsel %vm1361, %v3988, 0
      %v4030 = vsel %vm1361, %v3989, 0
      %v4033 = vsel %vm1361, %v3990, 0
      %v4036 = vsel %vm1361, %v3991, 0
      %v4039 = vsel %vm1361, %v3992, 0
      %v4042 = vsel %vm1410, %v3912, 0
      %4044 = vmatprep.subr.bf16.mxu0 0
      %4045 = vmatpush1.bf16.msra.mxu0 0
      %4046 = vmatprep.subr.bf16.mxu0 0
      %4047 = vmatpush1.bf16.msra.mxu0 0
      %4048 = vmatprep.subr.bf16.mxu0 0
      %4049 = vmatpush1.bf16.msra.mxu0 0
      %4050 = vmatprep.subr.bf16.mxu0 0
      %4051 = vmatpush1.bf16.msra.mxu0 0
      %4052 = vmatprep.subr.bf16.mxu0 0
      %4053 = vmatpush1.bf16.msra.mxu0 0
      %4054 = vmatprep.subr.bf16.mxu0 0
      %4055 = vmatpush1.bf16.msra.mxu0 0
      %4056 = vmatprep.subr.bf16.mxu0 0
      %4057 = vmatpush1.bf16.msra.mxu0 0
      %4058 = vmatprep.subr.bf16.mxu0 0
      %4059 = vmatpush1.bf16.msra.mxu0 %v4042
      %4060 = vmatprep.subr.bf16.mxu0 0
      %4061 = vmatpush2.bf16.msra.mxu0 0
      %4062 = vmatprep.subr.bf16.mxu0 0
      %4063 = vmatpush2.bf16.msra.mxu0 0
      %4064 = vmatprep.subr.bf16.mxu0 0
      %4065 = vmatpush2.bf16.msra.mxu0 0
      %4066 = vmatprep.subr.bf16.mxu0 0
      %4067 = vmatpush2.bf16.msra.mxu0 0
      %4068 = vmatprep.subr.bf16.mxu0 0
      %4069 = vmatpush2.bf16.msra.mxu0 0
      %4070 = vmatprep.subr.bf16.mxu0 0
      %4071 = vmatpush2.bf16.msra.mxu0 0
      %4072 = vmatprep.subr.bf16.mxu0 0
      %4073 = vmatpush2.bf16.msra.mxu0 0
      %4074 = vmatprep.subr.bf16.mxu0 0
      %4075 = vmatpush2.bf16.msra.mxu0 0
      %4076 = vmatprep.mubr.bf16.mxu0 0
      %4077 = vmatmul.mubr.bf16.gmra.mxu0 %v3994
      %v4078 = vpop.f32.mrf.mxu0
      %v4079 = vadd.f32 0.0, %v4078
      %v4080 = vpop.f32.mrf.mxu0
      %v4081 = vpop.f32.mrf.mxu0
      %v4082 = vadd.f32 0.0, %v4081
      %v4083 = vpop.f32.mrf.mxu0
      %4084 = vmatprep.mubr.bf16.mxu0 0
      %4085 = vmatmul.mubr.bf16.gmra.mxu0 %v3997
      %v4086 = vpop.f32.mrf.mxu0
      %v4087 = vadd.f32 0.0, %v4086
      %v4088 = vpop.f32.mrf.mxu0
      %v4089 = vpop.f32.mrf.mxu0
      %v4090 = vadd.f32 0.0, %v4089
      %v4091 = vpop.f32.mrf.mxu0
      %4092 = vmatprep.mubr.bf16.mxu0 0
      %4093 = vmatmul.mubr.bf16.gmra.mxu0 %v4000
      %v4094 = vpop.f32.mrf.mxu0
      %v4095 = vadd.f32 0.0, %v4094
      %v4096 = vpop.f32.mrf.mxu0
      %v4097 = vpop.f32.mrf.mxu0
      %v4098 = vadd.f32 0.0, %v4097
      %v4099 = vpop.f32.mrf.mxu0
      %4100 = vmatprep.mubr.bf16.mxu0 0
      %4101 = vmatmul.mubr.bf16.gmra.mxu0 %v4003
      %v4102 = vpop.f32.mrf.mxu0
      %v4103 = vadd.f32 0.0, %v4102
      %v4104 = vpop.f32.mrf.mxu0
      %v4105 = vpop.f32.mrf.mxu0
      %v4106 = vadd.f32 0.0, %v4105
      %v4107 = vpop.f32.mrf.mxu0
      %4108 = vmatprep.mubr.bf16.mxu0 0
      %4109 = vmatmul.mubr.bf16.gmra.mxu0 %v4006
      %v4110 = vpop.f32.mrf.mxu0
      %v4111 = vadd.f32 0.0, %v4110
      %v4112 = vpop.f32.mrf.mxu0
      %v4113 = vpop.f32.mrf.mxu0
      %v4114 = vadd.f32 0.0, %v4113
      %v4115 = vpop.f32.mrf.mxu0
      %4116 = vmatprep.mubr.bf16.mxu0 0
      %4117 = vmatmul.mubr.bf16.gmra.mxu0 %v4009
      %v4118 = vpop.f32.mrf.mxu0
      %v4119 = vadd.f32 0.0, %v4118
      %v4120 = vpop.f32.mrf.mxu0
      %v4121 = vpop.f32.mrf.mxu0
      %v4122 = vadd.f32 0.0, %v4121
      %v4123 = vpop.f32.mrf.mxu0
      %4124 = vmatprep.mubr.bf16.mxu0 0
      %4125 = vmatmul.mubr.bf16.gmra.mxu0 %v4012
      %v4126 = vpop.f32.mrf.mxu0
      %v4127 = vadd.f32 0.0, %v4126
      %v4128 = vpop.f32.mrf.mxu0
      %v4129 = vpop.f32.mrf.mxu0
      %v4130 = vadd.f32 0.0, %v4129
      %v4131 = vpop.f32.mrf.mxu0
      %4132 = vmatprep.mubr.bf16.mxu0 0
      %4133 = vmatmul.mubr.bf16.gmra.mxu0 %v4015
      %v4134 = vpop.f32.mrf.mxu0
      %v4135 = vadd.f32 0.0, %v4134
      %v4136 = vpop.f32.mrf.mxu0
      %v4137 = vpop.f32.mrf.mxu0
      %v4138 = vadd.f32 0.0, %v4137
      %v4139 = vpop.f32.mrf.mxu0
      %4140 = vmatprep.mubr.bf16.mxu0 0
      %4141 = vmatmul.mubr.bf16.gmra.mxu0 %v4018
      %v4142 = vpop.f32.mrf.mxu0
      %v4143 = vadd.f32 0.0, %v4142
      %v4144 = vpop.f32.mrf.mxu0
      %v4145 = vpop.f32.mrf.mxu0
      %v4146 = vadd.f32 0.0, %v4145
      %v4147 = vpop.f32.mrf.mxu0
      %4148 = vmatprep.mubr.bf16.mxu0 0
      %4149 = vmatmul.mubr.bf16.gmra.mxu0 %v4021
      %v4150 = vpop.f32.mrf.mxu0
      %v4151 = vadd.f32 0.0, %v4150
      %v4152 = vpop.f32.mrf.mxu0
      %v4153 = vpop.f32.mrf.mxu0
      %v4154 = vadd.f32 0.0, %v4153
      %v4155 = vpop.f32.mrf.mxu0
      %4156 = vmatprep.mubr.bf16.mxu0 0
      %4157 = vmatmul.mubr.bf16.gmra.mxu0 %v4024
      %v4158 = vpop.f32.mrf.mxu0
      %v4159 = vadd.f32 0.0, %v4158
      %v4160 = vpop.f32.mrf.mxu0
      %v4161 = vpop.f32.mrf.mxu0
      %v4162 = vadd.f32 0.0, %v4161
      %v4163 = vpop.f32.mrf.mxu0
      %4164 = vmatprep.mubr.bf16.mxu0 0
      %4165 = vmatmul.mubr.bf16.gmra.mxu0 %v4027
      %v4166 = vpop.f32.mrf.mxu0
      %v4167 = vadd.f32 0.0, %v4166
      %v4168 = vpop.f32.mrf.mxu0
      %v4169 = vpop.f32.mrf.mxu0
      %v4170 = vadd.f32 0.0, %v4169
      %v4171 = vpop.f32.mrf.mxu0
      %4172 = vmatprep.mubr.bf16.mxu0 0
      %4173 = vmatmul.mubr.bf16.gmra.mxu0 %v4030
      %v4174 = vpop.f32.mrf.mxu0
      %v4175 = vadd.f32 0.0, %v4174
      %v4176 = vpop.f32.mrf.mxu0
      %v4177 = vpop.f32.mrf.mxu0
      %v4178 = vadd.f32 0.0, %v4177
      %v4179 = vpop.f32.mrf.mxu0
      %4180 = vmatprep.mubr.bf16.mxu0 0
      %4181 = vmatmul.mubr.bf16.gmra.mxu0 %v4033
      %v4182 = vpop.f32.mrf.mxu0
      %v4183 = vadd.f32 0.0, %v4182
      %v4184 = vpop.f32.mrf.mxu0
      %v4185 = vpop.f32.mrf.mxu0
      %v4186 = vadd.f32 0.0, %v4185
      %v4187 = vpop.f32.mrf.mxu0
      %4188 = vmatprep.mubr.bf16.mxu0 0
      %4189 = vmatmul.mubr.bf16.gmra.mxu0 %v4036
      %v4190 = vpop.f32.mrf.mxu0
      %v4191 = vadd.f32 0.0, %v4190
      %v4192 = vpop.f32.mrf.mxu0
      %v4193 = vpop.f32.mrf.mxu0
      %v4194 = vadd.f32 0.0, %v4193
      %v4195 = vpop.f32.mrf.mxu0
      %4196 = vmatprep.mubr.bf16.mxu0 0
      %4197 = vmatmul.mubr.bf16.gmra.mxu0 %v4039
      %v4198 = vpop.f32.mrf.mxu0
      %v4199 = vadd.f32 0.0, %v4198
      %v4200 = vpop.f32.mrf.mxu0
      %v4201 = vpop.f32.mrf.mxu0
      %v4202 = vadd.f32 0.0, %v4201
      %v4203 = vpop.f32.mrf.mxu0
      %4204 = vdwg.mxu0
      %v4205 = vadd.f32 %v3846, %v4079
      %v4206 = vadd.f32 %v3847, %v4082
      %v4207 = vadd.f32 %v3848, %v4087
      %v4208 = vadd.f32 %v3849, %v4090
      %v4209 = vadd.f32 %v3850, %v4095
      %v4210 = vadd.f32 %v3851, %v4098
      %v4211 = vadd.f32 %v3852, %v4103
      %v4212 = vadd.f32 %v3853, %v4106
      %v4213 = vadd.f32 %v3854, %v4111
      %v4214 = vadd.f32 %v3855, %v4114
      %v4215 = vadd.f32 %v3856, %v4119
      %v4216 = vadd.f32 %v3857, %v4122
      %v4217 = vadd.f32 %v3858, %v4127
      %v4218 = vadd.f32 %v3859, %v4130
      %v4219 = vadd.f32 %v3860, %v4135
      %v4220 = vadd.f32 %v3861, %v4138
      %v4221 = vadd.f32 %v3862, %v4143
      %v4222 = vadd.f32 %v3863, %v4146
      %v4223 = vadd.f32 %v3864, %v4151
      %v4224 = vadd.f32 %v3865, %v4154
      %v4225 = vadd.f32 %v3866, %v4159
      %v4226 = vadd.f32 %v3867, %v4162
      %v4227 = vadd.f32 %v3868, %v4167
      %v4228 = vadd.f32 %v3869, %v4170
      %v4229 = vadd.f32 %v3870, %v4175
      %v4230 = vadd.f32 %v3871, %v4178
      %v4231 = vadd.f32 %v3872, %v4183
      %v4232 = vadd.f32 %v3873, %v4186
      %v4233 = vadd.f32 %v3874, %v4191
      %v4234 = vadd.f32 %v3875, %v4194
      %v4235 = vadd.f32 %v3876, %v4199
      %v4236 = vadd.f32 %v3877, %v4202
      %v4237 = vld [vmem:[%s3878] sm:$0xf]
      %v4238 = vld [vmem:[%s3878 + $0x4] sm:$0xf]
      %v4239 = vld [vmem:[%s3878 + $0x8] sm:$0x1]
      %v4240 = vld [vmem:[%s3878 + $0xc] sm:$0xf]
      %v4241 = vld [vmem:[%s3878 + $0x10] sm:$0xf]
      %v4242 = vld [vmem:[%s3878 + $0x14] sm:$0x1]
      %v4243 = vld [vmem:[%s3878 + $0x18] sm:$0xf]
      %v4244 = vld [vmem:[%s3878 + $0x1c] sm:$0xf]
      %v4245 = vld [vmem:[%s3878 + $0x20] sm:$0x1]
      %v4246 = vld [vmem:[%s3878 + $0x24] sm:$0xf]
      %v4247 = vld [vmem:[%s3878 + $0x28] sm:$0xf]
      %v4248 = vld [vmem:[%s3878 + $0x2c] sm:$0x1]
      %v4249 = vld [vmem:[%s3878 + $0x30] sm:$0xf]
      %v4250 = vld [vmem:[%s3878 + $0x34] sm:$0xf]
      %v4251 = vld [vmem:[%s3878 + $0x38] sm:$0x1]
      %v4252 = vld [vmem:[%s3878 + $0x3c] sm:$0xf]
      %v4253 = vld [vmem:[%s3878 + $0x40] sm:$0xf]
      %v4254 = vld [vmem:[%s3878 + $0x44] sm:$0x1]
      %v4255 = vld [vmem:[%s3878 + $0x48] sm:$0xf]
      %v4256 = vld [vmem:[%s3878 + $0x4c] sm:$0xf]
      %v4257 = vld [vmem:[%s3878 + $0x50] sm:$0x1]
      %v4258 = vld [vmem:[%s3878 + $0x54] sm:$0xf]
      %v4259 = vld [vmem:[%s3878 + $0x58] sm:$0xf]
      %v4260 = vld [vmem:[%s3878 + $0x5c] sm:$0x1]
      %v4261 = vld [vmem:[%s3878 + $0x60] sm:$0xf]
      %v4262 = vld [vmem:[%s3878 + $0x64] sm:$0xf]
      %v4263 = vld [vmem:[%s3878 + $0x68] sm:$0x1]
      %v4264 = vld [vmem:[%s3878 + $0x6c] sm:$0xf]
      %v4265 = vld [vmem:[%s3878 + $0x70] sm:$0xf]
      %v4266 = vld [vmem:[%s3878 + $0x74] sm:$0x1]
      %v4267 = vld [vmem:[%s3878 + $0x78] sm:$0xf]
      %v4268 = vld [vmem:[%s3878 + $0x7c] sm:$0xf]
      %v4269 = vld [vmem:[%s3878 + $0x80] sm:$0x1]
      %v4270 = vld [vmem:[%s3878 + $0x84] sm:$0xf]
      %v4271 = vld [vmem:[%s3878 + $0x88] sm:$0xf]
      %v4272 = vld [vmem:[%s3878 + $0x8c] sm:$0x1]
      %v4273 = vld [vmem:[%s3878 + $0x90] sm:$0xf]
      %v4274 = vld [vmem:[%s3878 + $0x94] sm:$0xf]
      %v4275 = vld [vmem:[%s3878 + $0x98] sm:$0x1]
      %v4276 = vld [vmem:[%s3878 + $0x9c] sm:$0xf]
      %v4277 = vld [vmem:[%s3878 + $0xa0] sm:$0xf]
      %v4278 = vld [vmem:[%s3878 + $0xa4] sm:$0x1]
      %v4279 = vld [vmem:[%s3878 + $0xa8] sm:$0xf]
      %v4280 = vld [vmem:[%s3878 + $0xac] sm:$0xf]
      %v4281 = vld [vmem:[%s3878 + $0xb0] sm:$0x1]
      %v4282 = vld [vmem:[%s3878 + $0xb4] sm:$0xf]
      %v4283 = vld [vmem:[%s3878 + $0xb8] sm:$0xf]
      %v4284 = vld [vmem:[%s3878 + $0xbc] sm:$0x1]
      %v4286 = vshrl.u32 %v4237, 16
      %v4288 = vrot.slane %v4286, 4
      %v4289 = vshll.u32 %v4237, 16
      %v4291 = vrot.slane %v4289, 5
      %v4292 = vor.u32 %v4288, %v4291
      %v4293 = vrot.slane %v4292, 4
      %v4295 = vshll.u32 %v4238, 16
      %v4297 = vrot.slane %v4295, 5
      %v4298 = vsel %vm926, %v4293, %v4297
      %v4299 = vshrl.u32 %v4238, 16
      %v4301 = vrot.slane %v4299, 4
      %v4302 = vor.u32 %v4301, %v4297
      %v4303 = vrot.slane %v4302, 4
      %v4305 = vshll.u32 %v4239, 16
      %v4307 = vrot.slane %v4305, 5
      %v4308 = vsel %vm926, %v4303, %v4307
      %v4310 = vshrl.u32 %v4240, 16
      %v4312 = vrot.slane %v4310, 4
      %v4313 = vshll.u32 %v4240, 16
      %v4315 = vrot.slane %v4313, 5
      %v4316 = vor.u32 %v4312, %v4315
      %v4317 = vrot.slane %v4316, 4
      %v4319 = vshll.u32 %v4241, 16
      %v4321 = vrot.slane %v4319, 5
      %v4322 = vsel %vm926, %v4317, %v4321
      %v4323 = vshrl.u32 %v4241, 16
      %v4325 = vrot.slane %v4323, 4
      %v4326 = vor.u32 %v4325, %v4321
      %v4327 = vrot.slane %v4326, 4
      %v4329 = vshll.u32 %v4242, 16
      %v4331 = vrot.slane %v4329, 5
      %v4332 = vsel %vm926, %v4327, %v4331
      %v4334 = vshrl.u32 %v4243, 16
      %v4336 = vrot.slane %v4334, 4
      %v4337 = vshll.u32 %v4243, 16
      %v4339 = vrot.slane %v4337, 5
      %v4340 = vor.u32 %v4336, %v4339
      %v4341 = vrot.slane %v4340, 4
      %v4343 = vshll.u32 %v4244, 16
      %v4345 = vrot.slane %v4343, 5
      %v4346 = vsel %vm926, %v4341, %v4345
      %v4347 = vshrl.u32 %v4244, 16
      %v4349 = vrot.slane %v4347, 4
      %v4350 = vor.u32 %v4349, %v4345
      %v4351 = vrot.slane %v4350, 4
      %v4353 = vshll.u32 %v4245, 16
      %v4355 = vrot.slane %v4353, 5
      %v4356 = vsel %vm926, %v4351, %v4355
      %v4358 = vshrl.u32 %v4246, 16
      %v4360 = vrot.slane %v4358, 4
      %v4361 = vshll.u32 %v4246, 16
      %v4363 = vrot.slane %v4361, 5
      %v4364 = vor.u32 %v4360, %v4363
      %v4365 = vrot.slane %v4364, 4
      %v4367 = vshll.u32 %v4247, 16
      %v4369 = vrot.slane %v4367, 5
      %v4370 = vsel %vm926, %v4365, %v4369
      %v4371 = vshrl.u32 %v4247, 16
      %v4373 = vrot.slane %v4371, 4
      %v4374 = vor.u32 %v4373, %v4369
      %v4375 = vrot.slane %v4374, 4
      %v4377 = vshll.u32 %v4248, 16
      %v4379 = vrot.slane %v4377, 5
      %v4380 = vsel %vm926, %v4375, %v4379
      %v4382 = vshrl.u32 %v4249, 16
      %v4384 = vrot.slane %v4382, 4
      %v4385 = vshll.u32 %v4249, 16
      %v4387 = vrot.slane %v4385, 5
      %v4388 = vor.u32 %v4384, %v4387
      %v4389 = vrot.slane %v4388, 4
      %v4391 = vshll.u32 %v4250, 16
      %v4393 = vrot.slane %v4391, 5
      %v4394 = vsel %vm926, %v4389, %v4393
      %v4395 = vshrl.u32 %v4250, 16
      %v4397 = vrot.slane %v4395, 4
      %v4398 = vor.u32 %v4397, %v4393
      %v4399 = vrot.slane %v4398, 4
      %v4401 = vshll.u32 %v4251, 16
      %v4403 = vrot.slane %v4401, 5
      %v4404 = vsel %vm926, %v4399, %v4403
      %v4406 = vshrl.u32 %v4252, 16
      %v4408 = vrot.slane %v4406, 4
      %v4409 = vshll.u32 %v4252, 16
      %v4411 = vrot.slane %v4409, 5
      %v4412 = vor.u32 %v4408, %v4411
      %v4413 = vrot.slane %v4412, 4
      %v4415 = vshll.u32 %v4253, 16
      %v4417 = vrot.slane %v4415, 5
      %v4418 = vsel %vm926, %v4413, %v4417
      %v4419 = vshrl.u32 %v4253, 16
      %v4421 = vrot.slane %v4419, 4
      %v4422 = vor.u32 %v4421, %v4417
      %v4423 = vrot.slane %v4422, 4
      %v4425 = vshll.u32 %v4254, 16
      %v4427 = vrot.slane %v4425, 5
      %v4428 = vsel %vm926, %v4423, %v4427
      %v4430 = vshrl.u32 %v4255, 16
      %v4432 = vrot.slane %v4430, 4
      %v4433 = vshll.u32 %v4255, 16
      %v4435 = vrot.slane %v4433, 5
      %v4436 = vor.u32 %v4432, %v4435
      %v4437 = vrot.slane %v4436, 4
      %v4439 = vshll.u32 %v4256, 16
      %v4441 = vrot.slane %v4439, 5
      %v4442 = vsel %vm926, %v4437, %v4441
      %v4443 = vshrl.u32 %v4256, 16
      %v4445 = vrot.slane %v4443, 4
      %v4446 = vor.u32 %v4445, %v4441
      %v4447 = vrot.slane %v4446, 4
      %v4449 = vshll.u32 %v4257, 16
      %v4451 = vrot.slane %v4449, 5
      %v4452 = vsel %vm926, %v4447, %v4451
      %v4454 = vshrl.u32 %v4258, 16
      %v4456 = vrot.slane %v4454, 4
      %v4457 = vshll.u32 %v4258, 16
      %v4459 = vrot.slane %v4457, 5
      %v4460 = vor.u32 %v4456, %v4459
      %v4461 = vrot.slane %v4460, 4
      %v4463 = vshll.u32 %v4259, 16
      %v4465 = vrot.slane %v4463, 5
      %v4466 = vsel %vm926, %v4461, %v4465
      %v4467 = vshrl.u32 %v4259, 16
      %v4469 = vrot.slane %v4467, 4
      %v4470 = vor.u32 %v4469, %v4465
      %v4471 = vrot.slane %v4470, 4
      %v4473 = vshll.u32 %v4260, 16
      %v4475 = vrot.slane %v4473, 5
      %v4476 = vsel %vm926, %v4471, %v4475
      %v4478 = vshrl.u32 %v4261, 16
      %v4480 = vrot.slane %v4478, 4
      %v4481 = vshll.u32 %v4261, 16
      %v4483 = vrot.slane %v4481, 5
      %v4484 = vor.u32 %v4480, %v4483
      %v4485 = vrot.slane %v4484, 4
      %v4487 = vshll.u32 %v4262, 16
      %v4489 = vrot.slane %v4487, 5
      %v4490 = vsel %vm926, %v4485, %v4489
      %v4491 = vshrl.u32 %v4262, 16
      %v4493 = vrot.slane %v4491, 4
      %v4494 = vor.u32 %v4493, %v4489
      %v4495 = vrot.slane %v4494, 4
      %v4497 = vshll.u32 %v4263, 16
      %v4499 = vrot.slane %v4497, 5
      %v4500 = vsel %vm926, %v4495, %v4499
      %v4502 = vshrl.u32 %v4264, 16
      %v4504 = vrot.slane %v4502, 4
      %v4505 = vshll.u32 %v4264, 16
      %v4507 = vrot.slane %v4505, 5
      %v4508 = vor.u32 %v4504, %v4507
      %v4509 = vrot.slane %v4508, 4
      %v4511 = vshll.u32 %v4265, 16
      %v4513 = vrot.slane %v4511, 5
      %v4514 = vsel %vm926, %v4509, %v4513
      %v4515 = vshrl.u32 %v4265, 16
      %v4517 = vrot.slane %v4515, 4
      %v4518 = vor.u32 %v4517, %v4513
      %v4519 = vrot.slane %v4518, 4
      %v4521 = vshll.u32 %v4266, 16
      %v4523 = vrot.slane %v4521, 5
      %v4524 = vsel %vm926, %v4519, %v4523
      %v4526 = vshrl.u32 %v4267, 16
      %v4528 = vrot.slane %v4526, 4
      %v4529 = vshll.u32 %v4267, 16
      %v4531 = vrot.slane %v4529, 5
      %v4532 = vor.u32 %v4528, %v4531
      %v4533 = vrot.slane %v4532, 4
      %v4535 = vshll.u32 %v4268, 16
      %v4537 = vrot.slane %v4535, 5
      %v4538 = vsel %vm926, %v4533, %v4537
      %v4539 = vshrl.u32 %v4268, 16
      %v4541 = vrot.slane %v4539, 4
      %v4542 = vor.u32 %v4541, %v4537
      %v4543 = vrot.slane %v4542, 4
      %v4545 = vshll.u32 %v4269, 16
      %v4547 = vrot.slane %v4545, 5
      %v4548 = vsel %vm926, %v4543, %v4547
      %v4550 = vshrl.u32 %v4270, 16
      %v4552 = vrot.slane %v4550, 4
      %v4553 = vshll.u32 %v4270, 16
      %v4555 = vrot.slane %v4553, 5
      %v4556 = vor.u32 %v4552, %v4555
      %v4557 = vrot.slane %v4556, 4
      %v4559 = vshll.u32 %v4271, 16
      %v4561 = vrot.slane %v4559, 5
      %v4562 = vsel %vm926, %v4557, %v4561
      %v4563 = vshrl.u32 %v4271, 16
      %v4565 = vrot.slane %v4563, 4
      %v4566 = vor.u32 %v4565, %v4561
      %v4567 = vrot.slane %v4566, 4
      %v4569 = vshll.u32 %v4272, 16
      %v4571 = vrot.slane %v4569, 5
      %v4572 = vsel %vm926, %v4567, %v4571
      %v4574 = vshrl.u32 %v4273, 16
      %v4576 = vrot.slane %v4574, 4
      %v4577 = vshll.u32 %v4273, 16
      %v4579 = vrot.slane %v4577, 5
      %v4580 = vor.u32 %v4576, %v4579
      %v4581 = vrot.slane %v4580, 4
      %v4583 = vshll.u32 %v4274, 16
      %v4585 = vrot.slane %v4583, 5
      %v4586 = vsel %vm926, %v4581, %v4585
      %v4587 = vshrl.u32 %v4274, 16
      %v4589 = vrot.slane %v4587, 4
      %v4590 = vor.u32 %v4589, %v4585
      %v4591 = vrot.slane %v4590, 4
      %v4593 = vshll.u32 %v4275, 16
      %v4595 = vrot.slane %v4593, 5
      %v4596 = vsel %vm926, %v4591, %v4595
      %v4598 = vshrl.u32 %v4276, 16
      %v4600 = vrot.slane %v4598, 4
      %v4601 = vshll.u32 %v4276, 16
      %v4603 = vrot.slane %v4601, 5
      %v4604 = vor.u32 %v4600, %v4603
      %v4605 = vrot.slane %v4604, 4
      %v4607 = vshll.u32 %v4277, 16
      %v4609 = vrot.slane %v4607, 5
      %v4610 = vsel %vm926, %v4605, %v4609
      %v4611 = vshrl.u32 %v4277, 16
      %v4613 = vrot.slane %v4611, 4
      %v4614 = vor.u32 %v4613, %v4609
      %v4615 = vrot.slane %v4614, 4
      %v4617 = vshll.u32 %v4278, 16
      %v4619 = vrot.slane %v4617, 5
      %v4620 = vsel %vm926, %v4615, %v4619
      %v4622 = vshrl.u32 %v4279, 16
      %v4624 = vrot.slane %v4622, 4
      %v4625 = vshll.u32 %v4279, 16
      %v4627 = vrot.slane %v4625, 5
      %v4628 = vor.u32 %v4624, %v4627
      %v4629 = vrot.slane %v4628, 4
      %v4631 = vshll.u32 %v4280, 16
      %v4633 = vrot.slane %v4631, 5
      %v4634 = vsel %vm926, %v4629, %v4633
      %v4635 = vshrl.u32 %v4280, 16
      %v4637 = vrot.slane %v4635, 4
      %v4638 = vor.u32 %v4637, %v4633
      %v4639 = vrot.slane %v4638, 4
      %v4641 = vshll.u32 %v4281, 16
      %v4643 = vrot.slane %v4641, 5
      %v4644 = vsel %vm926, %v4639, %v4643
      %v4646 = vshrl.u32 %v4282, 16
      %v4648 = vrot.slane %v4646, 4
      %v4649 = vshll.u32 %v4282, 16
      %v4651 = vrot.slane %v4649, 5
      %v4652 = vor.u32 %v4648, %v4651
      %v4653 = vrot.slane %v4652, 4
      %v4655 = vshll.u32 %v4283, 16
      %v4657 = vrot.slane %v4655, 5
      %v4658 = vsel %vm926, %v4653, %v4657
      %v4659 = vshrl.u32 %v4283, 16
      %v4661 = vrot.slane %v4659, 4
      %v4662 = vor.u32 %v4661, %v4657
      %v4663 = vrot.slane %v4662, 4
      %v4665 = vshll.u32 %v4284, 16
      %v4667 = vrot.slane %v4665, 5
      %v4668 = vsel %vm926, %v4663, %v4667
      %s4669 = scalar_lea.vmem %s1, 14
      %v4670 = vld [vmem:[%s4669] sm:$0x3]
      %v4671 = vunpack.c.l.b16 %v4298
      %v4672 = vunpack.c.l.b16 %v4308
      %v4673 = vunpack.c.l.b16 %v4322
      %v4674 = vunpack.c.l.b16 %v4332
      %v4675 = vunpack.c.l.b16 %v4346
      %v4676 = vunpack.c.l.b16 %v4356
      %v4677 = vunpack.c.l.b16 %v4370
      %v4678 = vunpack.c.l.b16 %v4380
      %v4679 = vunpack.c.l.b16 %v4394
      %v4680 = vunpack.c.l.b16 %v4404
      %v4681 = vunpack.c.l.b16 %v4418
      %v4682 = vunpack.c.l.b16 %v4428
      %v4683 = vunpack.c.l.b16 %v4442
      %v4684 = vunpack.c.l.b16 %v4452
      %v4685 = vunpack.c.l.b16 %v4466
      %v4686 = vunpack.c.l.b16 %v4476
      %v4687 = vunpack.c.l.b16 %v4490
      %v4688 = vunpack.c.l.b16 %v4500
      %v4689 = vunpack.c.l.b16 %v4514
      %v4690 = vunpack.c.l.b16 %v4524
      %v4691 = vunpack.c.l.b16 %v4538
      %v4692 = vunpack.c.l.b16 %v4548
      %v4693 = vunpack.c.l.b16 %v4562
      %v4694 = vunpack.c.l.b16 %v4572
      %v4695 = vunpack.c.l.b16 %v4586
      %v4696 = vunpack.c.l.b16 %v4596
      %v4697 = vunpack.c.l.b16 %v4610
      %v4698 = vunpack.c.l.b16 %v4620
      %v4699 = vunpack.c.l.b16 %v4634
      %v4700 = vunpack.c.l.b16 %v4644
      %v4701 = vunpack.c.l.b16 %v4658
      %v4702 = vunpack.c.l.b16 %v4668
      %v4703 = vpack.c.b16 %v4672, %v4671
      %v4704 = vpack.c.b16 %v4674, %v4673
      %v4705 = vpack.c.b16 %v4676, %v4675
      %v4706 = vpack.c.b16 %v4678, %v4677
      %v4707 = vpack.c.b16 %v4680, %v4679
      %v4708 = vpack.c.b16 %v4682, %v4681
      %v4709 = vpack.c.b16 %v4684, %v4683
      %v4710 = vpack.c.b16 %v4686, %v4685
      %v4711 = vpack.c.b16 %v4688, %v4687
      %v4712 = vpack.c.b16 %v4690, %v4689
      %v4713 = vpack.c.b16 %v4692, %v4691
      %v4714 = vpack.c.b16 %v4694, %v4693
      %v4715 = vpack.c.b16 %v4696, %v4695
      %v4716 = vpack.c.b16 %v4698, %v4697
      %v4717 = vpack.c.b16 %v4700, %v4699
      %v4718 = vpack.c.b16 %v4702, %v4701
      %v4720 = vsel %vm1361, %v4703, 0
      %v4723 = vsel %vm1361, %v4704, 0
      %v4726 = vsel %vm1361, %v4705, 0
      %v4729 = vsel %vm1361, %v4706, 0
      %v4732 = vsel %vm1361, %v4707, 0
      %v4735 = vsel %vm1361, %v4708, 0
      %v4738 = vsel %vm1361, %v4709, 0
      %v4741 = vsel %vm1361, %v4710, 0
      %v4744 = vsel %vm1361, %v4711, 0
      %v4747 = vsel %vm1361, %v4712, 0
      %v4750 = vsel %vm1361, %v4713, 0
      %v4753 = vsel %vm1361, %v4714, 0
      %v4756 = vsel %vm1361, %v4715, 0
      %v4759 = vsel %vm1361, %v4716, 0
      %v4762 = vsel %vm1361, %v4717, 0
      %v4765 = vsel %vm1361, %v4718, 0
      %v4768 = vsel %vm1410, %v4670, 0
      %4770 = vmatprep.subr.bf16.mxu0 0
      %4771 = vmatpush1.bf16.msra.mxu0 0
      %4772 = vmatprep.subr.bf16.mxu0 0
      %4773 = vmatpush1.bf16.msra.mxu0 0
      %4774 = vmatprep.subr.bf16.mxu0 0
      %4775 = vmatpush1.bf16.msra.mxu0 0
      %4776 = vmatprep.subr.bf16.mxu0 0
      %4777 = vmatpush1.bf16.msra.mxu0 0
      %4778 = vmatprep.subr.bf16.mxu0 0
      %4779 = vmatpush1.bf16.msra.mxu0 0
      %4780 = vmatprep.subr.bf16.mxu0 0
      %4781 = vmatpush1.bf16.msra.mxu0 0
      %4782 = vmatprep.subr.bf16.mxu0 0
      %4783 = vmatpush1.bf16.msra.mxu0 0
      %4784 = vmatprep.subr.bf16.mxu0 0
      %4785 = vmatpush1.bf16.msra.mxu0 %v4768
      %4786 = vmatprep.subr.bf16.mxu0 0
      %4787 = vmatpush2.bf16.msra.mxu0 0
      %4788 = vmatprep.subr.bf16.mxu0 0
      %4789 = vmatpush2.bf16.msra.mxu0 0
      %4790 = vmatprep.subr.bf16.mxu0 0
      %4791 = vmatpush2.bf16.msra.mxu0 0
      %4792 = vmatprep.subr.bf16.mxu0 0
      %4793 = vmatpush2.bf16.msra.mxu0 0
      %4794 = vmatprep.subr.bf16.mxu0 0
      %4795 = vmatpush2.bf16.msra.mxu0 0
      %4796 = vmatprep.subr.bf16.mxu0 0
      %4797 = vmatpush2.bf16.msra.mxu0 0
      %4798 = vmatprep.subr.bf16.mxu0 0
      %4799 = vmatpush2.bf16.msra.mxu0 0
      %4800 = vmatprep.subr.bf16.mxu0 0
      %4801 = vmatpush2.bf16.msra.mxu0 0
      %4802 = vmatprep.mubr.bf16.mxu0 0
      %4803 = vmatmul.mubr.bf16.gmra.mxu0 %v4720
      %v4804 = vpop.f32.mrf.mxu0
      %v4805 = vadd.f32 0.0, %v4804
      %v4806 = vpop.f32.mrf.mxu0
      %v4807 = vpop.f32.mrf.mxu0
      %v4808 = vadd.f32 0.0, %v4807
      %v4809 = vpop.f32.mrf.mxu0
      %4810 = vmatprep.mubr.bf16.mxu0 0
      %4811 = vmatmul.mubr.bf16.gmra.mxu0 %v4723
      %v4812 = vpop.f32.mrf.mxu0
      %v4813 = vadd.f32 0.0, %v4812
      %v4814 = vpop.f32.mrf.mxu0
      %v4815 = vpop.f32.mrf.mxu0
      %v4816 = vadd.f32 0.0, %v4815
      %v4817 = vpop.f32.mrf.mxu0
      %4818 = vmatprep.mubr.bf16.mxu0 0
      %4819 = vmatmul.mubr.bf16.gmra.mxu0 %v4726
      %v4820 = vpop.f32.mrf.mxu0
      %v4821 = vadd.f32 0.0, %v4820
      %v4822 = vpop.f32.mrf.mxu0
      %v4823 = vpop.f32.mrf.mxu0
      %v4824 = vadd.f32 0.0, %v4823
      %v4825 = vpop.f32.mrf.mxu0
      %4826 = vmatprep.mubr.bf16.mxu0 0
      %4827 = vmatmul.mubr.bf16.gmra.mxu0 %v4729
      %v4828 = vpop.f32.mrf.mxu0
      %v4829 = vadd.f32 0.0, %v4828
      %v4830 = vpop.f32.mrf.mxu0
      %v4831 = vpop.f32.mrf.mxu0
      %v4832 = vadd.f32 0.0, %v4831
      %v4833 = vpop.f32.mrf.mxu0
      %4834 = vmatprep.mubr.bf16.mxu0 0
      %4835 = vmatmul.mubr.bf16.gmra.mxu0 %v4732
      %v4836 = vpop.f32.mrf.mxu0
      %v4837 = vadd.f32 0.0, %v4836
      %v4838 = vpop.f32.mrf.mxu0
      %v4839 = vpop.f32.mrf.mxu0
      %v4840 = vadd.f32 0.0, %v4839
      %v4841 = vpop.f32.mrf.mxu0
      %4842 = vmatprep.mubr.bf16.mxu0 0
      %4843 = vmatmul.mubr.bf16.gmra.mxu0 %v4735
      %v4844 = vpop.f32.mrf.mxu0
      %v4845 = vadd.f32 0.0, %v4844
      %v4846 = vpop.f32.mrf.mxu0
      %v4847 = vpop.f32.mrf.mxu0
      %v4848 = vadd.f32 0.0, %v4847
      %v4849 = vpop.f32.mrf.mxu0
      %4850 = vmatprep.mubr.bf16.mxu0 0
      %4851 = vmatmul.mubr.bf16.gmra.mxu0 %v4738
      %v4852 = vpop.f32.mrf.mxu0
      %v4853 = vadd.f32 0.0, %v4852
      %v4854 = vpop.f32.mrf.mxu0
      %v4855 = vpop.f32.mrf.mxu0
      %v4856 = vadd.f32 0.0, %v4855
      %v4857 = vpop.f32.mrf.mxu0
      %4858 = vmatprep.mubr.bf16.mxu0 0
      %4859 = vmatmul.mubr.bf16.gmra.mxu0 %v4741
      %v4860 = vpop.f32.mrf.mxu0
      %v4861 = vadd.f32 0.0, %v4860
      %v4862 = vpop.f32.mrf.mxu0
      %v4863 = vpop.f32.mrf.mxu0
      %v4864 = vadd.f32 0.0, %v4863
      %v4865 = vpop.f32.mrf.mxu0
      %4866 = vmatprep.mubr.bf16.mxu0 0
      %4867 = vmatmul.mubr.bf16.gmra.mxu0 %v4744
      %v4868 = vpop.f32.mrf.mxu0
      %v4869 = vadd.f32 0.0, %v4868
      %v4870 = vpop.f32.mrf.mxu0
      %v4871 = vpop.f32.mrf.mxu0
      %v4872 = vadd.f32 0.0, %v4871
      %v4873 = vpop.f32.mrf.mxu0
      %4874 = vmatprep.mubr.bf16.mxu0 0
      %4875 = vmatmul.mubr.bf16.gmra.mxu0 %v4747
      %v4876 = vpop.f32.mrf.mxu0
      %v4877 = vadd.f32 0.0, %v4876
      %v4878 = vpop.f32.mrf.mxu0
      %v4879 = vpop.f32.mrf.mxu0
      %v4880 = vadd.f32 0.0, %v4879
      %v4881 = vpop.f32.mrf.mxu0
      %4882 = vmatprep.mubr.bf16.mxu0 0
      %4883 = vmatmul.mubr.bf16.gmra.mxu0 %v4750
      %v4884 = vpop.f32.mrf.mxu0
      %v4885 = vadd.f32 0.0, %v4884
      %v4886 = vpop.f32.mrf.mxu0
      %v4887 = vpop.f32.mrf.mxu0
      %v4888 = vadd.f32 0.0, %v4887
      %v4889 = vpop.f32.mrf.mxu0
      %4890 = vmatprep.mubr.bf16.mxu0 0
      %4891 = vmatmul.mubr.bf16.gmra.mxu0 %v4753
      %v4892 = vpop.f32.mrf.mxu0
      %v4893 = vadd.f32 0.0, %v4892
      %v4894 = vpop.f32.mrf.mxu0
      %v4895 = vpop.f32.mrf.mxu0
      %v4896 = vadd.f32 0.0, %v4895
      %v4897 = vpop.f32.mrf.mxu0
      %4898 = vmatprep.mubr.bf16.mxu0 0
      %4899 = vmatmul.mubr.bf16.gmra.mxu0 %v4756
      %v4900 = vpop.f32.mrf.mxu0
      %v4901 = vadd.f32 0.0, %v4900
      %v4902 = vpop.f32.mrf.mxu0
      %v4903 = vpop.f32.mrf.mxu0
      %v4904 = vadd.f32 0.0, %v4903
      %v4905 = vpop.f32.mrf.mxu0
      %4906 = vmatprep.mubr.bf16.mxu0 0
      %4907 = vmatmul.mubr.bf16.gmra.mxu0 %v4759
      %v4908 = vpop.f32.mrf.mxu0
      %v4909 = vadd.f32 0.0, %v4908
      %v4910 = vpop.f32.mrf.mxu0
      %v4911 = vpop.f32.mrf.mxu0
      %v4912 = vadd.f32 0.0, %v4911
      %v4913 = vpop.f32.mrf.mxu0
      %4914 = vmatprep.mubr.bf16.mxu0 0
      %4915 = vmatmul.mubr.bf16.gmra.mxu0 %v4762
      %v4916 = vpop.f32.mrf.mxu0
      %v4917 = vadd.f32 0.0, %v4916
      %v4918 = vpop.f32.mrf.mxu0
      %v4919 = vpop.f32.mrf.mxu0
      %v4920 = vadd.f32 0.0, %v4919
      %v4921 = vpop.f32.mrf.mxu0
      %4922 = vmatprep.mubr.bf16.mxu0 0
      %4923 = vmatmul.mubr.bf16.gmra.mxu0 %v4765
      %v4924 = vpop.f32.mrf.mxu0
      %v4925 = vadd.f32 0.0, %v4924
      %v4926 = vpop.f32.mrf.mxu0
      %v4927 = vpop.f32.mrf.mxu0
      %v4928 = vadd.f32 0.0, %v4927
      %v4929 = vpop.f32.mrf.mxu0
      %4930 = vdwg.mxu0
      %v4931 = vadd.f32 %v4205, %v4805
      %v4932 = vadd.f32 %v4206, %v4808
      %v4933 = vadd.f32 %v4207, %v4813
      %v4934 = vadd.f32 %v4208, %v4816
      %v4935 = vadd.f32 %v4209, %v4821
      %v4936 = vadd.f32 %v4210, %v4824
      %v4937 = vadd.f32 %v4211, %v4829
      %v4938 = vadd.f32 %v4212, %v4832
      %v4939 = vadd.f32 %v4213, %v4837
      %v4940 = vadd.f32 %v4214, %v4840
      %v4941 = vadd.f32 %v4215, %v4845
      %v4942 = vadd.f32 %v4216, %v4848
      %v4943 = vadd.f32 %v4217, %v4853
      %v4944 = vadd.f32 %v4218, %v4856
      %v4945 = vadd.f32 %v4219, %v4861
      %v4946 = vadd.f32 %v4220, %v4864
      %v4947 = vadd.f32 %v4221, %v4869
      %v4948 = vadd.f32 %v4222, %v4872
      %v4949 = vadd.f32 %v4223, %v4877
      %v4950 = vadd.f32 %v4224, %v4880
      %v4951 = vadd.f32 %v4225, %v4885
      %v4952 = vadd.f32 %v4226, %v4888
      %v4953 = vadd.f32 %v4227, %v4893
      %v4954 = vadd.f32 %v4228, %v4896
      %v4955 = vadd.f32 %v4229, %v4901
      %v4956 = vadd.f32 %v4230, %v4904
      %v4957 = vadd.f32 %v4231, %v4909
      %v4958 = vadd.f32 %v4232, %v4912
      %v4959 = vadd.f32 %v4233, %v4917
      %v4960 = vadd.f32 %v4234, %v4920
      %v4961 = vadd.f32 %v4235, %v4925
      %v4962 = vadd.f32 %v4236, %v4928
      %v4963 = vld [vmem:[%s3878] sm:$0xe]
      %v4964 = vld [vmem:[%s3878 + $0xc] sm:$0xe]
      %v4965 = vld [vmem:[%s3878 + $0x18] sm:$0xe]
      %v4966 = vld [vmem:[%s3878 + $0x24] sm:$0xe]
      %v4967 = vld [vmem:[%s3878 + $0x30] sm:$0xe]
      %v4968 = vld [vmem:[%s3878 + $0x3c] sm:$0xe]
      %v4969 = vld [vmem:[%s3878 + $0x48] sm:$0xe]
      %v4970 = vld [vmem:[%s3878 + $0x54] sm:$0xe]
      %v4971 = vld [vmem:[%s3878 + $0x60] sm:$0xe]
      %v4972 = vld [vmem:[%s3878 + $0x6c] sm:$0xe]
      %v4973 = vld [vmem:[%s3878 + $0x78] sm:$0xe]
      %v4974 = vld [vmem:[%s3878 + $0x84] sm:$0xe]
      %v4975 = vld [vmem:[%s3878 + $0x90] sm:$0xe]
      %v4976 = vld [vmem:[%s3878 + $0x9c] sm:$0xe]
      %v4977 = vld [vmem:[%s3878 + $0xa8] sm:$0xe]
      %v4978 = vld [vmem:[%s3878 + $0xb4] sm:$0xe]
      %v5027 = vrot.slane %v4963, 5
      %v5028 = vrot.slane %v5027, 4
      %v5029 = vrot.slane %v4238, 5
      %v5030 = vsel %vm1917, %v5028, %v5029
      %v5031 = vrot.slane %v5029, 4
      %v5032 = vrot.slane %v4239, 5
      %v5033 = vsel %vm1917, %v5031, %v5032
      %v5034 = vrot.slane %v4964, 5
      %v5035 = vrot.slane %v5034, 4
      %v5036 = vrot.slane %v4241, 5
      %v5037 = vsel %vm1917, %v5035, %v5036
      %v5038 = vrot.slane %v5036, 4
      %v5039 = vrot.slane %v4242, 5
      %v5040 = vsel %vm1917, %v5038, %v5039
      %v5041 = vrot.slane %v4965, 5
      %v5042 = vrot.slane %v5041, 4
      %v5043 = vrot.slane %v4244, 5
      %v5044 = vsel %vm1917, %v5042, %v5043
      %v5045 = vrot.slane %v5043, 4
      %v5046 = vrot.slane %v4245, 5
      %v5047 = vsel %vm1917, %v5045, %v5046
      %v5048 = vrot.slane %v4966, 5
      %v5049 = vrot.slane %v5048, 4
      %v5050 = vrot.slane %v4247, 5
      %v5051 = vsel %vm1917, %v5049, %v5050
      %v5052 = vrot.slane %v5050, 4
      %v5053 = vrot.slane %v4248, 5
      %v5054 = vsel %vm1917, %v5052, %v5053
      %v5055 = vrot.slane %v4967, 5
      %v5056 = vrot.slane %v5055, 4
      %v5057 = vrot.slane %v4250, 5
      %v5058 = vsel %vm1917, %v5056, %v5057
      %v5059 = vrot.slane %v5057, 4
      %v5060 = vrot.slane %v4251, 5
      %v5061 = vsel %vm1917, %v5059, %v5060
      %v5062 = vrot.slane %v4968, 5
      %v5063 = vrot.slane %v5062, 4
      %v5064 = vrot.slane %v4253, 5
      %v5065 = vsel %vm1917, %v5063, %v5064
      %v5066 = vrot.slane %v5064, 4
      %v5067 = vrot.slane %v4254, 5
      %v5068 = vsel %vm1917, %v5066, %v5067
      %v5069 = vrot.slane %v4969, 5
      %v5070 = vrot.slane %v5069, 4
      %v5071 = vrot.slane %v4256, 5
      %v5072 = vsel %vm1917, %v5070, %v5071
      %v5073 = vrot.slane %v5071, 4
      %v5074 = vrot.slane %v4257, 5
      %v5075 = vsel %vm1917, %v5073, %v5074
      %v5076 = vrot.slane %v4970, 5
      %v5077 = vrot.slane %v5076, 4
      %v5078 = vrot.slane %v4259, 5
      %v5079 = vsel %vm1917, %v5077, %v5078
      %v5080 = vrot.slane %v5078, 4
      %v5081 = vrot.slane %v4260, 5
      %v5082 = vsel %vm1917, %v5080, %v5081
      %v5083 = vrot.slane %v4971, 5
      %v5084 = vrot.slane %v5083, 4
      %v5085 = vrot.slane %v4262, 5
      %v5086 = vsel %vm1917, %v5084, %v5085
      %v5087 = vrot.slane %v5085, 4
      %v5088 = vrot.slane %v4263, 5
      %v5089 = vsel %vm1917, %v5087, %v5088
      %v5090 = vrot.slane %v4972, 5
      %v5091 = vrot.slane %v5090, 4
      %v5092 = vrot.slane %v4265, 5
      %v5093 = vsel %vm1917, %v5091, %v5092
      %v5094 = vrot.slane %v5092, 4
      %v5095 = vrot.slane %v4266, 5
      %v5096 = vsel %vm1917, %v5094, %v5095
      %v5097 = vrot.slane %v4973, 5
      %v5098 = vrot.slane %v5097, 4
      %v5099 = vrot.slane %v4268, 5
      %v5100 = vsel %vm1917, %v5098, %v5099
      %v5101 = vrot.slane %v5099, 4
      %v5102 = vrot.slane %v4269, 5
      %v5103 = vsel %vm1917, %v5101, %v5102
      %v5104 = vrot.slane %v4974, 5
      %v5105 = vrot.slane %v5104, 4
      %v5106 = vrot.slane %v4271, 5
      %v5107 = vsel %vm1917, %v5105, %v5106
      %v5108 = vrot.slane %v5106, 4
      %v5109 = vrot.slane %v4272, 5
      %v5110 = vsel %vm1917, %v5108, %v5109
      %v5111 = vrot.slane %v4975, 5
      %v5112 = vrot.slane %v5111, 4
      %v5113 = vrot.slane %v4274, 5
      %v5114 = vsel %vm1917, %v5112, %v5113
      %v5115 = vrot.slane %v5113, 4
      %v5116 = vrot.slane %v4275, 5
      %v5117 = vsel %vm1917, %v5115, %v5116
      %v5118 = vrot.slane %v4976, 5
      %v5119 = vrot.slane %v5118, 4
      %v5120 = vrot.slane %v4277, 5
      %v5121 = vsel %vm1917, %v5119, %v5120
      %v5122 = vrot.slane %v5120, 4
      %v5123 = vrot.slane %v4278, 5
      %v5124 = vsel %vm1917, %v5122, %v5123
      %v5125 = vrot.slane %v4977, 5
      %v5126 = vrot.slane %v5125, 4
      %v5127 = vrot.slane %v4280, 5
      %v5128 = vsel %vm1917, %v5126, %v5127
      %v5129 = vrot.slane %v5127, 4
      %v5130 = vrot.slane %v4281, 5
      %v5131 = vsel %vm1917, %v5129, %v5130
      %v5132 = vrot.slane %v4978, 5
      %v5133 = vrot.slane %v5132, 4
      %v5134 = vrot.slane %v4283, 5
      %v5135 = vsel %vm1917, %v5133, %v5134
      %v5136 = vrot.slane %v5134, 4
      %v5137 = vrot.slane %v4284, 5
      %v5138 = vsel %vm1917, %v5136, %v5137
      %s5139 = scalar_lea.vmem %s1, 16
      %v5140 = vld [vmem:[%s5139] sm:$0x3]
      %v5141 = vunpack.c.l.b16 %v5030
      %v5142 = vunpack.c.l.b16 %v5033
      %v5143 = vunpack.c.l.b16 %v5037
      %v5144 = vunpack.c.l.b16 %v5040
      %v5145 = vunpack.c.l.b16 %v5044
      %v5146 = vunpack.c.l.b16 %v5047
      %v5147 = vunpack.c.l.b16 %v5051
      %v5148 = vunpack.c.l.b16 %v5054
      %v5149 = vunpack.c.l.b16 %v5058
      %v5150 = vunpack.c.l.b16 %v5061
      %v5151 = vunpack.c.l.b16 %v5065
      %v5152 = vunpack.c.l.b16 %v5068
      %v5153 = vunpack.c.l.b16 %v5072
      %v5154 = vunpack.c.l.b16 %v5075
      %v5155 = vunpack.c.l.b16 %v5079
      %v5156 = vunpack.c.l.b16 %v5082
      %v5157 = vunpack.c.l.b16 %v5086
      %v5158 = vunpack.c.l.b16 %v5089
      %v5159 = vunpack.c.l.b16 %v5093
      %v5160 = vunpack.c.l.b16 %v5096
      %v5161 = vunpack.c.l.b16 %v5100
      %v5162 = vunpack.c.l.b16 %v5103
      %v5163 = vunpack.c.l.b16 %v5107
      %v5164 = vunpack.c.l.b16 %v5110
      %v5165 = vunpack.c.l.b16 %v5114
      %v5166 = vunpack.c.l.b16 %v5117
      %v5167 = vunpack.c.l.b16 %v5121
      %v5168 = vunpack.c.l.b16 %v5124
      %v5169 = vunpack.c.l.b16 %v5128
      %v5170 = vunpack.c.l.b16 %v5131
      %v5171 = vunpack.c.l.b16 %v5135
      %v5172 = vunpack.c.l.b16 %v5138
      %v5173 = vpack.c.b16 %v5142, %v5141
      %v5174 = vpack.c.b16 %v5144, %v5143
      %v5175 = vpack.c.b16 %v5146, %v5145
      %v5176 = vpack.c.b16 %v5148, %v5147
      %v5177 = vpack.c.b16 %v5150, %v5149
      %v5178 = vpack.c.b16 %v5152, %v5151
      %v5179 = vpack.c.b16 %v5154, %v5153
      %v5180 = vpack.c.b16 %v5156, %v5155
      %v5181 = vpack.c.b16 %v5158, %v5157
      %v5182 = vpack.c.b16 %v5160, %v5159
      %v5183 = vpack.c.b16 %v5162, %v5161
      %v5184 = vpack.c.b16 %v5164, %v5163
      %v5185 = vpack.c.b16 %v5166, %v5165
      %v5186 = vpack.c.b16 %v5168, %v5167
      %v5187 = vpack.c.b16 %v5170, %v5169
      %v5188 = vpack.c.b16 %v5172, %v5171
      %v5190 = vsel %vm1361, %v5173, 0
      %v5193 = vsel %vm1361, %v5174, 0
      %v5196 = vsel %vm1361, %v5175, 0
      %v5199 = vsel %vm1361, %v5176, 0
      %v5202 = vsel %vm1361, %v5177, 0
      %v5205 = vsel %vm1361, %v5178, 0
      %v5208 = vsel %vm1361, %v5179, 0
      %v5211 = vsel %vm1361, %v5180, 0
      %v5214 = vsel %vm1361, %v5181, 0
      %v5217 = vsel %vm1361, %v5182, 0
      %v5220 = vsel %vm1361, %v5183, 0
      %v5223 = vsel %vm1361, %v5184, 0
      %v5226 = vsel %vm1361, %v5185, 0
      %v5229 = vsel %vm1361, %v5186, 0
      %v5232 = vsel %vm1361, %v5187, 0
      %v5235 = vsel %vm1361, %v5188, 0
      %v5238 = vsel %vm1410, %v5140, 0
      %5240 = vmatprep.subr.bf16.mxu0 0
      %5241 = vmatpush1.bf16.msra.mxu0 0
      %5242 = vmatprep.subr.bf16.mxu0 0
      %5243 = vmatpush1.bf16.msra.mxu0 0
      %5244 = vmatprep.subr.bf16.mxu0 0
      %5245 = vmatpush1.bf16.msra.mxu0 0
      %5246 = vmatprep.subr.bf16.mxu0 0
      %5247 = vmatpush1.bf16.msra.mxu0 0
      %5248 = vmatprep.subr.bf16.mxu0 0
      %5249 = vmatpush1.bf16.msra.mxu0 0
      %5250 = vmatprep.subr.bf16.mxu0 0
      %5251 = vmatpush1.bf16.msra.mxu0 0
      %5252 = vmatprep.subr.bf16.mxu0 0
      %5253 = vmatpush1.bf16.msra.mxu0 0
      %5254 = vmatprep.subr.bf16.mxu0 0
      %5255 = vmatpush1.bf16.msra.mxu0 %v5238
      %5256 = vmatprep.subr.bf16.mxu0 0
      %5257 = vmatpush2.bf16.msra.mxu0 0
      %5258 = vmatprep.subr.bf16.mxu0 0
      %5259 = vmatpush2.bf16.msra.mxu0 0
      %5260 = vmatprep.subr.bf16.mxu0 0
      %5261 = vmatpush2.bf16.msra.mxu0 0
      %5262 = vmatprep.subr.bf16.mxu0 0
      %5263 = vmatpush2.bf16.msra.mxu0 0
      %5264 = vmatprep.subr.bf16.mxu0 0
      %5265 = vmatpush2.bf16.msra.mxu0 0
      %5266 = vmatprep.subr.bf16.mxu0 0
      %5267 = vmatpush2.bf16.msra.mxu0 0
      %5268 = vmatprep.subr.bf16.mxu0 0
      %5269 = vmatpush2.bf16.msra.mxu0 0
      %5270 = vmatprep.subr.bf16.mxu0 0
      %5271 = vmatpush2.bf16.msra.mxu0 0
      %5272 = vmatprep.mubr.bf16.mxu0 0
      %5273 = vmatmul.mubr.bf16.gmra.mxu0 %v5190
      %v5274 = vpop.f32.mrf.mxu0
      %v5275 = vadd.f32 0.0, %v5274
      %v5276 = vpop.f32.mrf.mxu0
      %v5277 = vpop.f32.mrf.mxu0
      %v5278 = vadd.f32 0.0, %v5277
      %v5279 = vpop.f32.mrf.mxu0
      %5280 = vmatprep.mubr.bf16.mxu0 0
      %5281 = vmatmul.mubr.bf16.gmra.mxu0 %v5193
      %v5282 = vpop.f32.mrf.mxu0
      %v5283 = vadd.f32 0.0, %v5282
      %v5284 = vpop.f32.mrf.mxu0
      %v5285 = vpop.f32.mrf.mxu0
      %v5286 = vadd.f32 0.0, %v5285
      %v5287 = vpop.f32.mrf.mxu0
      %5288 = vmatprep.mubr.bf16.mxu0 0
      %5289 = vmatmul.mubr.bf16.gmra.mxu0 %v5196
      %v5290 = vpop.f32.mrf.mxu0
      %v5291 = vadd.f32 0.0, %v5290
      %v5292 = vpop.f32.mrf.mxu0
      %v5293 = vpop.f32.mrf.mxu0
      %v5294 = vadd.f32 0.0, %v5293
      %v5295 = vpop.f32.mrf.mxu0
      %5296 = vmatprep.mubr.bf16.mxu0 0
      %5297 = vmatmul.mubr.bf16.gmra.mxu0 %v5199
      %v5298 = vpop.f32.mrf.mxu0
      %v5299 = vadd.f32 0.0, %v5298
      %v5300 = vpop.f32.mrf.mxu0
      %v5301 = vpop.f32.mrf.mxu0
      %v5302 = vadd.f32 0.0, %v5301
      %v5303 = vpop.f32.mrf.mxu0
      %5304 = vmatprep.mubr.bf16.mxu0 0
      %5305 = vmatmul.mubr.bf16.gmra.mxu0 %v5202
      %v5306 = vpop.f32.mrf.mxu0
      %v5307 = vadd.f32 0.0, %v5306
      %v5308 = vpop.f32.mrf.mxu0
      %v5309 = vpop.f32.mrf.mxu0
      %v5310 = vadd.f32 0.0, %v5309
      %v5311 = vpop.f32.mrf.mxu0
      %5312 = vmatprep.mubr.bf16.mxu0 0
      %5313 = vmatmul.mubr.bf16.gmra.mxu0 %v5205
      %v5314 = vpop.f32.mrf.mxu0
      %v5315 = vadd.f32 0.0, %v5314
      %v5316 = vpop.f32.mrf.mxu0
      %v5317 = vpop.f32.mrf.mxu0
      %v5318 = vadd.f32 0.0, %v5317
      %v5319 = vpop.f32.mrf.mxu0
      %5320 = vmatprep.mubr.bf16.mxu0 0
      %5321 = vmatmul.mubr.bf16.gmra.mxu0 %v5208
      %v5322 = vpop.f32.mrf.mxu0
      %v5323 = vadd.f32 0.0, %v5322
      %v5324 = vpop.f32.mrf.mxu0
      %v5325 = vpop.f32.mrf.mxu0
      %v5326 = vadd.f32 0.0, %v5325
      %v5327 = vpop.f32.mrf.mxu0
      %5328 = vmatprep.mubr.bf16.mxu0 0
      %5329 = vmatmul.mubr.bf16.gmra.mxu0 %v5211
      %v5330 = vpop.f32.mrf.mxu0
      %v5331 = vadd.f32 0.0, %v5330
      %v5332 = vpop.f32.mrf.mxu0
      %v5333 = vpop.f32.mrf.mxu0
      %v5334 = vadd.f32 0.0, %v5333
      %v5335 = vpop.f32.mrf.mxu0
      %5336 = vmatprep.mubr.bf16.mxu0 0
      %5337 = vmatmul.mubr.bf16.gmra.mxu0 %v5214
      %v5338 = vpop.f32.mrf.mxu0
      %v5339 = vadd.f32 0.0, %v5338
      %v5340 = vpop.f32.mrf.mxu0
      %v5341 = vpop.f32.mrf.mxu0
      %v5342 = vadd.f32 0.0, %v5341
      %v5343 = vpop.f32.mrf.mxu0
      %5344 = vmatprep.mubr.bf16.mxu0 0
      %5345 = vmatmul.mubr.bf16.gmra.mxu0 %v5217
      %v5346 = vpop.f32.mrf.mxu0
      %v5347 = vadd.f32 0.0, %v5346
      %v5348 = vpop.f32.mrf.mxu0
      %v5349 = vpop.f32.mrf.mxu0
      %v5350 = vadd.f32 0.0, %v5349
      %v5351 = vpop.f32.mrf.mxu0
      %5352 = vmatprep.mubr.bf16.mxu0 0
      %5353 = vmatmul.mubr.bf16.gmra.mxu0 %v5220
      %v5354 = vpop.f32.mrf.mxu0
      %v5355 = vadd.f32 0.0, %v5354
      %v5356 = vpop.f32.mrf.mxu0
      %v5357 = vpop.f32.mrf.mxu0
      %v5358 = vadd.f32 0.0, %v5357
      %v5359 = vpop.f32.mrf.mxu0
      %5360 = vmatprep.mubr.bf16.mxu0 0
      %5361 = vmatmul.mubr.bf16.gmra.mxu0 %v5223
      %v5362 = vpop.f32.mrf.mxu0
      %v5363 = vadd.f32 0.0, %v5362
      %v5364 = vpop.f32.mrf.mxu0
      %v5365 = vpop.f32.mrf.mxu0
      %v5366 = vadd.f32 0.0, %v5365
      %v5367 = vpop.f32.mrf.mxu0
      %5368 = vmatprep.mubr.bf16.mxu0 0
      %5369 = vmatmul.mubr.bf16.gmra.mxu0 %v5226
      %v5370 = vpop.f32.mrf.mxu0
      %v5371 = vadd.f32 0.0, %v5370
      %v5372 = vpop.f32.mrf.mxu0
      %v5373 = vpop.f32.mrf.mxu0
      %v5374 = vadd.f32 0.0, %v5373
      %v5375 = vpop.f32.mrf.mxu0
      %5376 = vmatprep.mubr.bf16.mxu0 0
      %5377 = vmatmul.mubr.bf16.gmra.mxu0 %v5229
      %v5378 = vpop.f32.mrf.mxu0
      %v5379 = vadd.f32 0.0, %v5378
      %v5380 = vpop.f32.mrf.mxu0
      %v5381 = vpop.f32.mrf.mxu0
      %v5382 = vadd.f32 0.0, %v5381
      %v5383 = vpop.f32.mrf.mxu0
      %5384 = vmatprep.mubr.bf16.mxu0 0
      %5385 = vmatmul.mubr.bf16.gmra.mxu0 %v5232
      %v5386 = vpop.f32.mrf.mxu0
      %v5387 = vadd.f32 0.0, %v5386
      %v5388 = vpop.f32.mrf.mxu0
      %v5389 = vpop.f32.mrf.mxu0
      %v5390 = vadd.f32 0.0, %v5389
      %v5391 = vpop.f32.mrf.mxu0
      %5392 = vmatprep.mubr.bf16.mxu0 0
      %5393 = vmatmul.mubr.bf16.gmra.mxu0 %v5235
      %v5394 = vpop.f32.mrf.mxu0
      %v5395 = vadd.f32 0.0, %v5394
      %v5396 = vpop.f32.mrf.mxu0
      %v5397 = vpop.f32.mrf.mxu0
      %v5398 = vadd.f32 0.0, %v5397
      %v5399 = vpop.f32.mrf.mxu0
      %5400 = vdwg.mxu0
      %v5401 = vadd.f32 %v4931, %v5275
      %v5402 = vadd.f32 %v4932, %v5278
      %v5403 = vadd.f32 %v4933, %v5283
      %v5404 = vadd.f32 %v4934, %v5286
      %v5405 = vadd.f32 %v4935, %v5291
      %v5406 = vadd.f32 %v4936, %v5294
      %v5407 = vadd.f32 %v4937, %v5299
      %v5408 = vadd.f32 %v4938, %v5302
      %v5409 = vadd.f32 %v4939, %v5307
      %v5410 = vadd.f32 %v4940, %v5310
      %v5411 = vadd.f32 %v4941, %v5315
      %v5412 = vadd.f32 %v4942, %v5318
      %v5413 = vadd.f32 %v4943, %v5323
      %v5414 = vadd.f32 %v4944, %v5326
      %v5415 = vadd.f32 %v4945, %v5331
      %v5416 = vadd.f32 %v4946, %v5334
      %v5417 = vadd.f32 %v4947, %v5339
      %v5418 = vadd.f32 %v4948, %v5342
      %v5419 = vadd.f32 %v4949, %v5347
      %v5420 = vadd.f32 %v4950, %v5350
      %v5421 = vadd.f32 %v4951, %v5355
      %v5422 = vadd.f32 %v4952, %v5358
      %v5423 = vadd.f32 %v4953, %v5363
      %v5424 = vadd.f32 %v4954, %v5366
      %v5425 = vadd.f32 %v4955, %v5371
      %v5426 = vadd.f32 %v4956, %v5374
      %v5427 = vadd.f32 %v4957, %v5379
      %v5428 = vadd.f32 %v4958, %v5382
      %v5429 = vadd.f32 %v4959, %v5387
      %v5430 = vadd.f32 %v4960, %v5390
      %v5431 = vadd.f32 %v4961, %v5395
      %v5432 = vadd.f32 %v4962, %v5398
      %v5434 = vlaneseq
      %v5435 = vshrl.u32 %v5434, 7
      %v5436 = vsub.s32 0, %v5435
      %v5437 = vrot.slane %v873, %v5436
      %v5439 = vmul.f32 %v5401, %v5437
      %v5440 = vmul.f32 %v5402, %v5437
      %v5441 = vmul.f32 %v5403, %v5437
      %v5442 = vmul.f32 %v5404, %v5437
      %v5443 = vmul.f32 %v5405, %v5437
      %v5444 = vmul.f32 %v5406, %v5437
      %v5445 = vmul.f32 %v5407, %v5437
      %v5446 = vmul.f32 %v5408, %v5437
      %v5447 = vmul.f32 %v5409, %v5437
      %v5448 = vmul.f32 %v5410, %v5437
      %v5449 = vmul.f32 %v5411, %v5437
      %v5450 = vmul.f32 %v5412, %v5437
      %v5451 = vmul.f32 %v5413, %v5437
      %v5452 = vmul.f32 %v5414, %v5437
      %v5453 = vmul.f32 %v5415, %v5437
      %v5454 = vmul.f32 %v5416, %v5437
      %v5455 = vmul.f32 %v5417, %v5437
      %v5456 = vmul.f32 %v5418, %v5437
      %v5457 = vmul.f32 %v5419, %v5437
      %v5458 = vmul.f32 %v5420, %v5437
      %v5459 = vmul.f32 %v5421, %v5437
      %v5460 = vmul.f32 %v5422, %v5437
      %v5461 = vmul.f32 %v5423, %v5437
      %v5462 = vmul.f32 %v5424, %v5437
      %v5463 = vmul.f32 %v5425, %v5437
      %v5464 = vmul.f32 %v5426, %v5437
      %v5465 = vmul.f32 %v5427, %v5437
      %v5466 = vmul.f32 %v5428, %v5437
      %v5467 = vmul.f32 %v5429, %v5437
      %v5468 = vmul.f32 %v5430, %v5437
      %v5469 = vmul.f32 %v5431, %v5437
      %v5470 = vmul.f32 %v5432, %v5437
      %v5472 = vlaneseq
      %v5473 = vshrl.u32 %v5472, 7
      %v5474 = vsub.s32 0, %v5473
      %v5475 = vrot.slane %v874, %v5474
      %v5477 = vadd.f32 %v5439, %v5475
      %v5478 = vadd.f32 %v5440, %v5475
      %v5479 = vadd.f32 %v5441, %v5475
      %v5480 = vadd.f32 %v5442, %v5475
      %v5481 = vadd.f32 %v5443, %v5475
      %v5482 = vadd.f32 %v5444, %v5475
      %v5483 = vadd.f32 %v5445, %v5475
      %v5484 = vadd.f32 %v5446, %v5475
      %v5485 = vadd.f32 %v5447, %v5475
      %v5486 = vadd.f32 %v5448, %v5475
      %v5487 = vadd.f32 %v5449, %v5475
      %v5488 = vadd.f32 %v5450, %v5475
      %v5489 = vadd.f32 %v5451, %v5475
      %v5490 = vadd.f32 %v5452, %v5475
      %v5491 = vadd.f32 %v5453, %v5475
      %v5492 = vadd.f32 %v5454, %v5475
      %v5493 = vadd.f32 %v5455, %v5475
      %v5494 = vadd.f32 %v5456, %v5475
      %v5495 = vadd.f32 %v5457, %v5475
      %v5496 = vadd.f32 %v5458, %v5475
      %v5497 = vadd.f32 %v5459, %v5475
      %v5498 = vadd.f32 %v5460, %v5475
      %v5499 = vadd.f32 %v5461, %v5475
      %v5500 = vadd.f32 %v5462, %v5475
      %v5501 = vadd.f32 %v5463, %v5475
      %v5502 = vadd.f32 %v5464, %v5475
      %v5503 = vadd.f32 %v5465, %v5475
      %v5504 = vadd.f32 %v5466, %v5475
      %v5505 = vadd.f32 %v5467, %v5475
      %v5506 = vadd.f32 %v5468, %v5475
      %v5507 = vadd.f32 %v5469, %v5475
      %v5508 = vadd.f32 %v5470, %v5475
      %v5509 = vmax.f32 %v5477, 0.0
      %v5510 = vmax.f32 %v5478, 0.0
      %v5511 = vmax.f32 %v5479, 0.0
      %v5512 = vmax.f32 %v5480, 0.0
      %v5513 = vmax.f32 %v5481, 0.0
      %v5514 = vmax.f32 %v5482, 0.0
      %v5515 = vmax.f32 %v5483, 0.0
      %v5516 = vmax.f32 %v5484, 0.0
      %v5517 = vmax.f32 %v5485, 0.0
      %v5518 = vmax.f32 %v5486, 0.0
      %v5519 = vmax.f32 %v5487, 0.0
      %v5520 = vmax.f32 %v5488, 0.0
      %v5521 = vmax.f32 %v5489, 0.0
      %v5522 = vmax.f32 %v5490, 0.0
      %v5523 = vmax.f32 %v5491, 0.0
      %v5524 = vmax.f32 %v5492, 0.0
      %v5525 = vmax.f32 %v5493, 0.0
      %v5526 = vmax.f32 %v5494, 0.0
      %v5527 = vmax.f32 %v5495, 0.0
      %v5528 = vmax.f32 %v5496, 0.0
      %v5529 = vmax.f32 %v5497, 0.0
      %v5530 = vmax.f32 %v5498, 0.0
      %v5531 = vmax.f32 %v5499, 0.0
      %v5532 = vmax.f32 %v5500, 0.0
      %v5533 = vmax.f32 %v5501, 0.0
      %v5534 = vmax.f32 %v5502, 0.0
      %v5535 = vmax.f32 %v5503, 0.0
      %v5536 = vmax.f32 %v5504, 0.0
      %v5537 = vmax.f32 %v5505, 0.0
      %v5538 = vmax.f32 %v5506, 0.0
      %v5539 = vmax.f32 %v5507, 0.0
      %v5540 = vmax.f32 %v5508, 0.0
      %v5541 = vld [vmem:[#allocation3] sm:$0x1]
      %vm5542 = vcmask 64512
      %v5543 = vsel %vm5542, %v5509, 0.0
      %v5544 = vsel %vm5542, %v5510, 0.0
      %v5545 = vadd.f32 %v5543, %v5544
      %v5546 = vsel %vm5542, %v5511, 0.0
      %v5547 = vadd.f32 %v5545, %v5546
      %v5548 = vsel %vm5542, %v5512, 0.0
      %v5549 = vadd.f32 %v5547, %v5548
      %v5550 = vsel %vm5542, %v5513, 0.0
      %v5551 = vadd.f32 %v5549, %v5550
      %v5552 = vsel %vm5542, %v5514, 0.0
      %v5553 = vadd.f32 %v5551, %v5552
      %v5554 = vsel %vm5542, %v5515, 0.0
      %v5555 = vadd.f32 %v5553, %v5554
      %v5556 = vsel %vm5542, %v5516, 0.0
      %v5557 = vadd.f32 %v5555, %v5556
      %v5558 = vsel %vm5542, %v5517, 0.0
      %v5559 = vadd.f32 %v5557, %v5558
      %v5560 = vsel %vm5542, %v5518, 0.0
      %v5561 = vadd.f32 %v5559, %v5560
      %v5562 = vsel %vm5542, %v5519, 0.0
      %v5563 = vadd.f32 %v5561, %v5562
      %v5564 = vsel %vm5542, %v5520, 0.0
      %v5565 = vadd.f32 %v5563, %v5564
      %v5566 = vsel %vm5542, %v5521, 0.0
      %v5567 = vadd.f32 %v5565, %v5566
      %v5568 = vsel %vm5542, %v5522, 0.0
      %v5569 = vadd.f32 %v5567, %v5568
      %v5570 = vsel %vm5542, %v5523, 0.0
      %v5571 = vadd.f32 %v5569, %v5570
      %v5572 = vsel %vm5542, %v5524, 0.0
      %v5573 = vadd.f32 %v5571, %v5572
      %v5574 = vsel %vm5542, %v5525, 0.0
      %v5575 = vadd.f32 %v5573, %v5574
      %v5576 = vsel %vm5542, %v5526, 0.0
      %v5577 = vadd.f32 %v5575, %v5576
      %v5578 = vsel %vm5542, %v5527, 0.0
      %v5579 = vadd.f32 %v5577, %v5578
      %v5580 = vsel %vm5542, %v5528, 0.0
      %v5581 = vadd.f32 %v5579, %v5580
      %v5582 = vsel %vm5542, %v5529, 0.0
      %v5583 = vadd.f32 %v5581, %v5582
      %v5584 = vsel %vm5542, %v5530, 0.0
      %v5585 = vadd.f32 %v5583, %v5584
      %v5586 = vsel %vm5542, %v5531, 0.0
      %v5587 = vadd.f32 %v5585, %v5586
      %v5588 = vsel %vm5542, %v5532, 0.0
      %v5589 = vadd.f32 %v5587, %v5588
      %v5590 = vsel %vm5542, %v5533, 0.0
      %v5591 = vadd.f32 %v5589, %v5590
      %v5592 = vsel %vm5542, %v5534, 0.0
      %v5593 = vadd.f32 %v5591, %v5592
      %v5594 = vsel %vm5542, %v5535, 0.0
      %v5595 = vadd.f32 %v5593, %v5594
      %v5596 = vsel %vm5542, %v5536, 0.0
      %v5597 = vadd.f32 %v5595, %v5596
      %v5598 = vsel %vm5542, %v5537, 0.0
      %v5599 = vadd.f32 %v5597, %v5598
      %v5600 = vsel %vm5542, %v5538, 0.0
      %v5601 = vadd.f32 %v5599, %v5600
      %v5602 = vsel %vm5542, %v5539, 0.0
      %v5603 = vadd.f32 %v5601, %v5602
      %v5604 = vsel %vm5542, %v5540, 0.0
      %v5605 = vadd.f32 %v5603, %v5604
      %v5606 = vrot.slane %v5605, 4
      %v5607 = vadd.f32 %v5605, %v5606
      %v5608 = vrot.slane %v5607, 2
      %v5609 = vadd.f32 %v5607, %v5608
      %v5610 = vrot.slane %v5609, 1
      %v5611 = vadd.f32 %v5609, %v5610
      %v5612 = vadd.f32 %v5541, %v5611
      %5613 = vst.msk [vmem:[#allocation3] sm:$0x1] %vm871, %v5612
      %v5614 = vpack.c.bf16 %v5510, %v5509
      %v5615 = vpack.c.bf16 %v5512, %v5511
      %v5616 = vpack.c.bf16 %v5514, %v5513
      %v5617 = vpack.c.bf16 %v5516, %v5515
      %v5618 = vpack.c.bf16 %v5518, %v5517
      %v5619 = vpack.c.bf16 %v5520, %v5519
      %v5620 = vpack.c.bf16 %v5522, %v5521
      %v5621 = vpack.c.bf16 %v5524, %v5523
      %v5622 = vpack.c.bf16 %v5526, %v5525
      %v5623 = vpack.c.bf16 %v5528, %v5527
      %v5624 = vpack.c.bf16 %v5530, %v5529
      %v5625 = vpack.c.bf16 %v5532, %v5531
      %v5626 = vpack.c.bf16 %v5534, %v5533
      %v5627 = vpack.c.bf16 %v5536, %v5535
      %v5628 = vpack.c.bf16 %v5538, %v5537
      %v5629 = vpack.c.bf16 %v5540, %v5539
      %v5646 = vunpack.c.l.b16 %v5614
      %v5647 = vunpack.c.h.b16 %v5614
      %v5648 = vunpack.c.l.b16 %v5615
      %v5649 = vunpack.c.h.b16 %v5615
      %v5650 = vunpack.c.l.b16 %v5616
      %v5651 = vunpack.c.h.b16 %v5616
      %v5652 = vunpack.c.l.b16 %v5617
      %v5653 = vunpack.c.h.b16 %v5617
      %v5654 = vunpack.c.l.b16 %v5618
      %v5655 = vunpack.c.h.b16 %v5618
      %v5656 = vunpack.c.l.b16 %v5619
      %v5657 = vunpack.c.h.b16 %v5619
      %v5658 = vunpack.c.l.b16 %v5620
      %v5659 = vunpack.c.h.b16 %v5620
      %v5660 = vunpack.c.l.b16 %v5621
      %v5661 = vunpack.c.h.b16 %v5621
      %v5662 = vunpack.c.l.b16 %v5622
      %v5663 = vunpack.c.h.b16 %v5622
      %v5664 = vunpack.c.l.b16 %v5623
      %v5665 = vunpack.c.h.b16 %v5623
      %v5666 = vunpack.c.l.b16 %v5624
      %v5667 = vunpack.c.h.b16 %v5624
      %v5668 = vunpack.c.l.b16 %v5625
      %v5669 = vunpack.c.h.b16 %v5625
      %v5670 = vunpack.c.l.b16 %v5626
      %v5671 = vunpack.c.h.b16 %v5626
      %v5672 = vunpack.c.l.b16 %v5627
      %v5673 = vunpack.c.h.b16 %v5627
      %v5674 = vunpack.c.l.b16 %v5628
      %v5675 = vunpack.c.h.b16 %v5628
      %v5676 = vunpack.c.l.b16 %v5629
      %v5677 = vunpack.c.h.b16 %v5629
      %v5678 = vpack.c.b16 %v5646, %v5646
      %v5679 = vpack.c.b16 %v5647, %v5647
      %v5680 = vpack.c.b16 %v5648, %v5648
      %v5681 = vpack.c.b16 %v5649, %v5649
      %v5682 = vpack.c.b16 %v5650, %v5650
      %v5683 = vpack.c.b16 %v5651, %v5651
      %v5684 = vpack.c.b16 %v5652, %v5652
      %v5685 = vpack.c.b16 %v5653, %v5653
      %v5686 = vpack.c.b16 %v5654, %v5654
      %v5687 = vpack.c.b16 %v5655, %v5655
      %v5688 = vpack.c.b16 %v5656, %v5656
      %v5689 = vpack.c.b16 %v5657, %v5657
      %v5690 = vpack.c.b16 %v5658, %v5658
      %v5691 = vpack.c.b16 %v5659, %v5659
      %v5692 = vpack.c.b16 %v5660, %v5660
      %v5693 = vpack.c.b16 %v5661, %v5661
      %v5694 = vpack.c.b16 %v5662, %v5662
      %v5695 = vpack.c.b16 %v5663, %v5663
      %v5696 = vpack.c.b16 %v5664, %v5664
      %v5697 = vpack.c.b16 %v5665, %v5665
      %v5698 = vpack.c.b16 %v5666, %v5666
      %v5699 = vpack.c.b16 %v5667, %v5667
      %v5700 = vpack.c.b16 %v5668, %v5668
      %v5701 = vpack.c.b16 %v5669, %v5669
      %v5702 = vpack.c.b16 %v5670, %v5670
      %v5703 = vpack.c.b16 %v5671, %v5671
      %v5704 = vpack.c.b16 %v5672, %v5672
      %v5705 = vpack.c.b16 %v5673, %v5673
      %v5706 = vpack.c.b16 %v5674, %v5674
      %v5707 = vpack.c.b16 %v5675, %v5675
      %v5708 = vpack.c.b16 %v5676, %v5676
      %v5709 = vpack.c.b16 %v5677, %v5677
      %vm5742 = vcmask 60416
      %5743 = vst.msk [vmem:[%s278] sm:$0xf] %vm5742, %v5678
      %5744 = vst.msk [vmem:[%s278 + $0x4] sm:$0xf] %vm5742, %v5679
      %5745 = vst.msk [vmem:[%s278 + $0x8] sm:$0xf] %vm5742, %v5680
      %5746 = vst.msk [vmem:[%s278 + $0xc] sm:$0xf] %vm5742, %v5681
      %5747 = vst.msk [vmem:[%s278 + $0x10] sm:$0xf] %vm5742, %v5682
      %5748 = vst.msk [vmem:[%s278 + $0x14] sm:$0xf] %vm5742, %v5683
      %5749 = vst.msk [vmem:[%s278 + $0x18] sm:$0xf] %vm5742, %v5684
      %5750 = vst.msk [vmem:[%s278 + $0x1c] sm:$0xf] %vm5742, %v5685
      %5751 = vst.msk [vmem:[%s278 + $0x20] sm:$0xf] %vm5742, %v5686
      %5752 = vst.msk [vmem:[%s278 + $0x24] sm:$0xf] %vm5742, %v5687
      %5753 = vst.msk [vmem:[%s278 + $0x28] sm:$0xf] %vm5742, %v5688
      %5754 = vst.msk [vmem:[%s278 + $0x2c] sm:$0xf] %vm5742, %v5689
      %5755 = vst.msk [vmem:[%s278 + $0x30] sm:$0xf] %vm5742, %v5690
      %5756 = vst.msk [vmem:[%s278 + $0x34] sm:$0xf] %vm5742, %v5691
      %5757 = vst.msk [vmem:[%s278 + $0x38] sm:$0xf] %vm5742, %v5692
      %5758 = vst.msk [vmem:[%s278 + $0x3c] sm:$0xf] %vm5742, %v5693
      %5759 = vst.msk [vmem:[%s278 + $0x40] sm:$0xf] %vm5742, %v5694
      %5760 = vst.msk [vmem:[%s278 + $0x44] sm:$0xf] %vm5742, %v5695
      %5761 = vst.msk [vmem:[%s278 + $0x48] sm:$0xf] %vm5742, %v5696
      %5762 = vst.msk [vmem:[%s278 + $0x4c] sm:$0xf] %vm5742, %v5697
      %5763 = vst.msk [vmem:[%s278 + $0x50] sm:$0xf] %vm5742, %v5698
      %5764 = vst.msk [vmem:[%s278 + $0x54] sm:$0xf] %vm5742, %v5699
      %5765 = vst.msk [vmem:[%s278 + $0x58] sm:$0xf] %vm5742, %v5700
      %5766 = vst.msk [vmem:[%s278 + $0x5c] sm:$0xf] %vm5742, %v5701
      %5767 = vst.msk [vmem:[%s278 + $0x60] sm:$0xf] %vm5742, %v5702
      %5768 = vst.msk [vmem:[%s278 + $0x64] sm:$0xf] %vm5742, %v5703
      %5769 = vst.msk [vmem:[%s278 + $0x68] sm:$0xf] %vm5742, %v5704
      %5770 = vst.msk [vmem:[%s278 + $0x6c] sm:$0xf] %vm5742, %v5705
      %5771 = vst.msk [vmem:[%s278 + $0x70] sm:$0xf] %vm5742, %v5706
      %5772 = vst.msk [vmem:[%s278 + $0x74] sm:$0xf] %vm5742, %v5707
      %5773 = vst.msk [vmem:[%s278 + $0x78] sm:$0xf] %vm5742, %v5708
      %5774 = vst.msk [vmem:[%s278 + $0x7c] sm:$0xf] %vm5742, %v5709
      %v5775 = vld [vmem:[#allocation3] sm:$0x1]
      %v5776 = vmul.f32 %v5775, 0.00390625
      %v5777 = vld [vmem:[%s4] sm:$0xff]
      %v5779 = vsel %vm5542, %v5776, 0
      %5781 = vmatprep.subr.mxu0 0.0
      %5782 = vmatpush1.msra.mxu0 0.0
      %5783 = vmatprep.subr.mxu0 0.0
      %5784 = vmatpush1.msra.mxu0 0.0
      %5785 = vmatprep.subr.mxu0 0.0
      %5786 = vmatpush1.msra.mxu0 0.0
      %5787 = vmatprep.subr.mxu0 0.0
      %5788 = vmatpush1.msra.mxu0 0.0
      %5789 = vmatprep.subr.mxu0 0.0
      %5790 = vmatpush1.msra.mxu0 0.0
      %5791 = vmatprep.subr.mxu0 0.0
      %5792 = vmatpush1.msra.mxu0 0.0
      %5793 = vmatprep.subr.mxu0 0.0
      %5794 = vmatpush1.msra.mxu0 0.0
      %5795 = vmatprep.subr.mxu0 0.0
      %5796 = vmatpush1.msra.mxu0 0.0
      %5797 = vmatprep.subr.mxu0 0.0
      %5798 = vmatpush1.msra.mxu0 0.0
      %5799 = vmatprep.subr.mxu0 0.0
      %5800 = vmatpush1.msra.mxu0 0.0
      %5801 = vmatprep.subr.mxu0 0.0
      %5802 = vmatpush1.msra.mxu0 0.0
      %5803 = vmatprep.subr.mxu0 0.0
      %5804 = vmatpush1.msra.mxu0 0.0
      %5805 = vmatprep.subr.mxu0 0.0
      %5806 = vmatpush1.msra.mxu0 0.0
      %5807 = vmatprep.subr.mxu0 0.0
      %5808 = vmatpush1.msra.mxu0 0.0
      %5809 = vmatprep.subr.mxu0 0.0
      %5810 = vmatpush1.msra.mxu0 0.0
      %5811 = vmatprep.subr.mxu0 0.0
      %5812 = vmatpush1.msra.mxu0 %v5777
      %5813 = vmatprep.subr.mxu0 0.0
      %5814 = vmatpush2.msra.mxu0 0.0
      %5815 = vmatprep.subr.mxu0 0.0
      %5816 = vmatpush2.msra.mxu0 0.0
      %5817 = vmatprep.subr.mxu0 0.0
      %5818 = vmatpush2.msra.mxu0 0.0
      %5819 = vmatprep.subr.mxu0 0.0
      %5820 = vmatpush2.msra.mxu0 0.0
      %5821 = vmatprep.subr.mxu0 0.0
      %5822 = vmatpush2.msra.mxu0 0.0
      %5823 = vmatprep.subr.mxu0 0.0
      %5824 = vmatpush2.msra.mxu0 0.0
      %5825 = vmatprep.subr.mxu0 0.0
      %5826 = vmatpush2.msra.mxu0 0.0
      %5827 = vmatprep.subr.mxu0 0.0
      %5828 = vmatpush2.msra.mxu0 0.0
      %5829 = vmatprep.subr.mxu0 0.0
      %5830 = vmatpush2.msra.mxu0 0.0
      %5831 = vmatprep.subr.mxu0 0.0
      %5832 = vmatpush2.msra.mxu0 0.0
      %5833 = vmatprep.subr.mxu0 0.0
      %5834 = vmatpush2.msra.mxu0 0.0
      %5835 = vmatprep.subr.mxu0 0.0
      %5836 = vmatpush2.msra.mxu0 0.0
      %5837 = vmatprep.subr.mxu0 0.0
      %5838 = vmatpush2.msra.mxu0 0.0
      %5839 = vmatprep.subr.mxu0 0.0
      %5840 = vmatpush2.msra.mxu0 0.0
      %5841 = vmatprep.subr.mxu0 0.0
      %5842 = vmatpush2.msra.mxu0 0.0
      %5843 = vmatprep.subr.mxu0 0.0
      %5844 = vmatpush2.msra.mxu0 0.0
      %5845 = vmatprep.mubr.f32.mxu0 0.0
      %5846 = vmatmul.mubr.f32.gmra.mxu0 %v5779
      %v5847 = vpop.f32.mrf.mxu0
      %v5848 = vadd.f32 0.0, %v5847
      %v5849 = vpop.f32.mrf.mxu0
      %5850 = vdwg.mxu0
      %v5851 = vld [vmem:[%s5] sm:$0x1]
      %v5852 = vmul.f32 %v5848, %v5851
      %v5853 = vld [vmem:[%s6] sm:$0x1]
      %v5854 = vadd.f32 %v5852, %v5853
      %v5855 = vxor.u32 %v5854, 2147483648
      %v5856 = vmul.f32 %v5855, 1.442695
      %v5857 = vpow.pop %v5856
      %v5858 = vadd.f32 %v5857, 1.0
      %v5859 = vrcp.pop %v5858
      %v5860 = vmul.f32 1.0, %v5859
      %v5861 = vld [vmem:[%s278] sm:$0xf]
      %v5862 = vld [vmem:[%s278 + $0x4] sm:$0xf]
      %v5863 = vld [vmem:[%s278 + $0x8] sm:$0xf]
      %v5864 = vld [vmem:[%s278 + $0xc] sm:$0xf]
      %v5865 = vld [vmem:[%s278 + $0x10] sm:$0xf]
      %v5866 = vld [vmem:[%s278 + $0x14] sm:$0xf]
      %v5867 = vld [vmem:[%s278 + $0x18] sm:$0xf]
      %v5868 = vld [vmem:[%s278 + $0x1c] sm:$0xf]
      %v5869 = vld [vmem:[%s278 + $0x20] sm:$0xf]
      %v5870 = vld [vmem:[%s278 + $0x24] sm:$0xf]
      %v5871 = vld [vmem:[%s278 + $0x28] sm:$0xf]
      %v5872 = vld [vmem:[%s278 + $0x2c] sm:$0xf]
      %v5873 = vld [vmem:[%s278 + $0x30] sm:$0xf]
      %v5874 = vld [vmem:[%s278 + $0x34] sm:$0xf]
      %v5875 = vld [vmem:[%s278 + $0x38] sm:$0xf]
      %v5876 = vld [vmem:[%s278 + $0x3c] sm:$0xf]
      %v5877 = vld [vmem:[%s278 + $0x40] sm:$0xf]
      %v5878 = vld [vmem:[%s278 + $0x44] sm:$0xf]
      %v5879 = vld [vmem:[%s278 + $0x48] sm:$0xf]
      %v5880 = vld [vmem:[%s278 + $0x4c] sm:$0xf]
      %v5881 = vld [vmem:[%s278 + $0x50] sm:$0xf]
      %v5882 = vld [vmem:[%s278 + $0x54] sm:$0xf]
      %v5883 = vld [vmem:[%s278 + $0x58] sm:$0xf]
      %v5884 = vld [vmem:[%s278 + $0x5c] sm:$0xf]
      %v5885 = vld [vmem:[%s278 + $0x60] sm:$0xf]
      %v5886 = vld [vmem:[%s278 + $0x64] sm:$0xf]
      %v5887 = vld [vmem:[%s278 + $0x68] sm:$0xf]
      %v5888 = vld [vmem:[%s278 + $0x6c] sm:$0xf]
      %v5889 = vld [vmem:[%s278 + $0x70] sm:$0xf]
      %v5890 = vld [vmem:[%s278 + $0x74] sm:$0xf]
      %v5891 = vld [vmem:[%s278 + $0x78] sm:$0xf]
      %v5892 = vld [vmem:[%s278 + $0x7c] sm:$0xf]
      %v5893 = vunpack.c.l.bf16 %v5861
      %v5894 = vunpack.c.l.bf16 %v5862
      %v5895 = vunpack.c.l.bf16 %v5863
      %v5896 = vunpack.c.l.bf16 %v5864
      %v5897 = vunpack.c.l.bf16 %v5865
      %v5898 = vunpack.c.l.bf16 %v5866
      %v5899 = vunpack.c.l.bf16 %v5867
      %v5900 = vunpack.c.l.bf16 %v5868
      %v5901 = vunpack.c.l.bf16 %v5869
      %v5902 = vunpack.c.l.bf16 %v5870
      %v5903 = vunpack.c.l.bf16 %v5871
      %v5904 = vunpack.c.l.bf16 %v5872
      %v5905 = vunpack.c.l.bf16 %v5873
      %v5906 = vunpack.c.l.bf16 %v5874
      %v5907 = vunpack.c.l.bf16 %v5875
      %v5908 = vunpack.c.l.bf16 %v5876
      %v5909 = vunpack.c.l.bf16 %v5877
      %v5910 = vunpack.c.l.bf16 %v5878
      %v5911 = vunpack.c.l.bf16 %v5879
      %v5912 = vunpack.c.l.bf16 %v5880
      %v5913 = vunpack.c.l.bf16 %v5881
      %v5914 = vunpack.c.l.bf16 %v5882
      %v5915 = vunpack.c.l.bf16 %v5883
      %v5916 = vunpack.c.l.bf16 %v5884
      %v5917 = vunpack.c.l.bf16 %v5885
      %v5918 = vunpack.c.l.bf16 %v5886
      %v5919 = vunpack.c.l.bf16 %v5887
      %v5920 = vunpack.c.l.bf16 %v5888
      %v5921 = vunpack.c.l.bf16 %v5889
      %v5922 = vunpack.c.l.bf16 %v5890
      %v5923 = vunpack.c.l.bf16 %v5891
      %v5924 = vunpack.c.l.bf16 %v5892
      %v5925 = vlaneseq
      %v5926 = vshrl.u32 %v5925, 7
      %v5927 = vsub.s32 0, %v5926
      %v5928 = vrot.slane %v5860, %v5927
      %v5929 = vmul.f32 %v5893, %v5928
      %v5930 = vmul.f32 %v5894, %v5928
      %v5931 = vmul.f32 %v5895, %v5928
      %v5932 = vmul.f32 %v5896, %v5928
      %v5933 = vmul.f32 %v5897, %v5928
      %v5934 = vmul.f32 %v5898, %v5928
      %v5935 = vmul.f32 %v5899, %v5928
      %v5936 = vmul.f32 %v5900, %v5928
      %v5937 = vmul.f32 %v5901, %v5928
      %v5938 = vmul.f32 %v5902, %v5928
      %v5939 = vmul.f32 %v5903, %v5928
      %v5940 = vmul.f32 %v5904, %v5928
      %v5941 = vmul.f32 %v5905, %v5928
      %v5942 = vmul.f32 %v5906, %v5928
      %v5943 = vmul.f32 %v5907, %v5928
      %v5944 = vmul.f32 %v5908, %v5928
      %v5945 = vmul.f32 %v5909, %v5928
      %v5946 = vmul.f32 %v5910, %v5928
      %v5947 = vmul.f32 %v5911, %v5928
      %v5948 = vmul.f32 %v5912, %v5928
      %v5949 = vmul.f32 %v5913, %v5928
      %v5950 = vmul.f32 %v5914, %v5928
      %v5951 = vmul.f32 %v5915, %v5928
      %v5952 = vmul.f32 %v5916, %v5928
      %v5953 = vmul.f32 %v5917, %v5928
      %v5954 = vmul.f32 %v5918, %v5928
      %v5955 = vmul.f32 %v5919, %v5928
      %v5956 = vmul.f32 %v5920, %v5928
      %v5957 = vmul.f32 %v5921, %v5928
      %v5958 = vmul.f32 %v5922, %v5928
      %v5959 = vmul.f32 %v5923, %v5928
      %v5960 = vmul.f32 %v5924, %v5928
      %v5961 = vpack.c.bf16 %v5930, %v5929
      %v5962 = vpack.c.bf16 %v5932, %v5931
      %v5963 = vpack.c.bf16 %v5934, %v5933
      %v5964 = vpack.c.bf16 %v5936, %v5935
      %v5965 = vpack.c.bf16 %v5938, %v5937
      %v5966 = vpack.c.bf16 %v5940, %v5939
      %v5967 = vpack.c.bf16 %v5942, %v5941
      %v5968 = vpack.c.bf16 %v5944, %v5943
      %v5969 = vpack.c.bf16 %v5946, %v5945
      %v5970 = vpack.c.bf16 %v5948, %v5947
      %v5971 = vpack.c.bf16 %v5950, %v5949
      %v5972 = vpack.c.bf16 %v5952, %v5951
      %v5973 = vpack.c.bf16 %v5954, %v5953
      %v5974 = vpack.c.bf16 %v5956, %v5955
      %v5975 = vpack.c.bf16 %v5958, %v5957
      %v5976 = vpack.c.bf16 %v5960, %v5959
      %v5993 = vunpack.c.l.b16 %v5961
      %v5994 = vunpack.c.h.b16 %v5961
      %v5995 = vunpack.c.l.b16 %v5962
      %v5996 = vunpack.c.h.b16 %v5962
      %v5997 = vunpack.c.l.b16 %v5963
      %v5998 = vunpack.c.h.b16 %v5963
      %v5999 = vunpack.c.l.b16 %v5964
      %v6000 = vunpack.c.h.b16 %v5964
      %v6001 = vunpack.c.l.b16 %v5965
      %v6002 = vunpack.c.h.b16 %v5965
      %v6003 = vunpack.c.l.b16 %v5966
      %v6004 = vunpack.c.h.b16 %v5966
      %v6005 = vunpack.c.l.b16 %v5967
      %v6006 = vunpack.c.h.b16 %v5967
      %v6007 = vunpack.c.l.b16 %v5968
      %v6008 = vunpack.c.h.b16 %v5968
      %v6009 = vunpack.c.l.b16 %v5969
      %v6010 = vunpack.c.h.b16 %v5969
      %v6011 = vunpack.c.l.b16 %v5970
      %v6012 = vunpack.c.h.b16 %v5970
      %v6013 = vunpack.c.l.b16 %v5971
      %v6014 = vunpack.c.h.b16 %v5971
      %v6015 = vunpack.c.l.b16 %v5972
      %v6016 = vunpack.c.h.b16 %v5972
      %v6017 = vunpack.c.l.b16 %v5973
      %v6018 = vunpack.c.h.b16 %v5973
      %v6019 = vunpack.c.l.b16 %v5974
      %v6020 = vunpack.c.h.b16 %v5974
      %v6021 = vunpack.c.l.b16 %v5975
      %v6022 = vunpack.c.h.b16 %v5975
      %v6023 = vunpack.c.l.b16 %v5976
      %v6024 = vunpack.c.h.b16 %v5976
      %v6025 = vpack.c.b16 %v5993, %v5993
      %v6026 = vpack.c.b16 %v5994, %v5994
      %v6027 = vpack.c.b16 %v5995, %v5995
      %v6028 = vpack.c.b16 %v5996, %v5996
      %v6029 = vpack.c.b16 %v5997, %v5997
      %v6030 = vpack.c.b16 %v5998, %v5998
      %v6031 = vpack.c.b16 %v5999, %v5999
      %v6032 = vpack.c.b16 %v6000, %v6000
      %v6033 = vpack.c.b16 %v6001, %v6001
      %v6034 = vpack.c.b16 %v6002, %v6002
      %v6035 = vpack.c.b16 %v6003, %v6003
      %v6036 = vpack.c.b16 %v6004, %v6004
      %v6037 = vpack.c.b16 %v6005, %v6005
      %v6038 = vpack.c.b16 %v6006, %v6006
      %v6039 = vpack.c.b16 %v6007, %v6007
      %v6040 = vpack.c.b16 %v6008, %v6008
      %v6041 = vpack.c.b16 %v6009, %v6009
      %v6042 = vpack.c.b16 %v6010, %v6010
      %v6043 = vpack.c.b16 %v6011, %v6011
      %v6044 = vpack.c.b16 %v6012, %v6012
      %v6045 = vpack.c.b16 %v6013, %v6013
      %v6046 = vpack.c.b16 %v6014, %v6014
      %v6047 = vpack.c.b16 %v6015, %v6015
      %v6048 = vpack.c.b16 %v6016, %v6016
      %v6049 = vpack.c.b16 %v6017, %v6017
      %v6050 = vpack.c.b16 %v6018, %v6018
      %v6051 = vpack.c.b16 %v6019, %v6019
      %v6052 = vpack.c.b16 %v6020, %v6020
      %v6053 = vpack.c.b16 %v6021, %v6021
      %v6054 = vpack.c.b16 %v6022, %v6022
      %v6055 = vpack.c.b16 %v6023, %v6023
      %v6056 = vpack.c.b16 %v6024, %v6024
      %6089 = vst.msk [vmem:[%s278] sm:$0xf] %vm5742, %v6025
      %6090 = vst.msk [vmem:[%s278 + $0x4] sm:$0xf] %vm5742, %v6026
      %6091 = vst.msk [vmem:[%s278 + $0x8] sm:$0xf] %vm5742, %v6027
      %6092 = vst.msk [vmem:[%s278 + $0xc] sm:$0xf] %vm5742, %v6028
      %6093 = vst.msk [vmem:[%s278 + $0x10] sm:$0xf] %vm5742, %v6029
      %6094 = vst.msk [vmem:[%s278 + $0x14] sm:$0xf] %vm5742, %v6030
      %6095 = vst.msk [vmem:[%s278 + $0x18] sm:$0xf] %vm5742, %v6031
      %6096 = vst.msk [vmem:[%s278 + $0x1c] sm:$0xf] %vm5742, %v6032
      %6097 = vst.msk [vmem:[%s278 + $0x20] sm:$0xf] %vm5742, %v6033
      %6098 = vst.msk [vmem:[%s278 + $0x24] sm:$0xf] %vm5742, %v6034
      %6099 = vst.msk [vmem:[%s278 + $0x28] sm:$0xf] %vm5742, %v6035
      %6100 = vst.msk [vmem:[%s278 + $0x2c] sm:$0xf] %vm5742, %v6036
      %6101 = vst.msk [vmem:[%s278 + $0x30] sm:$0xf] %vm5742, %v6037
      %6102 = vst.msk [vmem:[%s278 + $0x34] sm:$0xf] %vm5742, %v6038
      %6103 = vst.msk [vmem:[%s278 + $0x38] sm:$0xf] %vm5742, %v6039
      %6104 = vst.msk [vmem:[%s278 + $0x3c] sm:$0xf] %vm5742, %v6040
      %6105 = vst.msk [vmem:[%s278 + $0x40] sm:$0xf] %vm5742, %v6041
      %6106 = vst.msk [vmem:[%s278 + $0x44] sm:$0xf] %vm5742, %v6042
      %6107 = vst.msk [vmem:[%s278 + $0x48] sm:$0xf] %vm5742, %v6043
      %6108 = vst.msk [vmem:[%s278 + $0x4c] sm:$0xf] %vm5742, %v6044
      %6109 = vst.msk [vmem:[%s278 + $0x50] sm:$0xf] %vm5742, %v6045
      %6110 = vst.msk [vmem:[%s278 + $0x54] sm:$0xf] %vm5742, %v6046
      %6111 = vst.msk [vmem:[%s278 + $0x58] sm:$0xf] %vm5742, %v6047
      %6112 = vst.msk [vmem:[%s278 + $0x5c] sm:$0xf] %vm5742, %v6048
      %6113 = vst.msk [vmem:[%s278 + $0x60] sm:$0xf] %vm5742, %v6049
      %6114 = vst.msk [vmem:[%s278 + $0x64] sm:$0xf] %vm5742, %v6050
      %6115 = vst.msk [vmem:[%s278 + $0x68] sm:$0xf] %vm5742, %v6051
      %6116 = vst.msk [vmem:[%s278 + $0x6c] sm:$0xf] %vm5742, %v6052
      %6117 = vst.msk [vmem:[%s278 + $0x70] sm:$0xf] %vm5742, %v6053
      %6118 = vst.msk [vmem:[%s278 + $0x74] sm:$0xf] %vm5742, %v6054
      %6119 = vst.msk [vmem:[%s278 + $0x78] sm:$0xf] %vm5742, %v6055
      %6120 = vst.msk [vmem:[%s278 + $0x7c] sm:$0xf] %vm5742, %v6056
      %p6121 = scmp.lt.s32.totalorder %s18, 1
      %s6122 = scalar_select %p6121, %s18, 1
      %s6123 = smul.addr %s6122, 32
      %s6124 = smul.addr %s6123, 4
      %s6125 = scalar_lea.vmem %s7, %s6124
      // Predicated region
      $region49: #{tpu_custom_call.1} parent=47 // pred_check
        %p6126 = pneg %p188
      $region50: #{tpu_custom_call.1} parent=47 // pred_check_branch
        %6128 = sbr.rel (%p6126) target = $region52
      $region51: #{tpu_custom_call.1} parent=47 // pred_region
        _
      $region52: #{tpu_custom_call.1} parent=47 // pred_fallthru
        _
    $region48: #{tpu_custom_call.1} parent=5 // pred_fallthru
      _
    %p6129 = scmp.le.s32.totalorder 2, %s13
    // Predicated region
    $region53: #{tpu_custom_call.1} parent=5 // pred_check
      %p6130 = pneg %p6129
    $region54: #{tpu_custom_call.1} parent=5 // pred_check_branch
      %6132 = sbr.rel (%p6130) target = $region56
    $region55: #{tpu_custom_call.1} parent=5 // pred_region
      %s6133 = ssub.s32 %s13, 2
      // Predicated region
      $region57: #{tpu_custom_call.1} parent=55 // pred_check
        %p6134 = pneg %p194
      $region58: #{tpu_custom_call.1} parent=55 // pred_check_branch
        %6136 = sbr.rel (%p6134) target = $region60
      $region59: #{tpu_custom_call.1} parent=55 // pred_region
        %p6137 = scmp.lt.s32.totalorder %s19, 1
        %s6138 = scalar_select %p6137, %s19, 1
        %s6139 = smul.addr %s6138, 32
        %s6140 = smul.addr %s6139, 4
        %s6141 = scalar_lea.vmem %s7, %s6140
      $region60: #{tpu_custom_call.1} parent=55 // pred_fallthru
        _
    $region56: #{tpu_custom_call.1} parent=5 // pred_fallthru
      _
  $region6: #{tpu_custom_call.1} parent=0 // loop_footer
    %s17 = sadd.s32 1, %s13
  $region7: #{tpu_custom_call.1} parent=0 // loop_footer_branch
    %12 = sbr.rel target = $region3
  $region8: #{tpu_custom_call.1} parent=0 // loop_exit
    _

</llo_original>
